<compile_context>
chip_gen: v7x
topology: tpu7x:2x2x1
jax: 0.10.0
libtpu: 0.0.40
codegen_flags: <defaults>
</compile_context>

<pallas_src>
import math
import functools

import jax
import jax.numpy as jnp
from jax import lax
from jax.experimental import pallas as pl
from jax.experimental.pallas import tpu as pltpu

EPS = 1e-12          # F.normalize default eps
EPS2 = EPS * EPS     # max(norm, eps) == sqrt(max(norm^2, eps^2))


def _conv_surface_kernel(idx_ref, rhs_full_ref, rhs_self_ref, out_ref, *,
                         k_size, kernel_num, tile_a):
    # idx_ref      : (1, N, TILE_A)        int32  neighbor ids (atoms on lanes)
    # rhs_full_ref : (1, D+3, A)           f32    rows 0..D-1 = atoms @ sup_norm, rows D..D+2 = xyz
    # rhs_self_ref : (1, D+3, TILE_A)      f32    same rows, restricted to this atom tile (centers)
    # out_ref      : (1, kernel_num, TILE_A) f32  lane-dense output block
    D = k_size * kernel_num
    N = idx_ref.shape[1]
    A = rhs_full_ref.shape[2]

    idx = idx_ref[0]                 # (N, TILE_A) int32
    rhs = rhs_full_ref[0]            # (D+3, A)
    self_cols = rhs_self_ref[0]      # (D+3, TILE_A)

    # Narrow iota over the atom axis; broadcasting builds each one-hot block.
    p_col = lax.broadcasted_iota(jnp.int32, (A, 1), 0)          # (A, 1)

    acc = None
    # Static unroll over neighbor slots: per-slot gather matmul + running elementwise max.
    for n in range(N):
        onehot = (p_col == idx[n:n + 1, :]).astype(jnp.float32)  # (A, TILE_A)
        # One fused gather: projections (rows :D) and coordinates (rows D:) at once.
        g = jnp.dot(rhs, onehot, preferred_element_type=jnp.float32)  # (D+3, TILE_A)
        d = g - self_cols                                              # (p - a), all rows
        dx = d[D:D + 1, :]
        dy = d[D + 1:D + 2, :]
        dz = d[D + 2:D + 3, :]
        inv = lax.rsqrt(jnp.maximum(dx * dx + dy * dy + dz * dz, EPS2))   # (1, TILE_A)
        # relu((p-a)·s) / max(||p-a||, eps)  — relu commutes with the positive scale.
        th = jnp.maximum(d[:D, :], 0.0) * inv                             # (D, TILE_A)
        acc = th if acc is None else jnp.maximum(acc, th)                 # running max over neighbors

    # Sum over k_size (rows are ordered d = k * kernel_num + m, matching the torch .view()).
    if kernel_num == 1:
        feature = jnp.sum(acc, axis=0, keepdims=True)                     # (1, TILE_A)
    else:
        feature = jnp.sum(acc.reshape(k_size, kernel_num, tile_a), axis=0)  # (kernel_num, TILE_A)

    out_ref[0] = feature


def conv_surface(neighbor_index, atoms, directions, *, k_size, kernel_num,
                 tile_a=128, vmem_limit_bytes=32 * 1024 * 1024):
    """Forward pass of ConvSurface. Returns (bs, atom_num, kernel_num)."""
    bs, A, N = neighbor_index.shape
    D = directions.shape[1]
    assert D == k_size * kernel_num, "directions columns must equal k_size * kernel_num"

    # TILE_A: 128 keeps lane-dense blocks and bounds per-step VMEM; re-derive smaller for
    # v7x only if the per-step footprint (one-hot block A*TILE_A*4 + double-buffered blocks)
    # approaches the 32 MiB scoped limit.
    tile_a = min(tile_a, A)
    assert A % tile_a == 0, "atom_num must be divisible by the atom tile size"
    num_tiles = A // tile_a

    # Hoisted, grid-invariant parameter normalization (F.normalize(directions, dim=0)).
    sup_nrm = jnp.sqrt(jnp.sum(directions * directions, axis=0, keepdims=True))
    sup_norm = directions / jnp.maximum(sup_nrm, EPS)                     # (3, D)

    # Fused, atoms-on-lanes RHS for the gather matmul: [proj | xyz]^T -> (bs, D+3, A).
    proj_t = jnp.einsum("cd,bac->bda", sup_norm, atoms)                   # (bs, D, A)
    atoms_t = jnp.transpose(atoms, (0, 2, 1))                             # (bs, 3, A)
    rhs_t = jnp.concatenate([proj_t, atoms_t], axis=1).astype(jnp.float32)  # (bs, D+3, A)

    # Neighbor index transposed so atom tiles are lane-dense DMA blocks.
    idx_t = jnp.transpose(neighbor_index, (0, 2, 1)).astype(jnp.int32)    # (bs, N, A)

    kernel = functools.partial(_conv_surface_kernel,
                               k_size=k_size, kernel_num=kernel_num, tile_a=tile_a)

    out_t = pl.pallas_call(
        kernel,
        out_shape=jax.ShapeDtypeStruct((bs, kernel_num, A), jnp.float32),
        grid_spec=pltpu.PrefetchScalarGridSpec(
            num_scalar_prefetch=0,
            grid=(bs, num_tiles),
            in_specs=[
                # neighbor ids for this atom tile
                pl.BlockSpec((1, N, tile_a), lambda b, j: (b, 0, j)),
                # full-A RHS per batch (same block across atom tiles -> not re-DMA'd)
                pl.BlockSpec((1, D + 3, A), lambda b, j: (b, 0, 0)),
                # center-atom columns of the RHS for this tile
                pl.BlockSpec((1, D + 3, tile_a), lambda b, j: (b, 0, j)),
            ],
            out_specs=pl.BlockSpec((1, kernel_num, tile_a), lambda b, j: (b, 0, j)),
        ),
        compiler_params=pltpu.CompilerParams(
            dimension_semantics=("parallel", "parallel"),
            vmem_limit_bytes=vmem_limit_bytes,
        ),
    )(idx_t, rhs_t, rhs_t)

    # Layout plumbing back to the module's output convention.
    return jnp.transpose(out_t, (0, 2, 1))                                # (bs, A, kernel_num)


def conv_surface_ref(neighbor_index, atoms, directions, *, k_size, kernel_num):
    """Pure-JAX reference mirroring the PyTorch forward."""
    bs, A, N = neighbor_index.shape
    pos_nb = jax.vmap(lambda a, i: a[i])(atoms, neighbor_index)           # (bs, A, N, 3)
    direction = pos_nb - atoms[:, :, None, :]
    nrm = jnp.linalg.norm(direction, axis=-1, keepdims=True)
    dn = direction / jnp.maximum(nrm, EPS)
    supn = directions / jnp.maximum(
        jnp.linalg.norm(directions, axis=0, keepdims=True), EPS)
    theta = jnp.maximum(jnp.einsum("bijc,cd->bijd", dn, supn), 0.0)
    theta = theta.reshape(bs, A, N, k_size, kernel_num)
    theta = theta.max(axis=2)
    return theta.sum(axis=2)


if __name__ == "__main__":
    key = jax.random.PRNGKey(0)
    bs, atom_num, neighbor_num = 2, 256, 16
    # Module constraint: the .view() in forward is only shape-consistent when kernel_num == 1,
    # since self.directions has k_size * 1 columns.
    k_size, kernel_num = 16, 1

    k_idx, k_atoms, k_dirs = jax.random.split(key, 3)
    neighbor_index = jax.random.randint(
        k_idx, (bs, atom_num, neighbor_num), 0, atom_num, dtype=jnp.int32)
    atoms = jax.random.normal(k_atoms, (bs, atom_num, 3), dtype=jnp.float32)

    # deterministic parameter init matching nn.init uniform_(-stdv, stdv)
    stdv = 1.0 / math.sqrt(k_size * kernel_num)
    directions = jax.random.uniform(
        k_dirs, (3, k_size * 1), minval=-stdv, maxval=stdv, dtype=jnp.float32)

    out = conv_surface(neighbor_index, atoms, directions,
                       k_size=k_size, kernel_num=kernel_num)
    out = jax.block_until_ready(out)

    ref = conv_surface_ref(neighbor_index, atoms, directions,
                           k_size=k_size, kernel_num=kernel_num)
    assert out.shape == (bs, atom_num, kernel_num)
    assert jnp.allclose(out, ref, atol=2e-4, rtol=2e-4), \
        float(jnp.max(jnp.abs(out - ref)))
    print("KERNEL_OK")
</pallas_src>

<mosaic_0001>
module attributes {stable_mosaic.version = 11 : i64} {
  func.func @_conv_surface_kernel(%arg0: i32, %arg1: i32, %arg2: memref<1x16x128xi32, #tpu.memory_space<vmem>>, %arg3: memref<1x19x256xf32, #tpu.memory_space<vmem>>, %arg4: memref<1x19x128xf32, #tpu.memory_space<vmem>>, %arg5: memref<1x1x128xf32, #tpu.memory_space<vmem>>) attributes {dimension_semantics = [#tpu.dimension_semantics<parallel>, #tpu.dimension_semantics<parallel>], iteration_bounds = array<i64: 2, 2>, scalar_prefetch = 0 : i64, scratch_operands = 0 : i64, tpu.core_type = #tpu.core_type<tc>, window_params = [{transform_indices = @transform_0, window_bounds = array<i64: 1, 16, 128>}, {transform_indices = @transform_1, window_bounds = array<i64: 1, 19, 256>}, {transform_indices = @transform_2, window_bounds = array<i64: 1, 19, 128>}, {transform_indices = @transform_3, window_bounds = array<i64: 1, 1, 128>}]} {
    %c0 = arith.constant 0 : index
    %c0_0 = arith.constant 0 : index
    %c0_1 = arith.constant 0 : index
    %0 = vector.load %arg2[%c0, %c0_0, %c0_1] : memref<1x16x128xi32, #tpu.memory_space<vmem>>, vector<1x16x128xi32>
    %1 = vector.shape_cast %0 : vector<1x16x128xi32> to vector<16x128xi32>
    %c0_2 = arith.constant 0 : index
    %c0_3 = arith.constant 0 : index
    %c0_4 = arith.constant 0 : index
    %2 = vector.load %arg3[%c0_2, %c0_3, %c0_4] : memref<1x19x256xf32, #tpu.memory_space<vmem>>, vector<1x19x256xf32>
    %3 = vector.shape_cast %2 : vector<1x19x256xf32> to vector<19x256xf32>
    %c0_5 = arith.constant 0 : index
    %c0_6 = arith.constant 0 : index
    %c0_7 = arith.constant 0 : index
    %4 = vector.load %arg4[%c0_5, %c0_6, %c0_7] : memref<1x19x128xf32, #tpu.memory_space<vmem>>, vector<1x19x128xf32>
    %5 = vector.shape_cast %4 : vector<1x19x128xf32> to vector<19x128xf32>
    %6 = tpu.iota {dimensions = array<i32: 0>} : vector<256x1xi32>
    %7 = vector.extract_strided_slice %1 {offsets = [0, 0], sizes = [1, 128], strides = [1, 1]} : vector<16x128xi32> to vector<1x128xi32>
    %8 = vector.broadcast %6 : vector<256x1xi32> to vector<256x128xi32>
    %9 = vector.broadcast %7 : vector<1x128xi32> to vector<256x128xi32>
    %10 = arith.cmpi eq, %8, %9 : vector<256x128xi32>
    %11 = arith.extui %10 : vector<256x128xi1> to vector<256x128xi32>
    %12 = arith.sitofp %11 : vector<256x128xi32> to vector<256x128xf32>
    %cst = arith.constant dense<0.000000e+00> : vector<19x128xf32>
    %13 = tpu.matmul %3, %12, %cst {dimension_numbers = #tpu.dot_dimension_numbers<[1], [0], [0], [1], [0, 0, 1, 1], [], []>} : vector<19x256xf32>, vector<256x128xf32>, vector<19x128xf32> -> vector<19x128xf32>
    %14 = arith.subf %13, %5 : vector<19x128xf32>
    %15 = vector.extract_strided_slice %14 {offsets = [16, 0], sizes = [1, 128], strides = [1, 1]} : vector<19x128xf32> to vector<1x128xf32>
    %16 = vector.extract_strided_slice %14 {offsets = [17, 0], sizes = [1, 128], strides = [1, 1]} : vector<19x128xf32> to vector<1x128xf32>
    %17 = vector.extract_strided_slice %14 {offsets = [18, 0], sizes = [1, 128], strides = [1, 1]} : vector<19x128xf32> to vector<1x128xf32>
    %18 = arith.mulf %15, %15 : vector<1x128xf32>
    %19 = arith.mulf %16, %16 : vector<1x128xf32>
    %20 = arith.addf %18, %19 : vector<1x128xf32>
    %21 = arith.mulf %17, %17 : vector<1x128xf32>
    %22 = arith.addf %20, %21 : vector<1x128xf32>
    %cst_8 = arith.constant 1.000000e-24 : f32
    %23 = vector.broadcast %cst_8 : f32 to vector<1x128xf32>
    %24 = arith.maximumf %22, %23 : vector<1x128xf32>
    %25 = math.rsqrt %24 : vector<1x128xf32>
    %26 = vector.extract_strided_slice %14 {offsets = [0, 0], sizes = [16, 128], strides = [1, 1]} : vector<19x128xf32> to vector<16x128xf32>
    %cst_9 = arith.constant 0.000000e+00 : f32
    %27 = vector.broadcast %cst_9 : f32 to vector<16x128xf32>
    %28 = arith.maximumf %26, %27 : vector<16x128xf32>
    %29 = vector.broadcast %25 : vector<1x128xf32> to vector<16x128xf32>
    %30 = arith.mulf %28, %29 : vector<16x128xf32>
    %31 = vector.extract_strided_slice %1 {offsets = [1, 0], sizes = [1, 128], strides = [1, 1]} : vector<16x128xi32> to vector<1x128xi32>
    %32 = vector.broadcast %6 : vector<256x1xi32> to vector<256x128xi32>
    %33 = vector.broadcast %31 : vector<1x128xi32> to vector<256x128xi32>
    %34 = arith.cmpi eq, %32, %33 : vector<256x128xi32>
    %35 = arith.extui %34 : vector<256x128xi1> to vector<256x128xi32>
    %36 = arith.sitofp %35 : vector<256x128xi32> to vector<256x128xf32>
    %cst_10 = arith.constant dense<0.000000e+00> : vector<19x128xf32>
    %37 = tpu.matmul %3, %36, %cst_10 {dimension_numbers = #tpu.dot_dimension_numbers<[1], [0], [0], [1], [0, 0, 1, 1], [], []>} : vector<19x256xf32>, vector<256x128xf32>, vector<19x128xf32> -> vector<19x128xf32>
    %38 = arith.subf %37, %5 : vector<19x128xf32>
    %39 = vector.extract_strided_slice %38 {offsets = [16, 0], sizes = [1, 128], strides = [1, 1]} : vector<19x128xf32> to vector<1x128xf32>
    %40 = vector.extract_strided_slice %38 {offsets = [17, 0], sizes = [1, 128], strides = [1, 1]} : vector<19x128xf32> to vector<1x128xf32>
    %41 = vector.extract_strided_slice %38 {offsets = [18, 0], sizes = [1, 128], strides = [1, 1]} : vector<19x128xf32> to vector<1x128xf32>
    %42 = arith.mulf %39, %39 : vector<1x128xf32>
    %43 = arith.mulf %40, %40 : vector<1x128xf32>
    %44 = arith.addf %42, %43 : vector<1x128xf32>
    %45 = arith.mulf %41, %41 : vector<1x128xf32>
    %46 = arith.addf %44, %45 : vector<1x128xf32>
    %cst_11 = arith.constant 1.000000e-24 : f32
    %47 = vector.broadcast %cst_11 : f32 to vector<1x128xf32>
    %48 = arith.maximumf %46, %47 : vector<1x128xf32>
    %49 = math.rsqrt %48 : vector<1x128xf32>
    %50 = vector.extract_strided_slice %38 {offsets = [0, 0], sizes = [16, 128], strides = [1, 1]} : vector<19x128xf32> to vector<16x128xf32>
    %cst_12 = arith.constant 0.000000e+00 : f32
    %51 = vector.broadcast %cst_12 : f32 to vector<16x128xf32>
    %52 = arith.maximumf %50, %51 : vector<16x128xf32>
    %53 = vector.broadcast %49 : vector<1x128xf32> to vector<16x128xf32>
    %54 = arith.mulf %52, %53 : vector<16x128xf32>
    %55 = arith.maximumf %30, %54 : vector<16x128xf32>
    %56 = vector.extract_strided_slice %1 {offsets = [2, 0], sizes = [1, 128], strides = [1, 1]} : vector<16x128xi32> to vector<1x128xi32>
    %57 = vector.broadcast %6 : vector<256x1xi32> to vector<256x128xi32>
    %58 = vector.broadcast %56 : vector<1x128xi32> to vector<256x128xi32>
    %59 = arith.cmpi eq, %57, %58 : vector<256x128xi32>
    %60 = arith.extui %59 : vector<256x128xi1> to vector<256x128xi32>
    %61 = arith.sitofp %60 : vector<256x128xi32> to vector<256x128xf32>
    %cst_13 = arith.constant dense<0.000000e+00> : vector<19x128xf32>
    %62 = tpu.matmul %3, %61, %cst_13 {dimension_numbers = #tpu.dot_dimension_numbers<[1], [0], [0], [1], [0, 0, 1, 1], [], []>} : vector<19x256xf32>, vector<256x128xf32>, vector<19x128xf32> -> vector<19x128xf32>
    %63 = arith.subf %62, %5 : vector<19x128xf32>
    %64 = vector.extract_strided_slice %63 {offsets = [16, 0], sizes = [1, 128], strides = [1, 1]} : vector<19x128xf32> to vector<1x128xf32>
    %65 = vector.extract_strided_slice %63 {offsets = [17, 0], sizes = [1, 128], strides = [1, 1]} : vector<19x128xf32> to vector<1x128xf32>
    %66 = vector.extract_strided_slice %63 {offsets = [18, 0], sizes = [1, 128], strides = [1, 1]} : vector<19x128xf32> to vector<1x128xf32>
    %67 = arith.mulf %64, %64 : vector<1x128xf32>
    %68 = arith.mulf %65, %65 : vector<1x128xf32>
    %69 = arith.addf %67, %68 : vector<1x128xf32>
    %70 = arith.mulf %66, %66 : vector<1x128xf32>
    %71 = arith.addf %69, %70 : vector<1x128xf32>
    %cst_14 = arith.constant 1.000000e-24 : f32
    %72 = vector.broadcast %cst_14 : f32 to vector<1x128xf32>
    %73 = arith.maximumf %71, %72 : vector<1x128xf32>
    %74 = math.rsqrt %73 : vector<1x128xf32>
    %75 = vector.extract_strided_slice %63 {offsets = [0, 0], sizes = [16, 128], strides = [1, 1]} : vector<19x128xf32> to vector<16x128xf32>
    %cst_15 = arith.constant 0.000000e+00 : f32
    %76 = vector.broadcast %cst_15 : f32 to vector<16x128xf32>
    %77 = arith.maximumf %75, %76 : vector<16x128xf32>
    %78 = vector.broadcast %74 : vector<1x128xf32> to vector<16x128xf32>
    %79 = arith.mulf %77, %78 : vector<16x128xf32>
    %80 = arith.maximumf %55, %79 : vector<16x128xf32>
    %81 = vector.extract_strided_slice %1 {offsets = [3, 0], sizes = [1, 128], strides = [1, 1]} : vector<16x128xi32> to vector<1x128xi32>
    %82 = vector.broadcast %6 : vector<256x1xi32> to vector<256x128xi32>
    %83 = vector.broadcast %81 : vector<1x128xi32> to vector<256x128xi32>
    %84 = arith.cmpi eq, %82, %83 : vector<256x128xi32>
    %85 = arith.extui %84 : vector<256x128xi1> to vector<256x128xi32>
    %86 = arith.sitofp %85 : vector<256x128xi32> to vector<256x128xf32>
    %cst_16 = arith.constant dense<0.000000e+00> : vector<19x128xf32>
    %87 = tpu.matmul %3, %86, %cst_16 {dimension_numbers = #tpu.dot_dimension_numbers<[1], [0], [0], [1], [0, 0, 1, 1], [], []>} : vector<19x256xf32>, vector<256x128xf32>, vector<19x128xf32> -> vector<19x128xf32>
    %88 = arith.subf %87, %5 : vector<19x128xf32>
    %89 = vector.extract_strided_slice %88 {offsets = [16, 0], sizes = [1, 128], strides = [1, 1]} : vector<19x128xf32> to vector<1x128xf32>
    %90 = vector.extract_strided_slice %88 {offsets = [17, 0], sizes = [1, 128], strides = [1, 1]} : vector<19x128xf32> to vector<1x128xf32>
    %91 = vector.extract_strided_slice %88 {offsets = [18, 0], sizes = [1, 128], strides = [1, 1]} : vector<19x128xf32> to vector<1x128xf32>
    %92 = arith.mulf %89, %89 : vector<1x128xf32>
    %93 = arith.mulf %90, %90 : vector<1x128xf32>
    %94 = arith.addf %92, %93 : vector<1x128xf32>
    %95 = arith.mulf %91, %91 : vector<1x128xf32>
    %96 = arith.addf %94, %95 : vector<1x128xf32>
    %cst_17 = arith.constant 1.000000e-24 : f32
    %97 = vector.broadcast %cst_17 : f32 to vector<1x128xf32>
    %98 = arith.maximumf %96, %97 : vector<1x128xf32>
    %99 = math.rsqrt %98 : vector<1x128xf32>
    %100 = vector.extract_strided_slice %88 {offsets = [0, 0], sizes = [16, 128], strides = [1, 1]} : vector<19x128xf32> to vector<16x128xf32>
    %cst_18 = arith.constant 0.000000e+00 : f32
    %101 = vector.broadcast %cst_18 : f32 to vector<16x128xf32>
    %102 = arith.maximumf %100, %101 : vector<16x128xf32>
    %103 = vector.broadcast %99 : vector<1x128xf32> to vector<16x128xf32>
    %104 = arith.mulf %102, %103 : vector<16x128xf32>
    %105 = arith.maximumf %80, %104 : vector<16x128xf32>
    %106 = vector.extract_strided_slice %1 {offsets = [4, 0], sizes = [1, 128], strides = [1, 1]} : vector<16x128xi32> to vector<1x128xi32>
    %107 = vector.broadcast %6 : vector<256x1xi32> to vector<256x128xi32>
    %108 = vector.broadcast %106 : vector<1x128xi32> to vector<256x128xi32>
    %109 = arith.cmpi eq, %107, %108 : vector<256x128xi32>
    %110 = arith.extui %109 : vector<256x128xi1> to vector<256x128xi32>
    %111 = arith.sitofp %110 : vector<256x128xi32> to vector<256x128xf32>
    %cst_19 = arith.constant dense<0.000000e+00> : vector<19x128xf32>
    %112 = tpu.matmul %3, %111, %cst_19 {dimension_numbers = #tpu.dot_dimension_numbers<[1], [0], [0], [1], [0, 0, 1, 1], [], []>} : vector<19x256xf32>, vector<256x128xf32>, vector<19x128xf32> -> vector<19x128xf32>
    %113 = arith.subf %112, %5 : vector<19x128xf32>
    %114 = vector.extract_strided_slice %113 {offsets = [16, 0], sizes = [1, 128], strides = [1, 1]} : vector<19x128xf32> to vector<1x128xf32>
    %115 = vector.extract_strided_slice %113 {offsets = [17, 0], sizes = [1, 128], strides = [1, 1]} : vector<19x128xf32> to vector<1x128xf32>
    %116 = vector.extract_strided_slice %113 {offsets = [18, 0], sizes = [1, 128], strides = [1, 1]} : vector<19x128xf32> to vector<1x128xf32>
    %117 = arith.mulf %114, %114 : vector<1x128xf32>
    %118 = arith.mulf %115, %115 : vector<1x128xf32>
    %119 = arith.addf %117, %118 : vector<1x128xf32>
    %120 = arith.mulf %116, %116 : vector<1x128xf32>
    %121 = arith.addf %119, %120 : vector<1x128xf32>
    %cst_20 = arith.constant 1.000000e-24 : f32
    %122 = vector.broadcast %cst_20 : f32 to vector<1x128xf32>
    %123 = arith.maximumf %121, %122 : vector<1x128xf32>
    %124 = math.rsqrt %123 : vector<1x128xf32>
    %125 = vector.extract_strided_slice %113 {offsets = [0, 0], sizes = [16, 128], strides = [1, 1]} : vector<19x128xf32> to vector<16x128xf32>
    %cst_21 = arith.constant 0.000000e+00 : f32
    %126 = vector.broadcast %cst_21 : f32 to vector<16x128xf32>
    %127 = arith.maximumf %125, %126 : vector<16x128xf32>
    %128 = vector.broadcast %124 : vector<1x128xf32> to vector<16x128xf32>
    %129 = arith.mulf %127, %128 : vector<16x128xf32>
    %130 = arith.maximumf %105, %129 : vector<16x128xf32>
    %131 = vector.extract_strided_slice %1 {offsets = [5, 0], sizes = [1, 128], strides = [1, 1]} : vector<16x128xi32> to vector<1x128xi32>
    %132 = vector.broadcast %6 : vector<256x1xi32> to vector<256x128xi32>
    %133 = vector.broadcast %131 : vector<1x128xi32> to vector<256x128xi32>
    %134 = arith.cmpi eq, %132, %133 : vector<256x128xi32>
    %135 = arith.extui %134 : vector<256x128xi1> to vector<256x128xi32>
    %136 = arith.sitofp %135 : vector<256x128xi32> to vector<256x128xf32>
    %cst_22 = arith.constant dense<0.000000e+00> : vector<19x128xf32>
    %137 = tpu.matmul %3, %136, %cst_22 {dimension_numbers = #tpu.dot_dimension_numbers<[1], [0], [0], [1], [0, 0, 1, 1], [], []>} : vector<19x256xf32>, vector<256x128xf32>, vector<19x128xf32> -> vector<19x128xf32>
    %138 = arith.subf %137, %5 : vector<19x128xf32>
    %139 = vector.extract_strided_slice %138 {offsets = [16, 0], sizes = [1, 128], strides = [1, 1]} : vector<19x128xf32> to vector<1x128xf32>
    %140 = vector.extract_strided_slice %138 {offsets = [17, 0], sizes = [1, 128], strides = [1, 1]} : vector<19x128xf32> to vector<1x128xf32>
    %141 = vector.extract_strided_slice %138 {offsets = [18, 0], sizes = [1, 128], strides = [1, 1]} : vector<19x128xf32> to vector<1x128xf32>
    %142 = arith.mulf %139, %139 : vector<1x128xf32>
    %143 = arith.mulf %140, %140 : vector<1x128xf32>
    %144 = arith.addf %142, %143 : vector<1x128xf32>
    %145 = arith.mulf %141, %141 : vector<1x128xf32>
    %146 = arith.addf %144, %145 : vector<1x128xf32>
    %cst_23 = arith.constant 1.000000e-24 : f32
    %147 = vector.broadcast %cst_23 : f32 to vector<1x128xf32>
    %148 = arith.maximumf %146, %147 : vector<1x128xf32>
    %149 = math.rsqrt %148 : vector<1x128xf32>
    %150 = vector.extract_strided_slice %138 {offsets = [0, 0], sizes = [16, 128], strides = [1, 1]} : vector<19x128xf32> to vector<16x128xf32>
    %cst_24 = arith.constant 0.000000e+00 : f32
    %151 = vector.broadcast %cst_24 : f32 to vector<16x128xf32>
    %152 = arith.maximumf %150, %151 : vector<16x128xf32>
    %153 = vector.broadcast %149 : vector<1x128xf32> to vector<16x128xf32>
    %154 = arith.mulf %152, %153 : vector<16x128xf32>
    %155 = arith.maximumf %130, %154 : vector<16x128xf32>
    %156 = vector.extract_strided_slice %1 {offsets = [6, 0], sizes = [1, 128], strides = [1, 1]} : vector<16x128xi32> to vector<1x128xi32>
    %157 = vector.broadcast %6 : vector<256x1xi32> to vector<256x128xi32>
    %158 = vector.broadcast %156 : vector<1x128xi32> to vector<256x128xi32>
    %159 = arith.cmpi eq, %157, %158 : vector<256x128xi32>
    %160 = arith.extui %159 : vector<256x128xi1> to vector<256x128xi32>
    %161 = arith.sitofp %160 : vector<256x128xi32> to vector<256x128xf32>
    %cst_25 = arith.constant dense<0.000000e+00> : vector<19x128xf32>
    %162 = tpu.matmul %3, %161, %cst_25 {dimension_numbers = #tpu.dot_dimension_numbers<[1], [0], [0], [1], [0, 0, 1, 1], [], []>} : vector<19x256xf32>, vector<256x128xf32>, vector<19x128xf32> -> vector<19x128xf32>
    %163 = arith.subf %162, %5 : vector<19x128xf32>
    %164 = vector.extract_strided_slice %163 {offsets = [16, 0], sizes = [1, 128], strides = [1, 1]} : vector<19x128xf32> to vector<1x128xf32>
    %165 = vector.extract_strided_slice %163 {offsets = [17, 0], sizes = [1, 128], strides = [1, 1]} : vector<19x128xf32> to vector<1x128xf32>
    %166 = vector.extract_strided_slice %163 {offsets = [18, 0], sizes = [1, 128], strides = [1, 1]} : vector<19x128xf32> to vector<1x128xf32>
    %167 = arith.mulf %164, %164 : vector<1x128xf32>
    %168 = arith.mulf %165, %165 : vector<1x128xf32>
    %169 = arith.addf %167, %168 : vector<1x128xf32>
    %170 = arith.mulf %166, %166 : vector<1x128xf32>
    %171 = arith.addf %169, %170 : vector<1x128xf32>
    %cst_26 = arith.constant 1.000000e-24 : f32
    %172 = vector.broadcast %cst_26 : f32 to vector<1x128xf32>
    %173 = arith.maximumf %171, %172 : vector<1x128xf32>
    %174 = math.rsqrt %173 : vector<1x128xf32>
    %175 = vector.extract_strided_slice %163 {offsets = [0, 0], sizes = [16, 128], strides = [1, 1]} : vector<19x128xf32> to vector<16x128xf32>
    %cst_27 = arith.constant 0.000000e+00 : f32
    %176 = vector.broadcast %cst_27 : f32 to vector<16x128xf32>
    %177 = arith.maximumf %175, %176 : vector<16x128xf32>
    %178 = vector.broadcast %174 : vector<1x128xf32> to vector<16x128xf32>
    %179 = arith.mulf %177, %178 : vector<16x128xf32>
    %180 = arith.maximumf %155, %179 : vector<16x128xf32>
    %181 = vector.extract_strided_slice %1 {offsets = [7, 0], sizes = [1, 128], strides = [1, 1]} : vector<16x128xi32> to vector<1x128xi32>
    %182 = vector.broadcast %6 : vector<256x1xi32> to vector<256x128xi32>
    %183 = vector.broadcast %181 : vector<1x128xi32> to vector<256x128xi32>
    %184 = arith.cmpi eq, %182, %183 : vector<256x128xi32>
    %185 = arith.extui %184 : vector<256x128xi1> to vector<256x128xi32>
    %186 = arith.sitofp %185 : vector<256x128xi32> to vector<256x128xf32>
    %cst_28 = arith.constant dense<0.000000e+00> : vector<19x128xf32>
    %187 = tpu.matmul %3, %186, %cst_28 {dimension_numbers = #tpu.dot_dimension_numbers<[1], [0], [0], [1], [0, 0, 1, 1], [], []>} : vector<19x256xf32>, vector<256x128xf32>, vector<19x128xf32> -> vector<19x128xf32>
    %188 = arith.subf %187, %5 : vector<19x128xf32>
    %189 = vector.extract_strided_slice %188 {offsets = [16, 0], sizes = [1, 128], strides = [1, 1]} : vector<19x128xf32> to vector<1x128xf32>
    %190 = vector.extract_strided_slice %188 {offsets = [17, 0], sizes = [1, 128], strides = [1, 1]} : vector<19x128xf32> to vector<1x128xf32>
    %191 = vector.extract_strided_slice %188 {offsets = [18, 0], sizes = [1, 128], strides = [1, 1]} : vector<19x128xf32> to vector<1x128xf32>
    %192 = arith.mulf %189, %189 : vector<1x128xf32>
    %193 = arith.mulf %190, %190 : vector<1x128xf32>
    %194 = arith.addf %192, %193 : vector<1x128xf32>
    %195 = arith.mulf %191, %191 : vector<1x128xf32>
    %196 = arith.addf %194, %195 : vector<1x128xf32>
    %cst_29 = arith.constant 1.000000e-24 : f32
    %197 = vector.broadcast %cst_29 : f32 to vector<1x128xf32>
    %198 = arith.maximumf %196, %197 : vector<1x128xf32>
    %199 = math.rsqrt %198 : vector<1x128xf32>
    %200 = vector.extract_strided_slice %188 {offsets = [0, 0], sizes = [16, 128], strides = [1, 1]} : vector<19x128xf32> to vector<16x128xf32>
    %cst_30 = arith.constant 0.000000e+00 : f32
    %201 = vector.broadcast %cst_30 : f32 to vector<16x128xf32>
    %202 = arith.maximumf %200, %201 : vector<16x128xf32>
    %203 = vector.broadcast %199 : vector<1x128xf32> to vector<16x128xf32>
    %204 = arith.mulf %202, %203 : vector<16x128xf32>
    %205 = arith.maximumf %180, %204 : vector<16x128xf32>
    %206 = vector.extract_strided_slice %1 {offsets = [8, 0], sizes = [1, 128], strides = [1, 1]} : vector<16x128xi32> to vector<1x128xi32>
    %207 = vector.broadcast %6 : vector<256x1xi32> to vector<256x128xi32>
    %208 = vector.broadcast %206 : vector<1x128xi32> to vector<256x128xi32>
    %209 = arith.cmpi eq, %207, %208 : vector<256x128xi32>
    %210 = arith.extui %209 : vector<256x128xi1> to vector<256x128xi32>
    %211 = arith.sitofp %210 : vector<256x128xi32> to vector<256x128xf32>
    %cst_31 = arith.constant dense<0.000000e+00> : vector<19x128xf32>
    %212 = tpu.matmul %3, %211, %cst_31 {dimension_numbers = #tpu.dot_dimension_numbers<[1], [0], [0], [1], [0, 0, 1, 1], [], []>} : vector<19x256xf32>, vector<256x128xf32>, vector<19x128xf32> -> vector<19x128xf32>
    %213 = arith.subf %212, %5 : vector<19x128xf32>
    %214 = vector.extract_strided_slice %213 {offsets = [16, 0], sizes = [1, 128], strides = [1, 1]} : vector<19x128xf32> to vector<1x128xf32>
    %215 = vector.extract_strided_slice %213 {offsets = [17, 0], sizes = [1, 128], strides = [1, 1]} : vector<19x128xf32> to vector<1x128xf32>
    %216 = vector.extract_strided_slice %213 {offsets = [18, 0], sizes = [1, 128], strides = [1, 1]} : vector<19x128xf32> to vector<1x128xf32>
    %217 = arith.mulf %214, %214 : vector<1x128xf32>
    %218 = arith.mulf %215, %215 : vector<1x128xf32>
    %219 = arith.addf %217, %218 : vector<1x128xf32>
    %220 = arith.mulf %216, %216 : vector<1x128xf32>
    %221 = arith.addf %219, %220 : vector<1x128xf32>
    %cst_32 = arith.constant 1.000000e-24 : f32
    %222 = vector.broadcast %cst_32 : f32 to vector<1x128xf32>
    %223 = arith.maximumf %221, %222 : vector<1x128xf32>
    %224 = math.rsqrt %223 : vector<1x128xf32>
    %225 = vector.extract_strided_slice %213 {offsets = [0, 0], sizes = [16, 128], strides = [1, 1]} : vector<19x128xf32> to vector<16x128xf32>
    %cst_33 = arith.constant 0.000000e+00 : f32
    %226 = vector.broadcast %cst_33 : f32 to vector<16x128xf32>
    %227 = arith.maximumf %225, %226 : vector<16x128xf32>
    %228 = vector.broadcast %224 : vector<1x128xf32> to vector<16x128xf32>
    %229 = arith.mulf %227, %228 : vector<16x128xf32>
    %230 = arith.maximumf %205, %229 : vector<16x128xf32>
    %231 = vector.extract_strided_slice %1 {offsets = [9, 0], sizes = [1, 128], strides = [1, 1]} : vector<16x128xi32> to vector<1x128xi32>
    %232 = vector.broadcast %6 : vector<256x1xi32> to vector<256x128xi32>
    %233 = vector.broadcast %231 : vector<1x128xi32> to vector<256x128xi32>
    %234 = arith.cmpi eq, %232, %233 : vector<256x128xi32>
    %235 = arith.extui %234 : vector<256x128xi1> to vector<256x128xi32>
    %236 = arith.sitofp %235 : vector<256x128xi32> to vector<256x128xf32>
    %cst_34 = arith.constant dense<0.000000e+00> : vector<19x128xf32>
    %237 = tpu.matmul %3, %236, %cst_34 {dimension_numbers = #tpu.dot_dimension_numbers<[1], [0], [0], [1], [0, 0, 1, 1], [], []>} : vector<19x256xf32>, vector<256x128xf32>, vector<19x128xf32> -> vector<19x128xf32>
    %238 = arith.subf %237, %5 : vector<19x128xf32>
    %239 = vector.extract_strided_slice %238 {offsets = [16, 0], sizes = [1, 128], strides = [1, 1]} : vector<19x128xf32> to vector<1x128xf32>
    %240 = vector.extract_strided_slice %238 {offsets = [17, 0], sizes = [1, 128], strides = [1, 1]} : vector<19x128xf32> to vector<1x128xf32>
    %241 = vector.extract_strided_slice %238 {offsets = [18, 0], sizes = [1, 128], strides = [1, 1]} : vector<19x128xf32> to vector<1x128xf32>
    %242 = arith.mulf %239, %239 : vector<1x128xf32>
    %243 = arith.mulf %240, %240 : vector<1x128xf32>
    %244 = arith.addf %242, %243 : vector<1x128xf32>
    %245 = arith.mulf %241, %241 : vector<1x128xf32>
    %246 = arith.addf %244, %245 : vector<1x128xf32>
    %cst_35 = arith.constant 1.000000e-24 : f32
    %247 = vector.broadcast %cst_35 : f32 to vector<1x128xf32>
    %248 = arith.maximumf %246, %247 : vector<1x128xf32>
    %249 = math.rsqrt %248 : vector<1x128xf32>
    %250 = vector.extract_strided_slice %238 {offsets = [0, 0], sizes = [16, 128], strides = [1, 1]} : vector<19x128xf32> to vector<16x128xf32>
    %cst_36 = arith.constant 0.000000e+00 : f32
    %251 = vector.broadcast %cst_36 : f32 to vector<16x128xf32>
    %252 = arith.maximumf %250, %251 : vector<16x128xf32>
    %253 = vector.broadcast %249 : vector<1x128xf32> to vector<16x128xf32>
    %254 = arith.mulf %252, %253 : vector<16x128xf32>
    %255 = arith.maximumf %230, %254 : vector<16x128xf32>
    %256 = vector.extract_strided_slice %1 {offsets = [10, 0], sizes = [1, 128], strides = [1, 1]} : vector<16x128xi32> to vector<1x128xi32>
    %257 = vector.broadcast %6 : vector<256x1xi32> to vector<256x128xi32>
    %258 = vector.broadcast %256 : vector<1x128xi32> to vector<256x128xi32>
    %259 = arith.cmpi eq, %257, %258 : vector<256x128xi32>
    %260 = arith.extui %259 : vector<256x128xi1> to vector<256x128xi32>
    %261 = arith.sitofp %260 : vector<256x128xi32> to vector<256x128xf32>
    %cst_37 = arith.constant dense<0.000000e+00> : vector<19x128xf32>
    %262 = tpu.matmul %3, %261, %cst_37 {dimension_numbers = #tpu.dot_dimension_numbers<[1], [0], [0], [1], [0, 0, 1, 1], [], []>} : vector<19x256xf32>, vector<256x128xf32>, vector<19x128xf32> -> vector<19x128xf32>
    %263 = arith.subf %262, %5 : vector<19x128xf32>
    %264 = vector.extract_strided_slice %263 {offsets = [16, 0], sizes = [1, 128], strides = [1, 1]} : vector<19x128xf32> to vector<1x128xf32>
    %265 = vector.extract_strided_slice %263 {offsets = [17, 0], sizes = [1, 128], strides = [1, 1]} : vector<19x128xf32> to vector<1x128xf32>
    %266 = vector.extract_strided_slice %263 {offsets = [18, 0], sizes = [1, 128], strides = [1, 1]} : vector<19x128xf32> to vector<1x128xf32>
    %267 = arith.mulf %264, %264 : vector<1x128xf32>
    %268 = arith.mulf %265, %265 : vector<1x128xf32>
    %269 = arith.addf %267, %268 : vector<1x128xf32>
    %270 = arith.mulf %266, %266 : vector<1x128xf32>
    %271 = arith.addf %269, %270 : vector<1x128xf32>
    %cst_38 = arith.constant 1.000000e-24 : f32
    %272 = vector.broadcast %cst_38 : f32 to vector<1x128xf32>
    %273 = arith.maximumf %271, %272 : vector<1x128xf32>
    %274 = math.rsqrt %273 : vector<1x128xf32>
    %275 = vector.extract_strided_slice %263 {offsets = [0, 0], sizes = [16, 128], strides = [1, 1]} : vector<19x128xf32> to vector<16x128xf32>
    %cst_39 = arith.constant 0.000000e+00 : f32
    %276 = vector.broadcast %cst_39 : f32 to vector<16x128xf32>
    %277 = arith.maximumf %275, %276 : vector<16x128xf32>
    %278 = vector.broadcast %274 : vector<1x128xf32> to vector<16x128xf32>
    %279 = arith.mulf %277, %278 : vector<16x128xf32>
    %280 = arith.maximumf %255, %279 : vector<16x128xf32>
    %281 = vector.extract_strided_slice %1 {offsets = [11, 0], sizes = [1, 128], strides = [1, 1]} : vector<16x128xi32> to vector<1x128xi32>
    %282 = vector.broadcast %6 : vector<256x1xi32> to vector<256x128xi32>
    %283 = vector.broadcast %281 : vector<1x128xi32> to vector<256x128xi32>
    %284 = arith.cmpi eq, %282, %283 : vector<256x128xi32>
    %285 = arith.extui %284 : vector<256x128xi1> to vector<256x128xi32>
    %286 = arith.sitofp %285 : vector<256x128xi32> to vector<256x128xf32>
    %cst_40 = arith.constant dense<0.000000e+00> : vector<19x128xf32>
    %287 = tpu.matmul %3, %286, %cst_40 {dimension_numbers = #tpu.dot_dimension_numbers<[1], [0], [0], [1], [0, 0, 1, 1], [], []>} : vector<19x256xf32>, vector<256x128xf32>, vector<19x128xf32> -> vector<19x128xf32>
    %288 = arith.subf %287, %5 : vector<19x128xf32>
    %289 = vector.extract_strided_slice %288 {offsets = [16, 0], sizes = [1, 128], strides = [1, 1]} : vector<19x128xf32> to vector<1x128xf32>
    %290 = vector.extract_strided_slice %288 {offsets = [17, 0], sizes = [1, 128], strides = [1, 1]} : vector<19x128xf32> to vector<1x128xf32>
    %291 = vector.extract_strided_slice %288 {offsets = [18, 0], sizes = [1, 128], strides = [1, 1]} : vector<19x128xf32> to vector<1x128xf32>
    %292 = arith.mulf %289, %289 : vector<1x128xf32>
    %293 = arith.mulf %290, %290 : vector<1x128xf32>
    %294 = arith.addf %292, %293 : vector<1x128xf32>
    %295 = arith.mulf %291, %291 : vector<1x128xf32>
    %296 = arith.addf %294, %295 : vector<1x128xf32>
    %cst_41 = arith.constant 1.000000e-24 : f32
    %297 = vector.broadcast %cst_41 : f32 to vector<1x128xf32>
    %298 = arith.maximumf %296, %297 : vector<1x128xf32>
    %299 = math.rsqrt %298 : vector<1x128xf32>
    %300 = vector.extract_strided_slice %288 {offsets = [0, 0], sizes = [16, 128], strides = [1, 1]} : vector<19x128xf32> to vector<16x128xf32>
    %cst_42 = arith.constant 0.000000e+00 : f32
    %301 = vector.broadcast %cst_42 : f32 to vector<16x128xf32>
    %302 = arith.maximumf %300, %301 : vector<16x128xf32>
    %303 = vector.broadcast %299 : vector<1x128xf32> to vector<16x128xf32>
    %304 = arith.mulf %302, %303 : vector<16x128xf32>
    %305 = arith.maximumf %280, %304 : vector<16x128xf32>
    %306 = vector.extract_strided_slice %1 {offsets = [12, 0], sizes = [1, 128], strides = [1, 1]} : vector<16x128xi32> to vector<1x128xi32>
    %307 = vector.broadcast %6 : vector<256x1xi32> to vector<256x128xi32>
    %308 = vector.broadcast %306 : vector<1x128xi32> to vector<256x128xi32>
    %309 = arith.cmpi eq, %307, %308 : vector<256x128xi32>
    %310 = arith.extui %309 : vector<256x128xi1> to vector<256x128xi32>
    %311 = arith.sitofp %310 : vector<256x128xi32> to vector<256x128xf32>
    %cst_43 = arith.constant dense<0.000000e+00> : vector<19x128xf32>
    %312 = tpu.matmul %3, %311, %cst_43 {dimension_numbers = #tpu.dot_dimension_numbers<[1], [0], [0], [1], [0, 0, 1, 1], [], []>} : vector<19x256xf32>, vector<256x128xf32>, vector<19x128xf32> -> vector<19x128xf32>
    %313 = arith.subf %312, %5 : vector<19x128xf32>
    %314 = vector.extract_strided_slice %313 {offsets = [16, 0], sizes = [1, 128], strides = [1, 1]} : vector<19x128xf32> to vector<1x128xf32>
    %315 = vector.extract_strided_slice %313 {offsets = [17, 0], sizes = [1, 128], strides = [1, 1]} : vector<19x128xf32> to vector<1x128xf32>
    %316 = vector.extract_strided_slice %313 {offsets = [18, 0], sizes = [1, 128], strides = [1, 1]} : vector<19x128xf32> to vector<1x128xf32>
    %317 = arith.mulf %314, %314 : vector<1x128xf32>
    %318 = arith.mulf %315, %315 : vector<1x128xf32>
    %319 = arith.addf %317, %318 : vector<1x128xf32>
    %320 = arith.mulf %316, %316 : vector<1x128xf32>
    %321 = arith.addf %319, %320 : vector<1x128xf32>
    %cst_44 = arith.constant 1.000000e-24 : f32
    %322 = vector.broadcast %cst_44 : f32 to vector<1x128xf32>
    %323 = arith.maximumf %321, %322 : vector<1x128xf32>
    %324 = math.rsqrt %323 : vector<1x128xf32>
    %325 = vector.extract_strided_slice %313 {offsets = [0, 0], sizes = [16, 128], strides = [1, 1]} : vector<19x128xf32> to vector<16x128xf32>
    %cst_45 = arith.constant 0.000000e+00 : f32
    %326 = vector.broadcast %cst_45 : f32 to vector<16x128xf32>
    %327 = arith.maximumf %325, %326 : vector<16x128xf32>
    %328 = vector.broadcast %324 : vector<1x128xf32> to vector<16x128xf32>
    %329 = arith.mulf %327, %328 : vector<16x128xf32>
    %330 = arith.maximumf %305, %329 : vector<16x128xf32>
    %331 = vector.extract_strided_slice %1 {offsets = [13, 0], sizes = [1, 128], strides = [1, 1]} : vector<16x128xi32> to vector<1x128xi32>
    %332 = vector.broadcast %6 : vector<256x1xi32> to vector<256x128xi32>
    %333 = vector.broadcast %331 : vector<1x128xi32> to vector<256x128xi32>
    %334 = arith.cmpi eq, %332, %333 : vector<256x128xi32>
    %335 = arith.extui %334 : vector<256x128xi1> to vector<256x128xi32>
    %336 = arith.sitofp %335 : vector<256x128xi32> to vector<256x128xf32>
    %cst_46 = arith.constant dense<0.000000e+00> : vector<19x128xf32>
    %337 = tpu.matmul %3, %336, %cst_46 {dimension_numbers = #tpu.dot_dimension_numbers<[1], [0], [0], [1], [0, 0, 1, 1], [], []>} : vector<19x256xf32>, vector<256x128xf32>, vector<19x128xf32> -> vector<19x128xf32>
    %338 = arith.subf %337, %5 : vector<19x128xf32>
    %339 = vector.extract_strided_slice %338 {offsets = [16, 0], sizes = [1, 128], strides = [1, 1]} : vector<19x128xf32> to vector<1x128xf32>
    %340 = vector.extract_strided_slice %338 {offsets = [17, 0], sizes = [1, 128], strides = [1, 1]} : vector<19x128xf32> to vector<1x128xf32>
    %341 = vector.extract_strided_slice %338 {offsets = [18, 0], sizes = [1, 128], strides = [1, 1]} : vector<19x128xf32> to vector<1x128xf32>
    %342 = arith.mulf %339, %339 : vector<1x128xf32>
    %343 = arith.mulf %340, %340 : vector<1x128xf32>
    %344 = arith.addf %342, %343 : vector<1x128xf32>
    %345 = arith.mulf %341, %341 : vector<1x128xf32>
    %346 = arith.addf %344, %345 : vector<1x128xf32>
    %cst_47 = arith.constant 1.000000e-24 : f32
    %347 = vector.broadcast %cst_47 : f32 to vector<1x128xf32>
    %348 = arith.maximumf %346, %347 : vector<1x128xf32>
    %349 = math.rsqrt %348 : vector<1x128xf32>
    %350 = vector.extract_strided_slice %338 {offsets = [0, 0], sizes = [16, 128], strides = [1, 1]} : vector<19x128xf32> to vector<16x128xf32>
    %cst_48 = arith.constant 0.000000e+00 : f32
    %351 = vector.broadcast %cst_48 : f32 to vector<16x128xf32>
    %352 = arith.maximumf %350, %351 : vector<16x128xf32>
    %353 = vector.broadcast %349 : vector<1x128xf32> to vector<16x128xf32>
    %354 = arith.mulf %352, %353 : vector<16x128xf32>
    %355 = arith.maximumf %330, %354 : vector<16x128xf32>
    %356 = vector.extract_strided_slice %1 {offsets = [14, 0], sizes = [1, 128], strides = [1, 1]} : vector<16x128xi32> to vector<1x128xi32>
    %357 = vector.broadcast %6 : vector<256x1xi32> to vector<256x128xi32>
    %358 = vector.broadcast %356 : vector<1x128xi32> to vector<256x128xi32>
    %359 = arith.cmpi eq, %357, %358 : vector<256x128xi32>
    %360 = arith.extui %359 : vector<256x128xi1> to vector<256x128xi32>
    %361 = arith.sitofp %360 : vector<256x128xi32> to vector<256x128xf32>
    %cst_49 = arith.constant dense<0.000000e+00> : vector<19x128xf32>
    %362 = tpu.matmul %3, %361, %cst_49 {dimension_numbers = #tpu.dot_dimension_numbers<[1], [0], [0], [1], [0, 0, 1, 1], [], []>} : vector<19x256xf32>, vector<256x128xf32>, vector<19x128xf32> -> vector<19x128xf32>
    %363 = arith.subf %362, %5 : vector<19x128xf32>
    %364 = vector.extract_strided_slice %363 {offsets = [16, 0], sizes = [1, 128], strides = [1, 1]} : vector<19x128xf32> to vector<1x128xf32>
    %365 = vector.extract_strided_slice %363 {offsets = [17, 0], sizes = [1, 128], strides = [1, 1]} : vector<19x128xf32> to vector<1x128xf32>
    %366 = vector.extract_strided_slice %363 {offsets = [18, 0], sizes = [1, 128], strides = [1, 1]} : vector<19x128xf32> to vector<1x128xf32>
    %367 = arith.mulf %364, %364 : vector<1x128xf32>
    %368 = arith.mulf %365, %365 : vector<1x128xf32>
    %369 = arith.addf %367, %368 : vector<1x128xf32>
    %370 = arith.mulf %366, %366 : vector<1x128xf32>
    %371 = arith.addf %369, %370 : vector<1x128xf32>
    %cst_50 = arith.constant 1.000000e-24 : f32
    %372 = vector.broadcast %cst_50 : f32 to vector<1x128xf32>
    %373 = arith.maximumf %371, %372 : vector<1x128xf32>
    %374 = math.rsqrt %373 : vector<1x128xf32>
    %375 = vector.extract_strided_slice %363 {offsets = [0, 0], sizes = [16, 128], strides = [1, 1]} : vector<19x128xf32> to vector<16x128xf32>
    %cst_51 = arith.constant 0.000000e+00 : f32
    %376 = vector.broadcast %cst_51 : f32 to vector<16x128xf32>
    %377 = arith.maximumf %375, %376 : vector<16x128xf32>
    %378 = vector.broadcast %374 : vector<1x128xf32> to vector<16x128xf32>
    %379 = arith.mulf %377, %378 : vector<16x128xf32>
    %380 = arith.maximumf %355, %379 : vector<16x128xf32>
    %381 = vector.extract_strided_slice %1 {offsets = [15, 0], sizes = [1, 128], strides = [1, 1]} : vector<16x128xi32> to vector<1x128xi32>
    %382 = vector.broadcast %6 : vector<256x1xi32> to vector<256x128xi32>
    %383 = vector.broadcast %381 : vector<1x128xi32> to vector<256x128xi32>
    %384 = arith.cmpi eq, %382, %383 : vector<256x128xi32>
    %385 = arith.extui %384 : vector<256x128xi1> to vector<256x128xi32>
    %386 = arith.sitofp %385 : vector<256x128xi32> to vector<256x128xf32>
    %cst_52 = arith.constant dense<0.000000e+00> : vector<19x128xf32>
    %387 = tpu.matmul %3, %386, %cst_52 {dimension_numbers = #tpu.dot_dimension_numbers<[1], [0], [0], [1], [0, 0, 1, 1], [], []>} : vector<19x256xf32>, vector<256x128xf32>, vector<19x128xf32> -> vector<19x128xf32>
    %388 = arith.subf %387, %5 : vector<19x128xf32>
    %389 = vector.extract_strided_slice %388 {offsets = [16, 0], sizes = [1, 128], strides = [1, 1]} : vector<19x128xf32> to vector<1x128xf32>
    %390 = vector.extract_strided_slice %388 {offsets = [17, 0], sizes = [1, 128], strides = [1, 1]} : vector<19x128xf32> to vector<1x128xf32>
    %391 = vector.extract_strided_slice %388 {offsets = [18, 0], sizes = [1, 128], strides = [1, 1]} : vector<19x128xf32> to vector<1x128xf32>
    %392 = arith.mulf %389, %389 : vector<1x128xf32>
    %393 = arith.mulf %390, %390 : vector<1x128xf32>
    %394 = arith.addf %392, %393 : vector<1x128xf32>
    %395 = arith.mulf %391, %391 : vector<1x128xf32>
    %396 = arith.addf %394, %395 : vector<1x128xf32>
    %cst_53 = arith.constant 1.000000e-24 : f32
    %397 = vector.broadcast %cst_53 : f32 to vector<1x128xf32>
    %398 = arith.maximumf %396, %397 : vector<1x128xf32>
    %399 = math.rsqrt %398 : vector<1x128xf32>
    %400 = vector.extract_strided_slice %388 {offsets = [0, 0], sizes = [16, 128], strides = [1, 1]} : vector<19x128xf32> to vector<16x128xf32>
    %cst_54 = arith.constant 0.000000e+00 : f32
    %401 = vector.broadcast %cst_54 : f32 to vector<16x128xf32>
    %402 = arith.maximumf %400, %401 : vector<16x128xf32>
    %403 = vector.broadcast %399 : vector<1x128xf32> to vector<16x128xf32>
    %404 = arith.mulf %402, %403 : vector<16x128xf32>
    %405 = arith.maximumf %380, %404 : vector<16x128xf32>
    %cst_55 = arith.constant dense<0.000000e+00> : vector<128xf32>
    %406 = vector.multi_reduction <add>, %405, %cst_55 [0] : vector<16x128xf32> to vector<128xf32>
    %407 = vector.shape_cast %406 : vector<128xf32> to vector<1x128xf32>
    %c0_56 = arith.constant 0 : index
    %c0_57 = arith.constant 0 : index
    %c0_58 = arith.constant 0 : index
    %408 = vector.load %arg5[%c0_56, %c0_57, %c0_58] : memref<1x1x128xf32, #tpu.memory_space<vmem>>, vector<1x1x128xf32>
    %409 = vector.shape_cast %408 : vector<1x1x128xf32> to vector<1x128xf32>
    %410 = vector.shape_cast %407 : vector<1x128xf32> to vector<1x1x128xf32>
    tpu.vector_store %arg5[%c0_56, %c0_57, %c0_58], %410 {strides = array<i32>} : memref<1x1x128xf32, #tpu.memory_space<vmem>>, vector<1x1x128xf32>,
    return
  }
  func.func @transform_0(%arg0: i32, %arg1: i32) -> (i32, i32, i32) {
    %c0_i32 = arith.constant 0 : i32
    %c0_i32_0 = arith.constant 0 : i32
    return %arg0, %c0_i32, %arg1 : i32, i32, i32
  }
  func.func @transform_1(%arg0: i32, %arg1: i32) -> (i32, i32, i32) {
    %c0_i32 = arith.constant 0 : i32
    %c0_i32_0 = arith.constant 0 : i32
    %c0_i32_1 = arith.constant 0 : i32
    return %arg0, %c0_i32, %c0_i32_0 : i32, i32, i32
  }
  func.func @transform_2(%arg0: i32, %arg1: i32) -> (i32, i32, i32) {
    %c0_i32 = arith.constant 0 : i32
    %c0_i32_0 = arith.constant 0 : i32
    return %arg0, %c0_i32, %arg1 : i32, i32, i32
  }
  func.func @transform_3(%arg0: i32, %arg1: i32) -> (i32, i32, i32) {
    %c0_i32 = arith.constant 0 : i32
    %c0_i32_0 = arith.constant 0 : i32
    return %arg0, %c0_i32, %arg1 : i32, i32, i32
  }
}

</mosaic_0001>

<llo_original>
// kernel: tpu_custom_call.1
$region0: #{tpu_custom_call.1}
  #allocation0 [shape = 'u32[]', space=smem, size = 0x4, offset = 0x4, fixed_abs, tag = 'smem constant byte address 0x4 - core index']
  #allocation1 [shape = 'u32[144,128]{1,0:T(1,128)}', space=vmem, size = 0x12000, scoped, tag = 'internal scratch']
  %s0 = inlined_call_operand.vmem [shape: s32[2,16,256], index: 0, kind: input, shape index: {}]
  %s1 = inlined_call_operand.vmem [shape: f32[2,19,256], index: 1, kind: input, shape index: {}]
  %s2 = inlined_call_operand.vmem [shape: f32[2,19,256], index: 2, kind: input, shape index: {}]
  %s3 = inlined_call_operand.hbm [shape: f32[2,1,256], index: 3, kind: output, shape index: {}]
  %s4 = sld [smem:[#allocation0]]
  $region121: #{tpu_custom_call.1} parent=0
    _
  %s6 = ssub.s32 1, %s4
  %s7 = scalar_select 0, %s6, %s4
  $region1: #{tpu_custom_call.1} parent=0
    #allocation2 [shape = 'u8[16384]{0}', space=vmem, size = 0x4000, scoped, tag = 'input window, operand 0']
    #allocation3 [shape = 'u8[24576]{0}', space=vmem, size = 0x6000, scoped, tag = 'input window, operand 2']
    #allocation4 [shape = 'u8[1024]{0}', space=vmem, size = 0x400, scoped, tag = 'output window, operand 0']
    #allocation5 [shape = 's32[2]{0}', space=sflag, size = 0x8, scoped, tag = 'scoped memory for tpu_custom_call.1']
    %8 = vsyncpa [#allocation5], 0
    %s9 = scalar_lea.sflag [#allocation5], 1
    %10 = vsyncpa %s9, 0
    loop: start=0, step=1, limit=6
    $region2: #{tpu_custom_call.1} parent=1 // loop_pre_header
      _
    $region3: #{tpu_custom_call.1} parent=1 // loop_header
      %s12 = sphi 0, %s16
      %p13 = scmp.ge.s32.totalorder %s12, 6
      %s19 = sphi 0, %s31
      %s20 = sphi 0, %s27
      %s21 = sphi 0, %s19
      %s22 = sphi 0, %s20
      %s23 = sphi 0, %s21
      %s24 = sphi 0, %s22
      %s36 = sphi 0, %s38
      %s39 = sphi 0, %s36
      %s40 = sphi 0, %s39
      %s56 = sphi 0, %s40
      %s62 = sphi 0, %s64
      %s65 = sphi 0, %s62
      %s66 = sphi 0, %s65
      %s82 = sphi 0, %s66
      %s90 = sphi 0, %s92
      %s93 = sphi 0, %s90
      %s94 = sphi 0, %s93
      %s110 = sphi 0, %s94
      %s118 = sphi 0, %s120
      %s121 = sphi 0, %s118
      %s122 = sphi 0, %s121
      %s138 = sphi 0, %s122
    $region4: #{tpu_custom_call.1} parent=1 // loop_header_branch
      %15 = sbr.rel (%p13) target = $region8
    $region5: #{tpu_custom_call.1} parent=1 // loop_body
      %s17 = ssub.s32 %s12, 1
      %s18 = ssub.s32 %s12, 2
      %s25 = sadd.s32 1, %s20
      %p26 = scmp.ge.s32.totalorder %s25, 2
      %s27 = scalar_select %p26, 0, %s25
      %s28 = sadd.s32 1, %s19
      %s29 = scalar_select %p26, %s28, %s19
      %p30 = scmp.ge.s32.totalorder %s29, 2
      %s31 = scalar_select %p30, 0, %s29
      %s32 = ssub.s32 %s19, %s31
      %s33 = ssub.s32 %s20, %s27
      %s34 = sor.u32 %s32, %s33
      %p35 = scmp.eq.s32.totalorder %s34, 0
      %s37 = sadd.s32 %s36, 1
      %s38 = scalar_select %p35, %s36, %s37
      %p41 = pneg %p35
      %p42 = scmp.eq.s32.totalorder %s12, 3
      %p43 = por %p41, %p42
      %p44 = scmp.ne.s32.totalorder %s36, %s39
      %p45 = scmp.eq.s32.totalorder %s12, 0
      %p46 = por %p44, %p45
      %p47 = scmp.ne.s32.totalorder %s36, %s39
      %p48 = scmp.eq.s32.totalorder %s17, 3
      %p49 = por %p47, %p48
      %p50 = scmp.ne.s32.totalorder %s39, %s40
      %p51 = scmp.eq.s32.totalorder %s17, 0
      %p52 = por %p50, %p51
      %p53 = scmp.ne.s32.totalorder %s39, %s40
      %p54 = scmp.eq.s32.totalorder %s18, 3
      %p55 = por %p53, %p54
      %p57 = scmp.ne.s32.totalorder %s40, %s56
      %p58 = scmp.eq.s32.totalorder %s18, 0
      %p59 = por %p57, %p58
      %s60 = ssub.s32 %s19, %s31
      %p61 = scmp.eq.s32.totalorder %s60, 0
      %s63 = sadd.s32 %s62, 1
      %s64 = scalar_select %p61, %s62, %s63
      %p67 = pneg %p61
      %p68 = scmp.eq.s32.totalorder %s12, 3
      %p69 = por %p67, %p68
      %p70 = scmp.ne.s32.totalorder %s62, %s65
      %p71 = scmp.eq.s32.totalorder %s12, 0
      %p72 = por %p70, %p71
      %p73 = scmp.ne.s32.totalorder %s62, %s65
      %p74 = scmp.eq.s32.totalorder %s17, 3
      %p75 = por %p73, %p74
      %p76 = scmp.ne.s32.totalorder %s65, %s66
      %p77 = scmp.eq.s32.totalorder %s17, 0
      %p78 = por %p76, %p77
      %p79 = scmp.ne.s32.totalorder %s65, %s66
      %p80 = scmp.eq.s32.totalorder %s18, 3
      %p81 = por %p79, %p80
      %p83 = scmp.ne.s32.totalorder %s66, %s82
      %p84 = scmp.eq.s32.totalorder %s18, 0
      %p85 = por %p83, %p84
      %s86 = ssub.s32 %s19, %s31
      %s87 = ssub.s32 %s20, %s27
      %s88 = sor.u32 %s86, %s87
      %p89 = scmp.eq.s32.totalorder %s88, 0
      %s91 = sadd.s32 %s90, 1
      %s92 = scalar_select %p89, %s90, %s91
      %p95 = pneg %p89
      %p96 = scmp.eq.s32.totalorder %s12, 3
      %p97 = por %p95, %p96
      %p98 = scmp.ne.s32.totalorder %s90, %s93
      %p99 = scmp.eq.s32.totalorder %s12, 0
      %p100 = por %p98, %p99
      %p101 = scmp.ne.s32.totalorder %s90, %s93
      %p102 = scmp.eq.s32.totalorder %s17, 3
      %p103 = por %p101, %p102
      %p104 = scmp.ne.s32.totalorder %s93, %s94
      %p105 = scmp.eq.s32.totalorder %s17, 0
      %p106 = por %p104, %p105
      %p107 = scmp.ne.s32.totalorder %s93, %s94
      %p108 = scmp.eq.s32.totalorder %s18, 3
      %p109 = por %p107, %p108
      %p111 = scmp.ne.s32.totalorder %s94, %s110
      %p112 = scmp.eq.s32.totalorder %s18, 0
      %p113 = por %p111, %p112
      %s114 = ssub.s32 %s19, %s31
      %s115 = ssub.s32 %s20, %s27
      %s116 = sor.u32 %s114, %s115
      %p117 = scmp.eq.s32.totalorder %s116, 0
      %s119 = sadd.s32 %s118, 1
      %s120 = scalar_select %p117, %s118, %s119
      %p123 = pneg %p117
      %p124 = scmp.eq.s32.totalorder %s12, 3
      %p125 = por %p123, %p124
      %p126 = scmp.ne.s32.totalorder %s118, %s121
      %p127 = scmp.eq.s32.totalorder %s12, 0
      %p128 = por %p126, %p127
      %p129 = scmp.ne.s32.totalorder %s118, %s121
      %p130 = scmp.eq.s32.totalorder %s17, 3
      %p131 = por %p129, %p130
      %p132 = scmp.ne.s32.totalorder %s121, %s122
      %p133 = scmp.eq.s32.totalorder %s17, 0
      %p134 = por %p132, %p133
      %p135 = scmp.ne.s32.totalorder %s121, %s122
      %p136 = scmp.eq.s32.totalorder %s18, 3
      %p137 = por %p135, %p136
      %p139 = scmp.ne.s32.totalorder %s122, %s138
      %p140 = scmp.eq.s32.totalorder %s18, 0
      %p141 = por %p139, %p140
      %p142 = scmp.le.s32.totalorder 1, %s12
      %p143 = scmp.lt.s32.totalorder %s12, 5
      %p144 = pnand %p142, %p143
      %p145 = pneg %p144
      // Predicated region
      $region9: #{tpu_custom_call.1} parent=5 // pred_check
        _
      $region10: #{tpu_custom_call.1} parent=5 // pred_check_branch
        %147 = sbr.rel (%p144) target = $region12
      $region11: #{tpu_custom_call.1} parent=5 // pred_region
        %s148 = ssub.s32 %s12, 1
      $region12: #{tpu_custom_call.1} parent=5 // pred_fallthru
        _
      %p149 = scmp.lt.s32.totalorder %s12, 4
      // Predicated region
      $region13: #{tpu_custom_call.1} parent=5 // pred_check
        %p150 = pneg %p149
      $region14: #{tpu_custom_call.1} parent=5 // pred_check_branch
        %152 = sbr.rel (%p150) target = $region16
      $region15: #{tpu_custom_call.1} parent=5 // pred_region
        // Predicated region
        $region17: #{tpu_custom_call.1} parent=15 // pred_check
          %p153 = pneg %p46
        $region18: #{tpu_custom_call.1} parent=15 // pred_check_branch
          %155 = sbr.rel (%p153) target = $region20
        $region19: #{tpu_custom_call.1} parent=15 // pred_region
          %s156 = sand.u32 %s36, 1
          %s157 = sand.u32 %s36, 1
          %s158 = smul.addr %s157, 16
          %s159 = scalar_lea.vmem [#allocation2], %s158
          %s160 = smul.addr %s19, 4
          %s161 = sadd.s32 %s20, %s160
          %s162 = smul.addr %s161, 8
          %s163 = scalar_lea.vmem %s0, %s162
          // Predicated region
          $region21: #{tpu_custom_call.1} parent=19 // pred_check
            _
          $region22: #{tpu_custom_call.1} parent=19 // pred_check_branch
            %165 = sbr.rel (0) target = $region24
          $region23: #{tpu_custom_call.1} parent=19 // pred_region
            // Predicated region
            $region25: #{tpu_custom_call.1} parent=23 // pred_check
              _
            $region26: #{tpu_custom_call.1} parent=23 // pred_check_branch
              %167 = sbr.rel (0) target = $region28
            $region27: #{tpu_custom_call.1} parent=23 // pred_region
              // Predicated region
              $region40: #{tpu_custom_call.1} parent=27 // pred_check
                _
              $region41: #{tpu_custom_call.1} parent=27 // pred_check_branch
                %184 = sbr.rel (0) target = $region43
              $region42: #{tpu_custom_call.1} parent=27 // pred_region
                loop: start=0, step=1, limit=1
                $region44: #{tpu_custom_call.1} parent=42 // loop_pre_header
                  _
                $region45: #{tpu_custom_call.1} parent=42 // loop_header
                  %s186 = sphi 0, %s190
                  %p187 = scmp.ge.s32.totalorder %s186, 1
                  %s191 = sphi %s163, %s163
                  %s192 = sphi %s159, %s159
                $region46: #{tpu_custom_call.1} parent=42 // loop_header_branch
                  %189 = sbr.rel (%p187) target = $region50
                $region47: #{tpu_custom_call.1} parent=42 // loop_body
                  %v193 = vld [vmem:[%s191] sm:$0xff]
                  %194 = vst [vmem:[%s192] sm:$0xff] %v193
                  %v195 = vld [vmem:[%s191 + $0x10] sm:$0xff]
                  %196 = vst [vmem:[%s192 + $0x8] sm:$0xff] %v195
                $region48: #{tpu_custom_call.1} parent=42 // loop_footer
                  %s190 = sadd.s32 1, %s186
                $region49: #{tpu_custom_call.1} parent=42 // loop_footer_branch
                  %185 = sbr.rel target = $region45
                $region50: #{tpu_custom_call.1} parent=42 // loop_exit
                  _
              $region43: #{tpu_custom_call.1} parent=27 // pred_fallthru
                _
              // Predicated region
              $region51: #{tpu_custom_call.1} parent=27 // pred_check
                _
              $region52: #{tpu_custom_call.1} parent=27 // pred_check_branch
                %198 = sbr.rel target = $region54
              $region53: #{tpu_custom_call.1} parent=27 // pred_region
                _
              $region54: #{tpu_custom_call.1} parent=27 // pred_fallthru
                _
            $region28: #{tpu_custom_call.1} parent=23 // pred_fallthru
              _
            // Predicated region
            $region29: #{tpu_custom_call.1} parent=23 // pred_check
              _
            $region30: #{tpu_custom_call.1} parent=23 // pred_check_branch
              %169 = sbr.rel target = $region32
            $region31: #{tpu_custom_call.1} parent=23 // pred_region
              loop: start=0, step=1, limit=1
              $region33: #{tpu_custom_call.1} parent=31 // loop_pre_header
                _
              $region34: #{tpu_custom_call.1} parent=31 // loop_header
                %s172 = sphi 0, %s176
                %p173 = scmp.ge.s32.totalorder %s172, 1
                %s177 = sphi %s163, %s163
                %s178 = sphi %s159, %s159
              $region35: #{tpu_custom_call.1} parent=31 // loop_header_branch
                %175 = sbr.rel (%p173) target = $region39
              $region36: #{tpu_custom_call.1} parent=31 // loop_body
                %v179 = vld [vmem:[%s177] sm:$0xff]
                %180 = vst [vmem:[%s178] sm:$0xff] %v179
                %v181 = vld [vmem:[%s177 + $0x10] sm:$0xff]
                %182 = vst [vmem:[%s178 + $0x8] sm:$0xff] %v181
              $region37: #{tpu_custom_call.1} parent=31 // loop_footer
                %s176 = sadd.s32 1, %s172
              $region38: #{tpu_custom_call.1} parent=31 // loop_footer_branch
                %171 = sbr.rel target = $region34
              $region39: #{tpu_custom_call.1} parent=31 // loop_exit
                _
            $region32: #{tpu_custom_call.1} parent=23 // pred_fallthru
              _
          $region24: #{tpu_custom_call.1} parent=19 // pred_fallthru
            _
          %199 = vnop
        $region20: #{tpu_custom_call.1} parent=15 // pred_fallthru
          _
        // Predicated region
        $region55: #{tpu_custom_call.1} parent=15 // pred_check
          %p200 = pneg %p72
        $region56: #{tpu_custom_call.1} parent=15 // pred_check_branch
          %202 = sbr.rel (%p200) target = $region58
        $region57: #{tpu_custom_call.1} parent=15 // pred_region
          %p203 = scmp.lt.s32.totalorder %s19, 1
          %s204 = scalar_select %p203, %s19, 1
          %s205 = smul.addr %s204, 6
          %s206 = smul.addr %s205, 8
          %s207 = scalar_lea.vmem %s1, %s206
        $region58: #{tpu_custom_call.1} parent=15 // pred_fallthru
          _
        // Predicated region
        $region59: #{tpu_custom_call.1} parent=15 // pred_check
          %p208 = pneg %p100
        $region60: #{tpu_custom_call.1} parent=15 // pred_check_branch
          %210 = sbr.rel (%p208) target = $region62
        $region61: #{tpu_custom_call.1} parent=15 // pred_region
          %s211 = sand.u32 %s90, 1
          %s212 = sand.u32 %s90, 1
          %s213 = smul.addr %s212, 24
          %s214 = scalar_lea.vmem [#allocation3], %s213
          %s215 = smul.addr %s19, 6
          %s216 = sadd.s32 %s20, %s215
          %s217 = smul.addr %s216, 8
          %s218 = scalar_lea.vmem %s2, %s217
          // Predicated region
          $region63: #{tpu_custom_call.1} parent=61 // pred_check
            _
          $region64: #{tpu_custom_call.1} parent=61 // pred_check_branch
            %220 = sbr.rel (0) target = $region66
          $region65: #{tpu_custom_call.1} parent=61 // pred_region
            // Predicated region
            $region67: #{tpu_custom_call.1} parent=65 // pred_check
              _
            $region68: #{tpu_custom_call.1} parent=65 // pred_check_branch
              %222 = sbr.rel (0) target = $region70
            $region69: #{tpu_custom_call.1} parent=65 // pred_region
              // Predicated region
              $region82: #{tpu_custom_call.1} parent=69 // pred_check
                _
              $region83: #{tpu_custom_call.1} parent=69 // pred_check_branch
                %241 = sbr.rel (0) target = $region85
              $region84: #{tpu_custom_call.1} parent=69 // pred_region
                loop: start=0, step=1, limit=1
                $region86: #{tpu_custom_call.1} parent=84 // loop_pre_header
                  _
                $region87: #{tpu_custom_call.1} parent=84 // loop_header
                  %s243 = sphi 0, %s247
                  %p244 = scmp.ge.s32.totalorder %s243, 1
                  %s248 = sphi %s218, %s218
                  %s249 = sphi %s214, %s214
                $region88: #{tpu_custom_call.1} parent=84 // loop_header_branch
                  %246 = sbr.rel (%p244) target = $region92
                $region89: #{tpu_custom_call.1} parent=84 // loop_body
                  %v250 = vld [vmem:[%s248] sm:$0xff]
                  %251 = vst [vmem:[%s249] sm:$0xff] %v250
                  %v252 = vld [vmem:[%s248 + $0x10] sm:$0xff]
                  %253 = vst [vmem:[%s249 + $0x8] sm:$0xff] %v252
                  %v254 = vld [vmem:[%s248 + $0x20] sm:$0xff]
                  %255 = vst [vmem:[%s249 + $0x10] sm:$0xff] %v254
                $region90: #{tpu_custom_call.1} parent=84 // loop_footer
                  %s247 = sadd.s32 1, %s243
                $region91: #{tpu_custom_call.1} parent=84 // loop_footer_branch
                  %242 = sbr.rel target = $region87
                $region92: #{tpu_custom_call.1} parent=84 // loop_exit
                  _
              $region85: #{tpu_custom_call.1} parent=69 // pred_fallthru
                _
              // Predicated region
              $region93: #{tpu_custom_call.1} parent=69 // pred_check
                _
              $region94: #{tpu_custom_call.1} parent=69 // pred_check_branch
                %257 = sbr.rel target = $region96
              $region95: #{tpu_custom_call.1} parent=69 // pred_region
                _
              $region96: #{tpu_custom_call.1} parent=69 // pred_fallthru
                _
            $region70: #{tpu_custom_call.1} parent=65 // pred_fallthru
              _
            // Predicated region
            $region71: #{tpu_custom_call.1} parent=65 // pred_check
              _
            $region72: #{tpu_custom_call.1} parent=65 // pred_check_branch
              %224 = sbr.rel target = $region74
            $region73: #{tpu_custom_call.1} parent=65 // pred_region
              loop: start=0, step=1, limit=1
              $region75: #{tpu_custom_call.1} parent=73 // loop_pre_header
                _
              $region76: #{tpu_custom_call.1} parent=73 // loop_header
                %s227 = sphi 0, %s231
                %p228 = scmp.ge.s32.totalorder %s227, 1
                %s232 = sphi %s218, %s218
                %s233 = sphi %s214, %s214
              $region77: #{tpu_custom_call.1} parent=73 // loop_header_branch
                %230 = sbr.rel (%p228) target = $region81
              $region78: #{tpu_custom_call.1} parent=73 // loop_body
                %v234 = vld [vmem:[%s232] sm:$0xff]
                %235 = vst [vmem:[%s233] sm:$0xff] %v234
                %v236 = vld [vmem:[%s232 + $0x10] sm:$0xff]
                %237 = vst [vmem:[%s233 + $0x8] sm:$0xff] %v236
                %v238 = vld [vmem:[%s232 + $0x20] sm:$0xff]
                %239 = vst [vmem:[%s233 + $0x10] sm:$0xff] %v238
              $region79: #{tpu_custom_call.1} parent=73 // loop_footer
                %s231 = sadd.s32 1, %s227
              $region80: #{tpu_custom_call.1} parent=73 // loop_footer_branch
                %226 = sbr.rel target = $region76
              $region81: #{tpu_custom_call.1} parent=73 // loop_exit
                _
            $region74: #{tpu_custom_call.1} parent=65 // pred_fallthru
              _
          $region66: #{tpu_custom_call.1} parent=61 // pred_fallthru
            _
          %258 = vnop
        $region62: #{tpu_custom_call.1} parent=15 // pred_fallthru
          _
      $region16: #{tpu_custom_call.1} parent=5 // pred_fallthru
        _
      %p259 = scmp.le.s32.totalorder 1, %s12
      %p260 = scmp.lt.s32.totalorder %s12, 5
      %p261 = pnand %p259, %p260
      %p262 = pneg %p261
      // Predicated region
      $region97: #{tpu_custom_call.1} parent=5 // pred_check
        _
      $region98: #{tpu_custom_call.1} parent=5 // pred_check_branch
        %264 = sbr.rel (%p261) target = $region100
      $region99: #{tpu_custom_call.1} parent=5 // pred_region
        %s265 = ssub.s32 %s12, 1
        %s266 = sand.u32 %s39, 1
        %s267 = sand.u32 %s39, 1
        %s268 = smul.addr %s267, 16
        %s269 = scalar_lea.vmem [#allocation2], %s268
        // Predicated region
        $region101: #{tpu_custom_call.1} parent=99 // pred_check
          %p270 = pneg %p52
        $region102: #{tpu_custom_call.1} parent=99 // pred_check_branch
          %272 = sbr.rel (%p270) target = $region104
        $region103: #{tpu_custom_call.1} parent=99 // pred_region
          _
        $region104: #{tpu_custom_call.1} parent=99 // pred_fallthru
          _
        %s273 = sand.u32 %s93, 1
        %s274 = sand.u32 %s93, 1
        %s275 = smul.addr %s274, 24
        %s276 = scalar_lea.vmem [#allocation3], %s275
        // Predicated region
        $region105: #{tpu_custom_call.1} parent=99 // pred_check
          %p277 = pneg %p106
        $region106: #{tpu_custom_call.1} parent=99 // pred_check_branch
          %279 = sbr.rel (%p277) target = $region108
        $region107: #{tpu_custom_call.1} parent=99 // pred_region
          _
        $region108: #{tpu_custom_call.1} parent=99 // pred_fallthru
          _
        %s280 = sand.u32 %s39, 1
        %s281 = sand.u32 %s39, 1
        %s282 = smul.addr %s281, 16
        %s283 = scalar_lea.vmem [#allocation2], %s282
        %p284 = pneg %p52
        %p285 = pneg %p49
        %p286 = scmp.lt.s32.totalorder %s21, 1
        %s287 = scalar_select %p286, %s21, 1
        %s288 = smul.addr %s287, 6
        %s289 = smul.addr %s288, 8
        %s290 = scalar_lea.vmem %s1, %s289
        %p291 = pneg %p78
        %p292 = pneg %p75
        %s293 = sand.u32 %s93, 1
        %s294 = sand.u32 %s93, 1
        %s295 = smul.addr %s294, 24
        %s296 = scalar_lea.vmem [#allocation3], %s295
        %p297 = pneg %p106
        %p298 = pneg %p103
        %p299 = pneg %p134
        %p300 = pneg %p131
        %s301 = sand.u32 %s121, 1
        %s302 = scalar_lea.sflag [#allocation5], %s301
        %s303 = sand.u32 %s121, 1
        %s304 = scalar_lea.vmem [#allocation4], %s303
        %p305 = scmp.lt.s32.totalorder %s21, 1
        %s306 = scalar_select %p305, %s21, 1
        %s307 = smul.addr %s306, 6
        %s308 = smul.addr %s307, 8
        %s309 = scalar_lea.vmem %s1, %s308
        %v310 = vld [vmem:[%s269] sm:$0xff]
        %v311 = vld [vmem:[%s269 + $0x8] sm:$0xff]
        %v312 = vld [vmem:[%s309] sm:$0xff]
        %v313 = vld [vmem:[%s309 + $0x8] sm:$0xff]
        %v314 = vld [vmem:[%s309 + $0x10] sm:$0xff]
        %v315 = vld [vmem:[%s309 + $0x18] sm:$0xff]
        %v316 = vld [vmem:[%s309 + $0x20] sm:$0x7]
        %v317 = vld [vmem:[%s309 + $0x28] sm:$0x7]
        %v318 = vld [vmem:[%s276] sm:$0xff]
        %v319 = vld [vmem:[%s276 + $0x8] sm:$0xff]
        %v320 = vld [vmem:[%s276 + $0x10] sm:$0x7]
        %v321 = vlaneseq
        %v322 = vshrl.u32 %v321, 7
        %v323 = vadd.s32 %v322, 8
        %v324 = vadd.s32 %v322, 16
        %v325 = vadd.s32 %v322, 24
        %v326 = vadd.s32 %v322, 32
        %v327 = vadd.s32 %v322, 40
        %v328 = vadd.s32 %v322, 48
        %v329 = vadd.s32 %v322, 56
        %v330 = vadd.s32 %v322, 64
        %v331 = vadd.s32 %v322, 72
        %v332 = vadd.s32 %v322, 80
        %v333 = vadd.s32 %v322, 88
        %v334 = vadd.s32 %v322, 96
        %v335 = vadd.s32 %v322, 104
        %v336 = vadd.s32 %v322, 112
        %v337 = vadd.s32 %v322, 120
        %v338 = vadd.s32 %v322, 128
        %v339 = vadd.s32 %v322, 136
        %v340 = vadd.s32 %v322, 144
        %v341 = vadd.s32 %v322, 152
        %v342 = vadd.s32 %v322, 160
        %v343 = vadd.s32 %v322, 168
        %v344 = vadd.s32 %v322, 176
        %v345 = vadd.s32 %v322, 184
        %v346 = vadd.s32 %v322, 192
        %v347 = vadd.s32 %v322, 200
        %v348 = vadd.s32 %v322, 208
        %v349 = vadd.s32 %v322, 216
        %v350 = vadd.s32 %v322, 224
        %v351 = vadd.s32 %v322, 232
        %v352 = vadd.s32 %v322, 240
        %v353 = vadd.s32 %v322, 248
        %v354 = vlaneseq
        %v355 = vshrl.u32 %v354, 7
        %v356 = vsub.s32 0, %v355
        %v357 = vrot.slane %v310, %v356
        %vm358 = vcmp.eq.s32.totalorder %v322, %v357
        %vm359 = vcmp.eq.s32.totalorder %v323, %v357
        %vm360 = vcmp.eq.s32.totalorder %v324, %v357
        %vm361 = vcmp.eq.s32.totalorder %v325, %v357
        %vm362 = vcmp.eq.s32.totalorder %v326, %v357
        %vm363 = vcmp.eq.s32.totalorder %v327, %v357
        %vm364 = vcmp.eq.s32.totalorder %v328, %v357
        %vm365 = vcmp.eq.s32.totalorder %v329, %v357
        %vm366 = vcmp.eq.s32.totalorder %v330, %v357
        %vm367 = vcmp.eq.s32.totalorder %v331, %v357
        %vm368 = vcmp.eq.s32.totalorder %v332, %v357
        %vm369 = vcmp.eq.s32.totalorder %v333, %v357
        %vm370 = vcmp.eq.s32.totalorder %v334, %v357
        %vm371 = vcmp.eq.s32.totalorder %v335, %v357
        %vm372 = vcmp.eq.s32.totalorder %v336, %v357
        %vm373 = vcmp.eq.s32.totalorder %v337, %v357
        %vm374 = vcmp.eq.s32.totalorder %v338, %v357
        %vm375 = vcmp.eq.s32.totalorder %v339, %v357
        %vm376 = vcmp.eq.s32.totalorder %v340, %v357
        %vm377 = vcmp.eq.s32.totalorder %v341, %v357
        %vm378 = vcmp.eq.s32.totalorder %v342, %v357
        %vm379 = vcmp.eq.s32.totalorder %v343, %v357
        %vm380 = vcmp.eq.s32.totalorder %v344, %v357
        %vm381 = vcmp.eq.s32.totalorder %v345, %v357
        %vm382 = vcmp.eq.s32.totalorder %v346, %v357
        %vm383 = vcmp.eq.s32.totalorder %v347, %v357
        %vm384 = vcmp.eq.s32.totalorder %v348, %v357
        %vm385 = vcmp.eq.s32.totalorder %v349, %v357
        %vm386 = vcmp.eq.s32.totalorder %v350, %v357
        %vm387 = vcmp.eq.s32.totalorder %v351, %v357
        %vm388 = vcmp.eq.s32.totalorder %v352, %v357
        %vm389 = vcmp.eq.s32.totalorder %v353, %v357
        %v390 = vsel %vm358, 1, 0
        %v391 = vsel %vm359, 1, 0
        %v392 = vsel %vm360, 1, 0
        %v393 = vsel %vm361, 1, 0
        %v394 = vsel %vm362, 1, 0
        %v395 = vsel %vm363, 1, 0
        %v396 = vsel %vm364, 1, 0
        %v397 = vsel %vm365, 1, 0
        %v398 = vsel %vm366, 1, 0
        %v399 = vsel %vm367, 1, 0
        %v400 = vsel %vm368, 1, 0
        %v401 = vsel %vm369, 1, 0
        %v402 = vsel %vm370, 1, 0
        %v403 = vsel %vm371, 1, 0
        %v404 = vsel %vm372, 1, 0
        %v405 = vsel %vm373, 1, 0
        %v406 = vsel %vm374, 1, 0
        %v407 = vsel %vm375, 1, 0
        %v408 = vsel %vm376, 1, 0
        %v409 = vsel %vm377, 1, 0
        %v410 = vsel %vm378, 1, 0
        %v411 = vsel %vm379, 1, 0
        %v412 = vsel %vm380, 1, 0
        %v413 = vsel %vm381, 1, 0
        %v414 = vsel %vm382, 1, 0
        %v415 = vsel %vm383, 1, 0
        %v416 = vsel %vm384, 1, 0
        %v417 = vsel %vm385, 1, 0
        %v418 = vsel %vm386, 1, 0
        %v419 = vsel %vm387, 1, 0
        %v420 = vsel %vm388, 1, 0
        %v421 = vsel %vm389, 1, 0
        %v422 = vcvt.s32.f32 %v390
        %v423 = vcvt.s32.f32 %v391
        %v424 = vcvt.s32.f32 %v392
        %v425 = vcvt.s32.f32 %v393
        %v426 = vcvt.s32.f32 %v394
        %v427 = vcvt.s32.f32 %v395
        %v428 = vcvt.s32.f32 %v396
        %v429 = vcvt.s32.f32 %v397
        %v430 = vcvt.s32.f32 %v398
        %v431 = vcvt.s32.f32 %v399
        %v432 = vcvt.s32.f32 %v400
        %v433 = vcvt.s32.f32 %v401
        %v434 = vcvt.s32.f32 %v402
        %v435 = vcvt.s32.f32 %v403
        %v436 = vcvt.s32.f32 %v404
        %v437 = vcvt.s32.f32 %v405
        %v438 = vcvt.s32.f32 %v406
        %v439 = vcvt.s32.f32 %v407
        %v440 = vcvt.s32.f32 %v408
        %v441 = vcvt.s32.f32 %v409
        %v442 = vcvt.s32.f32 %v410
        %v443 = vcvt.s32.f32 %v411
        %v444 = vcvt.s32.f32 %v412
        %v445 = vcvt.s32.f32 %v413
        %v446 = vcvt.s32.f32 %v414
        %v447 = vcvt.s32.f32 %v415
        %v448 = vcvt.s32.f32 %v416
        %v449 = vcvt.s32.f32 %v417
        %v450 = vcvt.s32.f32 %v418
        %v451 = vcvt.s32.f32 %v419
        %v452 = vcvt.s32.f32 %v420
        %v453 = vcvt.s32.f32 %v421
        %454 = vmatprep.subr.mxu0 0.0
        %455 = vmatpush1.msra.mxu0 %v422
        %456 = vmatprep.subr.mxu0 0.0
        %457 = vmatpush1.msra.mxu0 %v423
        %458 = vmatprep.subr.mxu0 0.0
        %459 = vmatpush1.msra.mxu0 %v424
        %460 = vmatprep.subr.mxu0 0.0
        %461 = vmatpush1.msra.mxu0 %v425
        %462 = vmatprep.subr.mxu0 0.0
        %463 = vmatpush1.msra.mxu0 %v426
        %464 = vmatprep.subr.mxu0 0.0
        %465 = vmatpush1.msra.mxu0 %v427
        %466 = vmatprep.subr.mxu0 0.0
        %467 = vmatpush1.msra.mxu0 %v428
        %468 = vmatprep.subr.mxu0 0.0
        %469 = vmatpush1.msra.mxu0 %v429
        %470 = vmatprep.subr.mxu0 0.0
        %471 = vmatpush1.msra.mxu0 %v430
        %472 = vmatprep.subr.mxu0 0.0
        %473 = vmatpush1.msra.mxu0 %v431
        %474 = vmatprep.subr.mxu0 0.0
        %475 = vmatpush1.msra.mxu0 %v432
        %476 = vmatprep.subr.mxu0 0.0
        %477 = vmatpush1.msra.mxu0 %v433
        %478 = vmatprep.subr.mxu0 0.0
        %479 = vmatpush1.msra.mxu0 %v434
        %480 = vmatprep.subr.mxu0 0.0
        %481 = vmatpush1.msra.mxu0 %v435
        %482 = vmatprep.subr.mxu0 0.0
        %483 = vmatpush1.msra.mxu0 %v436
        %484 = vmatprep.subr.mxu0 0.0
        %485 = vmatpush1.msra.mxu0 %v437
        %486 = vmatprep.subr.mxu0 0.0
        %487 = vmatpush1.msra.mxu0 %v438
        %488 = vmatprep.subr.mxu0 0.0
        %489 = vmatpush1.msra.mxu0 %v439
        %490 = vmatprep.subr.mxu0 0.0
        %491 = vmatpush1.msra.mxu0 %v440
        %492 = vmatprep.subr.mxu0 0.0
        %493 = vmatpush1.msra.mxu0 %v441
        %494 = vmatprep.subr.mxu0 0.0
        %495 = vmatpush1.msra.mxu0 %v442
        %496 = vmatprep.subr.mxu0 0.0
        %497 = vmatpush1.msra.mxu0 %v443
        %498 = vmatprep.subr.mxu0 0.0
        %499 = vmatpush1.msra.mxu0 %v444
        %500 = vmatprep.subr.mxu0 0.0
        %501 = vmatpush1.msra.mxu0 %v445
        %502 = vmatprep.subr.mxu0 0.0
        %503 = vmatpush1.msra.mxu0 %v446
        %504 = vmatprep.subr.mxu0 0.0
        %505 = vmatpush1.msra.mxu0 %v447
        %506 = vmatprep.subr.mxu0 0.0
        %507 = vmatpush1.msra.mxu0 %v448
        %508 = vmatprep.subr.mxu0 0.0
        %509 = vmatpush1.msra.mxu0 %v449
        %510 = vmatprep.subr.mxu0 0.0
        %511 = vmatpush1.msra.mxu0 %v450
        %512 = vmatprep.subr.mxu0 0.0
        %513 = vmatpush1.msra.mxu0 %v451
        %514 = vmatprep.subr.mxu0 0.0
        %515 = vmatpush1.msra.mxu0 %v452
        %516 = vmatprep.subr.mxu0 0.0
        %517 = vmatpush1.msra.mxu0 %v453
        %518 = vmatprep.mubr.f32.mxu0 %v313
        %519 = vmatmul.mubr.f32.gmra.mrb[0].mxu0 %v312
        %v520 = vpop.f32.mrb[0].mxu0
        %v521 = vadd.f32 0.0, %v520
        %v522 = vpop.f32.mrb[0].mxu0
        %523 = vmatprep.mubr.f32.mxu0 %v315
        %524 = vmatmul.mubr.f32.gmra.mrb[0].mxu0 %v314
        %v525 = vpop.f32.mrb[0].mxu0
        %v526 = vadd.f32 0.0, %v525
        %v527 = vpop.f32.mrb[0].mxu0
        %528 = vmatprep.mubr.f32.mxu0 %v317
        %529 = vmatmul.mubr.f32.gmra.mrb[0].mxu0 %v316
        %v530 = vpop.f32.mrb[0].mxu0
        %v531 = vadd.f32 0.0, %v530
        %v532 = vpop.f32.mrb[0].mxu0
        %533 = vdwg.mxu0
        %v534 = vsub.f32 %v521, %v318
        %v535 = vsub.f32 %v526, %v319
        %v536 = vsub.f32 %v531, %v320
        %v537 = vmul.f32 %v536, %v536
        %v539 = vrot.slane %v537, 1
        %v541 = vadd.f32 %v537, %v539
        %v542 = vrot.slane %v537, 2
        %v544 = vadd.f32 %v541, %v542
        %v545 = vmax.f32 %v544, 1e-24
        %v546 = vrsqrt.pop %v545
        %v547 = vmax.f32 %v534, 0.0
        %v548 = vmax.f32 %v535, 0.0
        %v549 = vlaneseq
        %v550 = vshrl.u32 %v549, 7
        %v551 = vsub.s32 0, %v550
        %v552 = vrot.slane %v546, %v551
        %v553 = vmul.f32 %v547, %v552
        %v554 = vmul.f32 %v548, %v552
        %v555 = vlaneseq
        %v556 = vshrl.u32 %v555, 7
        %v557 = vsub.s32 1, %v556
        %v558 = vrot.slane %v310, %v557
        %vm559 = vcmp.eq.s32.totalorder %v322, %v558
        %vm560 = vcmp.eq.s32.totalorder %v323, %v558
        %vm561 = vcmp.eq.s32.totalorder %v324, %v558
        %vm562 = vcmp.eq.s32.totalorder %v325, %v558
        %vm563 = vcmp.eq.s32.totalorder %v326, %v558
        %vm564 = vcmp.eq.s32.totalorder %v327, %v558
        %vm565 = vcmp.eq.s32.totalorder %v328, %v558
        %vm566 = vcmp.eq.s32.totalorder %v329, %v558
        %vm567 = vcmp.eq.s32.totalorder %v330, %v558
        %vm568 = vcmp.eq.s32.totalorder %v331, %v558
        %vm569 = vcmp.eq.s32.totalorder %v332, %v558
        %vm570 = vcmp.eq.s32.totalorder %v333, %v558
        %vm571 = vcmp.eq.s32.totalorder %v334, %v558
        %vm572 = vcmp.eq.s32.totalorder %v335, %v558
        %vm573 = vcmp.eq.s32.totalorder %v336, %v558
        %vm574 = vcmp.eq.s32.totalorder %v337, %v558
        %vm575 = vcmp.eq.s32.totalorder %v338, %v558
        %vm576 = vcmp.eq.s32.totalorder %v339, %v558
        %vm577 = vcmp.eq.s32.totalorder %v340, %v558
        %vm578 = vcmp.eq.s32.totalorder %v341, %v558
        %vm579 = vcmp.eq.s32.totalorder %v342, %v558
        %vm580 = vcmp.eq.s32.totalorder %v343, %v558
        %vm581 = vcmp.eq.s32.totalorder %v344, %v558
        %vm582 = vcmp.eq.s32.totalorder %v345, %v558
        %vm583 = vcmp.eq.s32.totalorder %v346, %v558
        %vm584 = vcmp.eq.s32.totalorder %v347, %v558
        %vm585 = vcmp.eq.s32.totalorder %v348, %v558
        %vm586 = vcmp.eq.s32.totalorder %v349, %v558
        %vm587 = vcmp.eq.s32.totalorder %v350, %v558
        %vm588 = vcmp.eq.s32.totalorder %v351, %v558
        %vm589 = vcmp.eq.s32.totalorder %v352, %v558
        %vm590 = vcmp.eq.s32.totalorder %v353, %v558
        %v591 = vsel %vm559, 1, 0
        %v592 = vsel %vm560, 1, 0
        %v593 = vsel %vm561, 1, 0
        %v594 = vsel %vm562, 1, 0
        %v595 = vsel %vm563, 1, 0
        %v596 = vsel %vm564, 1, 0
        %v597 = vsel %vm565, 1, 0
        %v598 = vsel %vm566, 1, 0
        %v599 = vsel %vm567, 1, 0
        %v600 = vsel %vm568, 1, 0
        %v601 = vsel %vm569, 1, 0
        %v602 = vsel %vm570, 1, 0
        %v603 = vsel %vm571, 1, 0
        %v604 = vsel %vm572, 1, 0
        %v605 = vsel %vm573, 1, 0
        %v606 = vsel %vm574, 1, 0
        %v607 = vsel %vm575, 1, 0
        %v608 = vsel %vm576, 1, 0
        %v609 = vsel %vm577, 1, 0
        %v610 = vsel %vm578, 1, 0
        %v611 = vsel %vm579, 1, 0
        %v612 = vsel %vm580, 1, 0
        %v613 = vsel %vm581, 1, 0
        %v614 = vsel %vm582, 1, 0
        %v615 = vsel %vm583, 1, 0
        %v616 = vsel %vm584, 1, 0
        %v617 = vsel %vm585, 1, 0
        %v618 = vsel %vm586, 1, 0
        %v619 = vsel %vm587, 1, 0
        %v620 = vsel %vm588, 1, 0
        %v621 = vsel %vm589, 1, 0
        %v622 = vsel %vm590, 1, 0
        %v623 = vcvt.s32.f32 %v591
        %v624 = vcvt.s32.f32 %v592
        %v625 = vcvt.s32.f32 %v593
        %v626 = vcvt.s32.f32 %v594
        %v627 = vcvt.s32.f32 %v595
        %v628 = vcvt.s32.f32 %v596
        %v629 = vcvt.s32.f32 %v597
        %v630 = vcvt.s32.f32 %v598
        %v631 = vcvt.s32.f32 %v599
        %v632 = vcvt.s32.f32 %v600
        %v633 = vcvt.s32.f32 %v601
        %v634 = vcvt.s32.f32 %v602
        %v635 = vcvt.s32.f32 %v603
        %v636 = vcvt.s32.f32 %v604
        %v637 = vcvt.s32.f32 %v605
        %v638 = vcvt.s32.f32 %v606
        %v639 = vcvt.s32.f32 %v607
        %v640 = vcvt.s32.f32 %v608
        %v641 = vcvt.s32.f32 %v609
        %v642 = vcvt.s32.f32 %v610
        %v643 = vcvt.s32.f32 %v611
        %v644 = vcvt.s32.f32 %v612
        %v645 = vcvt.s32.f32 %v613
        %v646 = vcvt.s32.f32 %v614
        %v647 = vcvt.s32.f32 %v615
        %v648 = vcvt.s32.f32 %v616
        %v649 = vcvt.s32.f32 %v617
        %v650 = vcvt.s32.f32 %v618
        %v651 = vcvt.s32.f32 %v619
        %v652 = vcvt.s32.f32 %v620
        %v653 = vcvt.s32.f32 %v621
        %v654 = vcvt.s32.f32 %v622
        %655 = vmatprep.subr.mxu0 0.0
        %656 = vmatpush1.msra.mxu0 %v623
        %657 = vmatprep.subr.mxu0 0.0
        %658 = vmatpush1.msra.mxu0 %v624
        %659 = vmatprep.subr.mxu0 0.0
        %660 = vmatpush1.msra.mxu0 %v625
        %661 = vmatprep.subr.mxu0 0.0
        %662 = vmatpush1.msra.mxu0 %v626
        %663 = vmatprep.subr.mxu0 0.0
        %664 = vmatpush1.msra.mxu0 %v627
        %665 = vmatprep.subr.mxu0 0.0
        %666 = vmatpush1.msra.mxu0 %v628
        %667 = vmatprep.subr.mxu0 0.0
        %668 = vmatpush1.msra.mxu0 %v629
        %669 = vmatprep.subr.mxu0 0.0
        %670 = vmatpush1.msra.mxu0 %v630
        %671 = vmatprep.subr.mxu0 0.0
        %672 = vmatpush1.msra.mxu0 %v631
        %673 = vmatprep.subr.mxu0 0.0
        %674 = vmatpush1.msra.mxu0 %v632
        %675 = vmatprep.subr.mxu0 0.0
        %676 = vmatpush1.msra.mxu0 %v633
        %677 = vmatprep.subr.mxu0 0.0
        %678 = vmatpush1.msra.mxu0 %v634
        %679 = vmatprep.subr.mxu0 0.0
        %680 = vmatpush1.msra.mxu0 %v635
        %681 = vmatprep.subr.mxu0 0.0
        %682 = vmatpush1.msra.mxu0 %v636
        %683 = vmatprep.subr.mxu0 0.0
        %684 = vmatpush1.msra.mxu0 %v637
        %685 = vmatprep.subr.mxu0 0.0
        %686 = vmatpush1.msra.mxu0 %v638
        %687 = vmatprep.subr.mxu0 0.0
        %688 = vmatpush1.msra.mxu0 %v639
        %689 = vmatprep.subr.mxu0 0.0
        %690 = vmatpush1.msra.mxu0 %v640
        %691 = vmatprep.subr.mxu0 0.0
        %692 = vmatpush1.msra.mxu0 %v641
        %693 = vmatprep.subr.mxu0 0.0
        %694 = vmatpush1.msra.mxu0 %v642
        %695 = vmatprep.subr.mxu0 0.0
        %696 = vmatpush1.msra.mxu0 %v643
        %697 = vmatprep.subr.mxu0 0.0
        %698 = vmatpush1.msra.mxu0 %v644
        %699 = vmatprep.subr.mxu0 0.0
        %700 = vmatpush1.msra.mxu0 %v645
        %701 = vmatprep.subr.mxu0 0.0
        %702 = vmatpush1.msra.mxu0 %v646
        %703 = vmatprep.subr.mxu0 0.0
        %704 = vmatpush1.msra.mxu0 %v647
        %705 = vmatprep.subr.mxu0 0.0
        %706 = vmatpush1.msra.mxu0 %v648
        %707 = vmatprep.subr.mxu0 0.0
        %708 = vmatpush1.msra.mxu0 %v649
        %709 = vmatprep.subr.mxu0 0.0
        %710 = vmatpush1.msra.mxu0 %v650
        %711 = vmatprep.subr.mxu0 0.0
        %712 = vmatpush1.msra.mxu0 %v651
        %713 = vmatprep.subr.mxu0 0.0
        %714 = vmatpush1.msra.mxu0 %v652
        %715 = vmatprep.subr.mxu0 0.0
        %716 = vmatpush1.msra.mxu0 %v653
        %717 = vmatprep.subr.mxu0 0.0
        %718 = vmatpush1.msra.mxu0 %v654
        %719 = vmatprep.mubr.f32.mxu0 %v313
        %720 = vmatmul.mubr.f32.gmra.mrb[0].mxu0 %v312
        %v721 = vpop.f32.mrb[0].mxu0
        %v722 = vadd.f32 0.0, %v721
        %v723 = vpop.f32.mrb[0].mxu0
        %724 = vmatprep.mubr.f32.mxu0 %v315
        %725 = vmatmul.mubr.f32.gmra.mrb[0].mxu0 %v314
        %v726 = vpop.f32.mrb[0].mxu0
        %v727 = vadd.f32 0.0, %v726
        %v728 = vpop.f32.mrb[0].mxu0
        %729 = vmatprep.mubr.f32.mxu0 %v317
        %730 = vmatmul.mubr.f32.gmra.mrb[0].mxu0 %v316
        %v731 = vpop.f32.mrb[0].mxu0
        %v732 = vadd.f32 0.0, %v731
        %v733 = vpop.f32.mrb[0].mxu0
        %734 = vdwg.mxu0
        %v735 = vsub.f32 %v722, %v318
        %v736 = vsub.f32 %v727, %v319
        %v737 = vsub.f32 %v732, %v320
        %v738 = vmul.f32 %v737, %v737
        %v740 = vrot.slane %v738, 1
        %v742 = vadd.f32 %v738, %v740
        %v743 = vrot.slane %v738, 2
        %v745 = vadd.f32 %v742, %v743
        %v746 = vmax.f32 %v745, 1e-24
        %v747 = vrsqrt.pop %v746
        %v748 = vmax.f32 %v735, 0.0
        %v749 = vmax.f32 %v736, 0.0
        %v750 = vlaneseq
        %v751 = vshrl.u32 %v750, 7
        %v752 = vsub.s32 0, %v751
        %v753 = vrot.slane %v747, %v752
        %v754 = vmul.f32 %v748, %v753
        %v755 = vmul.f32 %v749, %v753
        %v756 = vmax.f32 %v553, %v754
        %v757 = vmax.f32 %v554, %v755
        %v758 = vlaneseq
        %v759 = vshrl.u32 %v758, 7
        %v760 = vsub.s32 2, %v759
        %v761 = vrot.slane %v310, %v760
        %vm762 = vcmp.eq.s32.totalorder %v322, %v761
        %vm763 = vcmp.eq.s32.totalorder %v323, %v761
        %vm764 = vcmp.eq.s32.totalorder %v324, %v761
        %vm765 = vcmp.eq.s32.totalorder %v325, %v761
        %vm766 = vcmp.eq.s32.totalorder %v326, %v761
        %vm767 = vcmp.eq.s32.totalorder %v327, %v761
        %vm768 = vcmp.eq.s32.totalorder %v328, %v761
        %vm769 = vcmp.eq.s32.totalorder %v329, %v761
        %vm770 = vcmp.eq.s32.totalorder %v330, %v761
        %vm771 = vcmp.eq.s32.totalorder %v331, %v761
        %vm772 = vcmp.eq.s32.totalorder %v332, %v761
        %vm773 = vcmp.eq.s32.totalorder %v333, %v761
        %vm774 = vcmp.eq.s32.totalorder %v334, %v761
        %vm775 = vcmp.eq.s32.totalorder %v335, %v761
        %vm776 = vcmp.eq.s32.totalorder %v336, %v761
        %vm777 = vcmp.eq.s32.totalorder %v337, %v761
        %vm778 = vcmp.eq.s32.totalorder %v338, %v761
        %vm779 = vcmp.eq.s32.totalorder %v339, %v761
        %vm780 = vcmp.eq.s32.totalorder %v340, %v761
        %vm781 = vcmp.eq.s32.totalorder %v341, %v761
        %vm782 = vcmp.eq.s32.totalorder %v342, %v761
        %vm783 = vcmp.eq.s32.totalorder %v343, %v761
        %vm784 = vcmp.eq.s32.totalorder %v344, %v761
        %vm785 = vcmp.eq.s32.totalorder %v345, %v761
        %vm786 = vcmp.eq.s32.totalorder %v346, %v761
        %vm787 = vcmp.eq.s32.totalorder %v347, %v761
        %vm788 = vcmp.eq.s32.totalorder %v348, %v761
        %vm789 = vcmp.eq.s32.totalorder %v349, %v761
        %vm790 = vcmp.eq.s32.totalorder %v350, %v761
        %vm791 = vcmp.eq.s32.totalorder %v351, %v761
        %vm792 = vcmp.eq.s32.totalorder %v352, %v761
        %vm793 = vcmp.eq.s32.totalorder %v353, %v761
        %v794 = vsel %vm762, 1, 0
        %v795 = vsel %vm763, 1, 0
        %v796 = vsel %vm764, 1, 0
        %v797 = vsel %vm765, 1, 0
        %v798 = vsel %vm766, 1, 0
        %v799 = vsel %vm767, 1, 0
        %v800 = vsel %vm768, 1, 0
        %v801 = vsel %vm769, 1, 0
        %v802 = vsel %vm770, 1, 0
        %v803 = vsel %vm771, 1, 0
        %v804 = vsel %vm772, 1, 0
        %v805 = vsel %vm773, 1, 0
        %v806 = vsel %vm774, 1, 0
        %v807 = vsel %vm775, 1, 0
        %v808 = vsel %vm776, 1, 0
        %v809 = vsel %vm777, 1, 0
        %v810 = vsel %vm778, 1, 0
        %v811 = vsel %vm779, 1, 0
        %v812 = vsel %vm780, 1, 0
        %v813 = vsel %vm781, 1, 0
        %v814 = vsel %vm782, 1, 0
        %v815 = vsel %vm783, 1, 0
        %v816 = vsel %vm784, 1, 0
        %v817 = vsel %vm785, 1, 0
        %v818 = vsel %vm786, 1, 0
        %v819 = vsel %vm787, 1, 0
        %v820 = vsel %vm788, 1, 0
        %v821 = vsel %vm789, 1, 0
        %v822 = vsel %vm790, 1, 0
        %v823 = vsel %vm791, 1, 0
        %v824 = vsel %vm792, 1, 0
        %v825 = vsel %vm793, 1, 0
        %v826 = vcvt.s32.f32 %v794
        %v827 = vcvt.s32.f32 %v795
        %v828 = vcvt.s32.f32 %v796
        %v829 = vcvt.s32.f32 %v797
        %v830 = vcvt.s32.f32 %v798
        %v831 = vcvt.s32.f32 %v799
        %v832 = vcvt.s32.f32 %v800
        %v833 = vcvt.s32.f32 %v801
        %v834 = vcvt.s32.f32 %v802
        %v835 = vcvt.s32.f32 %v803
        %v836 = vcvt.s32.f32 %v804
        %v837 = vcvt.s32.f32 %v805
        %v838 = vcvt.s32.f32 %v806
        %v839 = vcvt.s32.f32 %v807
        %v840 = vcvt.s32.f32 %v808
        %v841 = vcvt.s32.f32 %v809
        %v842 = vcvt.s32.f32 %v810
        %v843 = vcvt.s32.f32 %v811
        %v844 = vcvt.s32.f32 %v812
        %v845 = vcvt.s32.f32 %v813
        %v846 = vcvt.s32.f32 %v814
        %v847 = vcvt.s32.f32 %v815
        %v848 = vcvt.s32.f32 %v816
        %v849 = vcvt.s32.f32 %v817
        %v850 = vcvt.s32.f32 %v818
        %v851 = vcvt.s32.f32 %v819
        %v852 = vcvt.s32.f32 %v820
        %v853 = vcvt.s32.f32 %v821
        %v854 = vcvt.s32.f32 %v822
        %v855 = vcvt.s32.f32 %v823
        %v856 = vcvt.s32.f32 %v824
        %v857 = vcvt.s32.f32 %v825
        %858 = vmatprep.subr.mxu0 0.0
        %859 = vmatpush1.msra.mxu0 %v826
        %860 = vmatprep.subr.mxu0 0.0
        %861 = vmatpush1.msra.mxu0 %v827
        %862 = vmatprep.subr.mxu0 0.0
        %863 = vmatpush1.msra.mxu0 %v828
        %864 = vmatprep.subr.mxu0 0.0
        %865 = vmatpush1.msra.mxu0 %v829
        %866 = vmatprep.subr.mxu0 0.0
        %867 = vmatpush1.msra.mxu0 %v830
        %868 = vmatprep.subr.mxu0 0.0
        %869 = vmatpush1.msra.mxu0 %v831
        %870 = vmatprep.subr.mxu0 0.0
        %871 = vmatpush1.msra.mxu0 %v832
        %872 = vmatprep.subr.mxu0 0.0
        %873 = vmatpush1.msra.mxu0 %v833
        %874 = vmatprep.subr.mxu0 0.0
        %875 = vmatpush1.msra.mxu0 %v834
        %876 = vmatprep.subr.mxu0 0.0
        %877 = vmatpush1.msra.mxu0 %v835
        %878 = vmatprep.subr.mxu0 0.0
        %879 = vmatpush1.msra.mxu0 %v836
        %880 = vmatprep.subr.mxu0 0.0
        %881 = vmatpush1.msra.mxu0 %v837
        %882 = vmatprep.subr.mxu0 0.0
        %883 = vmatpush1.msra.mxu0 %v838
        %884 = vmatprep.subr.mxu0 0.0
        %885 = vmatpush1.msra.mxu0 %v839
        %886 = vmatprep.subr.mxu0 0.0
        %887 = vmatpush1.msra.mxu0 %v840
        %888 = vmatprep.subr.mxu0 0.0
        %889 = vmatpush1.msra.mxu0 %v841
        %890 = vmatprep.subr.mxu0 0.0
        %891 = vmatpush1.msra.mxu0 %v842
        %892 = vmatprep.subr.mxu0 0.0
        %893 = vmatpush1.msra.mxu0 %v843
        %894 = vmatprep.subr.mxu0 0.0
        %895 = vmatpush1.msra.mxu0 %v844
        %896 = vmatprep.subr.mxu0 0.0
        %897 = vmatpush1.msra.mxu0 %v845
        %898 = vmatprep.subr.mxu0 0.0
        %899 = vmatpush1.msra.mxu0 %v846
        %900 = vmatprep.subr.mxu0 0.0
        %901 = vmatpush1.msra.mxu0 %v847
        %902 = vmatprep.subr.mxu0 0.0
        %903 = vmatpush1.msra.mxu0 %v848
        %904 = vmatprep.subr.mxu0 0.0
        %905 = vmatpush1.msra.mxu0 %v849
        %906 = vmatprep.subr.mxu0 0.0
        %907 = vmatpush1.msra.mxu0 %v850
        %908 = vmatprep.subr.mxu0 0.0
        %909 = vmatpush1.msra.mxu0 %v851
        %910 = vmatprep.subr.mxu0 0.0
        %911 = vmatpush1.msra.mxu0 %v852
        %912 = vmatprep.subr.mxu0 0.0
        %913 = vmatpush1.msra.mxu0 %v853
        %914 = vmatprep.subr.mxu0 0.0
        %915 = vmatpush1.msra.mxu0 %v854
        %916 = vmatprep.subr.mxu0 0.0
        %917 = vmatpush1.msra.mxu0 %v855
        %918 = vmatprep.subr.mxu0 0.0
        %919 = vmatpush1.msra.mxu0 %v856
        %920 = vmatprep.subr.mxu0 0.0
        %921 = vmatpush1.msra.mxu0 %v857
        %922 = vmatprep.mubr.f32.mxu0 %v313
        %923 = vmatmul.mubr.f32.gmra.mrb[0].mxu0 %v312
        %v924 = vpop.f32.mrb[0].mxu0
        %v925 = vadd.f32 0.0, %v924
        %v926 = vpop.f32.mrb[0].mxu0
        %927 = vmatprep.mubr.f32.mxu0 %v315
        %928 = vmatmul.mubr.f32.gmra.mrb[0].mxu0 %v314
        %v929 = vpop.f32.mrb[0].mxu0
        %v930 = vadd.f32 0.0, %v929
        %v931 = vpop.f32.mrb[0].mxu0
        %932 = vmatprep.mubr.f32.mxu0 %v317
        %933 = vmatmul.mubr.f32.gmra.mrb[0].mxu0 %v316
        %v934 = vpop.f32.mrb[0].mxu0
        %v935 = vadd.f32 0.0, %v934
        %v936 = vpop.f32.mrb[0].mxu0
        %937 = vdwg.mxu0
        %v938 = vsub.f32 %v925, %v318
        %v939 = vsub.f32 %v930, %v319
        %v940 = vsub.f32 %v935, %v320
        %v941 = vmul.f32 %v940, %v940
        %v943 = vrot.slane %v941, 1
        %v945 = vadd.f32 %v941, %v943
        %v946 = vrot.slane %v941, 2
        %v948 = vadd.f32 %v945, %v946
        %v949 = vmax.f32 %v948, 1e-24
        %v950 = vrsqrt.pop %v949
        %v951 = vmax.f32 %v938, 0.0
        %v952 = vmax.f32 %v939, 0.0
        %v953 = vlaneseq
        %v954 = vshrl.u32 %v953, 7
        %v955 = vsub.s32 0, %v954
        %v956 = vrot.slane %v950, %v955
        %v957 = vmul.f32 %v951, %v956
        %v958 = vmul.f32 %v952, %v956
        %v959 = vmax.f32 %v756, %v957
        %v960 = vmax.f32 %v757, %v958
        %v961 = vlaneseq
        %v962 = vshrl.u32 %v961, 7
        %v963 = vsub.s32 3, %v962
        %v964 = vrot.slane %v310, %v963
        %vm965 = vcmp.eq.s32.totalorder %v322, %v964
        %vm966 = vcmp.eq.s32.totalorder %v323, %v964
        %vm967 = vcmp.eq.s32.totalorder %v324, %v964
        %vm968 = vcmp.eq.s32.totalorder %v325, %v964
        %vm969 = vcmp.eq.s32.totalorder %v326, %v964
        %vm970 = vcmp.eq.s32.totalorder %v327, %v964
        %vm971 = vcmp.eq.s32.totalorder %v328, %v964
        %vm972 = vcmp.eq.s32.totalorder %v329, %v964
        %vm973 = vcmp.eq.s32.totalorder %v330, %v964
        %vm974 = vcmp.eq.s32.totalorder %v331, %v964
        %vm975 = vcmp.eq.s32.totalorder %v332, %v964
        %vm976 = vcmp.eq.s32.totalorder %v333, %v964
        %vm977 = vcmp.eq.s32.totalorder %v334, %v964
        %vm978 = vcmp.eq.s32.totalorder %v335, %v964
        %vm979 = vcmp.eq.s32.totalorder %v336, %v964
        %vm980 = vcmp.eq.s32.totalorder %v337, %v964
        %vm981 = vcmp.eq.s32.totalorder %v338, %v964
        %vm982 = vcmp.eq.s32.totalorder %v339, %v964
        %vm983 = vcmp.eq.s32.totalorder %v340, %v964
        %vm984 = vcmp.eq.s32.totalorder %v341, %v964
        %vm985 = vcmp.eq.s32.totalorder %v342, %v964
        %vm986 = vcmp.eq.s32.totalorder %v343, %v964
        %vm987 = vcmp.eq.s32.totalorder %v344, %v964
        %vm988 = vcmp.eq.s32.totalorder %v345, %v964
        %vm989 = vcmp.eq.s32.totalorder %v346, %v964
        %vm990 = vcmp.eq.s32.totalorder %v347, %v964
        %vm991 = vcmp.eq.s32.totalorder %v348, %v964
        %vm992 = vcmp.eq.s32.totalorder %v349, %v964
        %vm993 = vcmp.eq.s32.totalorder %v350, %v964
        %vm994 = vcmp.eq.s32.totalorder %v351, %v964
        %vm995 = vcmp.eq.s32.totalorder %v352, %v964
        %vm996 = vcmp.eq.s32.totalorder %v353, %v964
        %v997 = vsel %vm965, 1, 0
        %v998 = vsel %vm966, 1, 0
        %v999 = vsel %vm967, 1, 0
        %v1000 = vsel %vm968, 1, 0
        %v1001 = vsel %vm969, 1, 0
        %v1002 = vsel %vm970, 1, 0
        %v1003 = vsel %vm971, 1, 0
        %v1004 = vsel %vm972, 1, 0
        %v1005 = vsel %vm973, 1, 0
        %v1006 = vsel %vm974, 1, 0
        %v1007 = vsel %vm975, 1, 0
        %v1008 = vsel %vm976, 1, 0
        %v1009 = vsel %vm977, 1, 0
        %v1010 = vsel %vm978, 1, 0
        %v1011 = vsel %vm979, 1, 0
        %v1012 = vsel %vm980, 1, 0
        %v1013 = vsel %vm981, 1, 0
        %v1014 = vsel %vm982, 1, 0
        %v1015 = vsel %vm983, 1, 0
        %v1016 = vsel %vm984, 1, 0
        %v1017 = vsel %vm985, 1, 0
        %v1018 = vsel %vm986, 1, 0
        %v1019 = vsel %vm987, 1, 0
        %v1020 = vsel %vm988, 1, 0
        %v1021 = vsel %vm989, 1, 0
        %v1022 = vsel %vm990, 1, 0
        %v1023 = vsel %vm991, 1, 0
        %v1024 = vsel %vm992, 1, 0
        %v1025 = vsel %vm993, 1, 0
        %v1026 = vsel %vm994, 1, 0
        %v1027 = vsel %vm995, 1, 0
        %v1028 = vsel %vm996, 1, 0
        %v1029 = vcvt.s32.f32 %v997
        %v1030 = vcvt.s32.f32 %v998
        %v1031 = vcvt.s32.f32 %v999
        %v1032 = vcvt.s32.f32 %v1000
        %v1033 = vcvt.s32.f32 %v1001
        %v1034 = vcvt.s32.f32 %v1002
        %v1035 = vcvt.s32.f32 %v1003
        %v1036 = vcvt.s32.f32 %v1004
        %v1037 = vcvt.s32.f32 %v1005
        %v1038 = vcvt.s32.f32 %v1006
        %v1039 = vcvt.s32.f32 %v1007
        %v1040 = vcvt.s32.f32 %v1008
        %v1041 = vcvt.s32.f32 %v1009
        %v1042 = vcvt.s32.f32 %v1010
        %v1043 = vcvt.s32.f32 %v1011
        %v1044 = vcvt.s32.f32 %v1012
        %v1045 = vcvt.s32.f32 %v1013
        %v1046 = vcvt.s32.f32 %v1014
        %v1047 = vcvt.s32.f32 %v1015
        %v1048 = vcvt.s32.f32 %v1016
        %v1049 = vcvt.s32.f32 %v1017
        %v1050 = vcvt.s32.f32 %v1018
        %v1051 = vcvt.s32.f32 %v1019
        %v1052 = vcvt.s32.f32 %v1020
        %v1053 = vcvt.s32.f32 %v1021
        %v1054 = vcvt.s32.f32 %v1022
        %v1055 = vcvt.s32.f32 %v1023
        %v1056 = vcvt.s32.f32 %v1024
        %v1057 = vcvt.s32.f32 %v1025
        %v1058 = vcvt.s32.f32 %v1026
        %v1059 = vcvt.s32.f32 %v1027
        %v1060 = vcvt.s32.f32 %v1028
        %1061 = vmatprep.subr.mxu0 0.0
        %1062 = vmatpush1.msra.mxu0 %v1029
        %1063 = vmatprep.subr.mxu0 0.0
        %1064 = vmatpush1.msra.mxu0 %v1030
        %1065 = vmatprep.subr.mxu0 0.0
        %1066 = vmatpush1.msra.mxu0 %v1031
        %1067 = vmatprep.subr.mxu0 0.0
        %1068 = vmatpush1.msra.mxu0 %v1032
        %1069 = vmatprep.subr.mxu0 0.0
        %1070 = vmatpush1.msra.mxu0 %v1033
        %1071 = vmatprep.subr.mxu0 0.0
        %1072 = vmatpush1.msra.mxu0 %v1034
        %1073 = vmatprep.subr.mxu0 0.0
        %1074 = vmatpush1.msra.mxu0 %v1035
        %1075 = vmatprep.subr.mxu0 0.0
        %1076 = vmatpush1.msra.mxu0 %v1036
        %1077 = vmatprep.subr.mxu0 0.0
        %1078 = vmatpush1.msra.mxu0 %v1037
        %1079 = vmatprep.subr.mxu0 0.0
        %1080 = vmatpush1.msra.mxu0 %v1038
        %1081 = vmatprep.subr.mxu0 0.0
        %1082 = vmatpush1.msra.mxu0 %v1039
        %1083 = vmatprep.subr.mxu0 0.0
        %1084 = vmatpush1.msra.mxu0 %v1040
        %1085 = vmatprep.subr.mxu0 0.0
        %1086 = vmatpush1.msra.mxu0 %v1041
        %1087 = vmatprep.subr.mxu0 0.0
        %1088 = vmatpush1.msra.mxu0 %v1042
        %1089 = vmatprep.subr.mxu0 0.0
        %1090 = vmatpush1.msra.mxu0 %v1043
        %1091 = vmatprep.subr.mxu0 0.0
        %1092 = vmatpush1.msra.mxu0 %v1044
        %1093 = vmatprep.subr.mxu0 0.0
        %1094 = vmatpush1.msra.mxu0 %v1045
        %1095 = vmatprep.subr.mxu0 0.0
        %1096 = vmatpush1.msra.mxu0 %v1046
        %1097 = vmatprep.subr.mxu0 0.0
        %1098 = vmatpush1.msra.mxu0 %v1047
        %1099 = vmatprep.subr.mxu0 0.0
        %1100 = vmatpush1.msra.mxu0 %v1048
        %1101 = vmatprep.subr.mxu0 0.0
        %1102 = vmatpush1.msra.mxu0 %v1049
        %1103 = vmatprep.subr.mxu0 0.0
        %1104 = vmatpush1.msra.mxu0 %v1050
        %1105 = vmatprep.subr.mxu0 0.0
        %1106 = vmatpush1.msra.mxu0 %v1051
        %1107 = vmatprep.subr.mxu0 0.0
        %1108 = vmatpush1.msra.mxu0 %v1052
        %1109 = vmatprep.subr.mxu0 0.0
        %1110 = vmatpush1.msra.mxu0 %v1053
        %1111 = vmatprep.subr.mxu0 0.0
        %1112 = vmatpush1.msra.mxu0 %v1054
        %1113 = vmatprep.subr.mxu0 0.0
        %1114 = vmatpush1.msra.mxu0 %v1055
        %1115 = vmatprep.subr.mxu0 0.0
        %1116 = vmatpush1.msra.mxu0 %v1056
        %1117 = vmatprep.subr.mxu0 0.0
        %1118 = vmatpush1.msra.mxu0 %v1057
        %1119 = vmatprep.subr.mxu0 0.0
        %1120 = vmatpush1.msra.mxu0 %v1058
        %1121 = vmatprep.subr.mxu0 0.0
        %1122 = vmatpush1.msra.mxu0 %v1059
        %1123 = vmatprep.subr.mxu0 0.0
        %1124 = vmatpush1.msra.mxu0 %v1060
        %1125 = vmatprep.mubr.f32.mxu0 %v313
        %1126 = vmatmul.mubr.f32.gmra.mrb[0].mxu0 %v312
        %v1127 = vpop.f32.mrb[0].mxu0
        %v1128 = vadd.f32 0.0, %v1127
        %v1129 = vpop.f32.mrb[0].mxu0
        %1130 = vmatprep.mubr.f32.mxu0 %v315
        %1131 = vmatmul.mubr.f32.gmra.mrb[0].mxu0 %v314
        %v1132 = vpop.f32.mrb[0].mxu0
        %v1133 = vadd.f32 0.0, %v1132
        %v1134 = vpop.f32.mrb[0].mxu0
        %1135 = vmatprep.mubr.f32.mxu0 %v317
        %1136 = vmatmul.mubr.f32.gmra.mrb[0].mxu0 %v316
        %v1137 = vpop.f32.mrb[0].mxu0
        %v1138 = vadd.f32 0.0, %v1137
        %v1139 = vpop.f32.mrb[0].mxu0
        %1140 = vdwg.mxu0
        %v1141 = vsub.f32 %v1128, %v318
        %v1142 = vsub.f32 %v1133, %v319
        %v1143 = vsub.f32 %v1138, %v320
        %v1144 = vmul.f32 %v1143, %v1143
        %v1146 = vrot.slane %v1144, 1
        %v1148 = vadd.f32 %v1144, %v1146
        %v1149 = vrot.slane %v1144, 2
        %v1151 = vadd.f32 %v1148, %v1149
        %v1152 = vmax.f32 %v1151, 1e-24
        %v1153 = vrsqrt.pop %v1152
        %v1154 = vmax.f32 %v1141, 0.0
        %v1155 = vmax.f32 %v1142, 0.0
        %v1156 = vlaneseq
        %v1157 = vshrl.u32 %v1156, 7
        %v1158 = vsub.s32 0, %v1157
        %v1159 = vrot.slane %v1153, %v1158
        %v1160 = vmul.f32 %v1154, %v1159
        %v1161 = vmul.f32 %v1155, %v1159
        %v1162 = vmax.f32 %v959, %v1160
        %v1163 = vmax.f32 %v960, %v1161
        %v1164 = vlaneseq
        %v1165 = vshrl.u32 %v1164, 7
        %v1166 = vsub.s32 4, %v1165
        %v1167 = vrot.slane %v310, %v1166
        %vm1168 = vcmp.eq.s32.totalorder %v322, %v1167
        %vm1169 = vcmp.eq.s32.totalorder %v323, %v1167
        %vm1170 = vcmp.eq.s32.totalorder %v324, %v1167
        %vm1171 = vcmp.eq.s32.totalorder %v325, %v1167
        %vm1172 = vcmp.eq.s32.totalorder %v326, %v1167
        %vm1173 = vcmp.eq.s32.totalorder %v327, %v1167
        %vm1174 = vcmp.eq.s32.totalorder %v328, %v1167
        %vm1175 = vcmp.eq.s32.totalorder %v329, %v1167
        %vm1176 = vcmp.eq.s32.totalorder %v330, %v1167
        %vm1177 = vcmp.eq.s32.totalorder %v331, %v1167
        %vm1178 = vcmp.eq.s32.totalorder %v332, %v1167
        %vm1179 = vcmp.eq.s32.totalorder %v333, %v1167
        %vm1180 = vcmp.eq.s32.totalorder %v334, %v1167
        %vm1181 = vcmp.eq.s32.totalorder %v335, %v1167
        %vm1182 = vcmp.eq.s32.totalorder %v336, %v1167
        %vm1183 = vcmp.eq.s32.totalorder %v337, %v1167
        %vm1184 = vcmp.eq.s32.totalorder %v338, %v1167
        %vm1185 = vcmp.eq.s32.totalorder %v339, %v1167
        %vm1186 = vcmp.eq.s32.totalorder %v340, %v1167
        %vm1187 = vcmp.eq.s32.totalorder %v341, %v1167
        %vm1188 = vcmp.eq.s32.totalorder %v342, %v1167
        %vm1189 = vcmp.eq.s32.totalorder %v343, %v1167
        %vm1190 = vcmp.eq.s32.totalorder %v344, %v1167
        %vm1191 = vcmp.eq.s32.totalorder %v345, %v1167
        %vm1192 = vcmp.eq.s32.totalorder %v346, %v1167
        %vm1193 = vcmp.eq.s32.totalorder %v347, %v1167
        %vm1194 = vcmp.eq.s32.totalorder %v348, %v1167
        %vm1195 = vcmp.eq.s32.totalorder %v349, %v1167
        %vm1196 = vcmp.eq.s32.totalorder %v350, %v1167
        %vm1197 = vcmp.eq.s32.totalorder %v351, %v1167
        %vm1198 = vcmp.eq.s32.totalorder %v352, %v1167
        %vm1199 = vcmp.eq.s32.totalorder %v353, %v1167
        %v1200 = vsel %vm1168, 1, 0
        %v1201 = vsel %vm1169, 1, 0
        %v1202 = vsel %vm1170, 1, 0
        %v1203 = vsel %vm1171, 1, 0
        %v1204 = vsel %vm1172, 1, 0
        %v1205 = vsel %vm1173, 1, 0
        %v1206 = vsel %vm1174, 1, 0
        %v1207 = vsel %vm1175, 1, 0
        %v1208 = vsel %vm1176, 1, 0
        %v1209 = vsel %vm1177, 1, 0
        %v1210 = vsel %vm1178, 1, 0
        %v1211 = vsel %vm1179, 1, 0
        %v1212 = vsel %vm1180, 1, 0
        %v1213 = vsel %vm1181, 1, 0
        %v1214 = vsel %vm1182, 1, 0
        %v1215 = vsel %vm1183, 1, 0
        %v1216 = vsel %vm1184, 1, 0
        %v1217 = vsel %vm1185, 1, 0
        %v1218 = vsel %vm1186, 1, 0
        %v1219 = vsel %vm1187, 1, 0
        %v1220 = vsel %vm1188, 1, 0
        %v1221 = vsel %vm1189, 1, 0
        %v1222 = vsel %vm1190, 1, 0
        %v1223 = vsel %vm1191, 1, 0
        %v1224 = vsel %vm1192, 1, 0
        %v1225 = vsel %vm1193, 1, 0
        %v1226 = vsel %vm1194, 1, 0
        %v1227 = vsel %vm1195, 1, 0
        %v1228 = vsel %vm1196, 1, 0
        %v1229 = vsel %vm1197, 1, 0
        %v1230 = vsel %vm1198, 1, 0
        %v1231 = vsel %vm1199, 1, 0
        %v1232 = vcvt.s32.f32 %v1200
        %v1233 = vcvt.s32.f32 %v1201
        %v1234 = vcvt.s32.f32 %v1202
        %v1235 = vcvt.s32.f32 %v1203
        %v1236 = vcvt.s32.f32 %v1204
        %v1237 = vcvt.s32.f32 %v1205
        %v1238 = vcvt.s32.f32 %v1206
        %v1239 = vcvt.s32.f32 %v1207
        %v1240 = vcvt.s32.f32 %v1208
        %v1241 = vcvt.s32.f32 %v1209
        %v1242 = vcvt.s32.f32 %v1210
        %v1243 = vcvt.s32.f32 %v1211
        %v1244 = vcvt.s32.f32 %v1212
        %v1245 = vcvt.s32.f32 %v1213
        %v1246 = vcvt.s32.f32 %v1214
        %v1247 = vcvt.s32.f32 %v1215
        %v1248 = vcvt.s32.f32 %v1216
        %v1249 = vcvt.s32.f32 %v1217
        %v1250 = vcvt.s32.f32 %v1218
        %v1251 = vcvt.s32.f32 %v1219
        %v1252 = vcvt.s32.f32 %v1220
        %v1253 = vcvt.s32.f32 %v1221
        %v1254 = vcvt.s32.f32 %v1222
        %v1255 = vcvt.s32.f32 %v1223
        %v1256 = vcvt.s32.f32 %v1224
        %v1257 = vcvt.s32.f32 %v1225
        %v1258 = vcvt.s32.f32 %v1226
        %v1259 = vcvt.s32.f32 %v1227
        %v1260 = vcvt.s32.f32 %v1228
        %v1261 = vcvt.s32.f32 %v1229
        %v1262 = vcvt.s32.f32 %v1230
        %v1263 = vcvt.s32.f32 %v1231
        %1264 = vmatprep.subr.mxu0 0.0
        %1265 = vmatpush1.msra.mxu0 %v1232
        %1266 = vmatprep.subr.mxu0 0.0
        %1267 = vmatpush1.msra.mxu0 %v1233
        %1268 = vmatprep.subr.mxu0 0.0
        %1269 = vmatpush1.msra.mxu0 %v1234
        %1270 = vmatprep.subr.mxu0 0.0
        %1271 = vmatpush1.msra.mxu0 %v1235
        %1272 = vmatprep.subr.mxu0 0.0
        %1273 = vmatpush1.msra.mxu0 %v1236
        %1274 = vmatprep.subr.mxu0 0.0
        %1275 = vmatpush1.msra.mxu0 %v1237
        %1276 = vmatprep.subr.mxu0 0.0
        %1277 = vmatpush1.msra.mxu0 %v1238
        %1278 = vmatprep.subr.mxu0 0.0
        %1279 = vmatpush1.msra.mxu0 %v1239
        %1280 = vmatprep.subr.mxu0 0.0
        %1281 = vmatpush1.msra.mxu0 %v1240
        %1282 = vmatprep.subr.mxu0 0.0
        %1283 = vmatpush1.msra.mxu0 %v1241
        %1284 = vmatprep.subr.mxu0 0.0
        %1285 = vmatpush1.msra.mxu0 %v1242
        %1286 = vmatprep.subr.mxu0 0.0
        %1287 = vmatpush1.msra.mxu0 %v1243
        %1288 = vmatprep.subr.mxu0 0.0
        %1289 = vmatpush1.msra.mxu0 %v1244
        %1290 = vmatprep.subr.mxu0 0.0
        %1291 = vmatpush1.msra.mxu0 %v1245
        %1292 = vmatprep.subr.mxu0 0.0
        %1293 = vmatpush1.msra.mxu0 %v1246
        %1294 = vmatprep.subr.mxu0 0.0
        %1295 = vmatpush1.msra.mxu0 %v1247
        %1296 = vmatprep.subr.mxu0 0.0
        %1297 = vmatpush1.msra.mxu0 %v1248
        %1298 = vmatprep.subr.mxu0 0.0
        %1299 = vmatpush1.msra.mxu0 %v1249
        %1300 = vmatprep.subr.mxu0 0.0
        %1301 = vmatpush1.msra.mxu0 %v1250
        %1302 = vmatprep.subr.mxu0 0.0
        %1303 = vmatpush1.msra.mxu0 %v1251
        %1304 = vmatprep.subr.mxu0 0.0
        %1305 = vmatpush1.msra.mxu0 %v1252
        %1306 = vmatprep.subr.mxu0 0.0
        %1307 = vmatpush1.msra.mxu0 %v1253
        %1308 = vmatprep.subr.mxu0 0.0
        %1309 = vmatpush1.msra.mxu0 %v1254
        %1310 = vmatprep.subr.mxu0 0.0
        %1311 = vmatpush1.msra.mxu0 %v1255
        %1312 = vmatprep.subr.mxu0 0.0
        %1313 = vmatpush1.msra.mxu0 %v1256
        %1314 = vmatprep.subr.mxu0 0.0
        %1315 = vmatpush1.msra.mxu0 %v1257
        %1316 = vmatprep.subr.mxu0 0.0
        %1317 = vmatpush1.msra.mxu0 %v1258
        %1318 = vmatprep.subr.mxu0 0.0
        %1319 = vmatpush1.msra.mxu0 %v1259
        %1320 = vmatprep.subr.mxu0 0.0
        %1321 = vmatpush1.msra.mxu0 %v1260
        %1322 = vmatprep.subr.mxu0 0.0
        %1323 = vmatpush1.msra.mxu0 %v1261
        %1324 = vmatprep.subr.mxu0 0.0
        %1325 = vmatpush1.msra.mxu0 %v1262
        %1326 = vmatprep.subr.mxu0 0.0
        %1327 = vmatpush1.msra.mxu0 %v1263
        %1328 = vmatprep.mubr.f32.mxu0 %v313
        %1329 = vmatmul.mubr.f32.gmra.mrb[0].mxu0 %v312
        %v1330 = vpop.f32.mrb[0].mxu0
        %v1331 = vadd.f32 0.0, %v1330
        %v1332 = vpop.f32.mrb[0].mxu0
        %1333 = vmatprep.mubr.f32.mxu0 %v315
        %1334 = vmatmul.mubr.f32.gmra.mrb[0].mxu0 %v314
        %v1335 = vpop.f32.mrb[0].mxu0
        %v1336 = vadd.f32 0.0, %v1335
        %v1337 = vpop.f32.mrb[0].mxu0
        %1338 = vmatprep.mubr.f32.mxu0 %v317
        %1339 = vmatmul.mubr.f32.gmra.mrb[0].mxu0 %v316
        %v1340 = vpop.f32.mrb[0].mxu0
        %v1341 = vadd.f32 0.0, %v1340
        %v1342 = vpop.f32.mrb[0].mxu0
        %1343 = vdwg.mxu0
        %v1344 = vsub.f32 %v1331, %v318
        %v1345 = vsub.f32 %v1336, %v319
        %v1346 = vsub.f32 %v1341, %v320
        %v1347 = vmul.f32 %v1346, %v1346
        %v1349 = vrot.slane %v1347, 1
        %v1351 = vadd.f32 %v1347, %v1349
        %v1352 = vrot.slane %v1347, 2
        %v1354 = vadd.f32 %v1351, %v1352
        %v1355 = vmax.f32 %v1354, 1e-24
        %v1356 = vrsqrt.pop %v1355
        %v1357 = vmax.f32 %v1344, 0.0
        %v1358 = vmax.f32 %v1345, 0.0
        %v1359 = vlaneseq
        %v1360 = vshrl.u32 %v1359, 7
        %v1361 = vsub.s32 0, %v1360
        %v1362 = vrot.slane %v1356, %v1361
        %v1363 = vmul.f32 %v1357, %v1362
        %v1364 = vmul.f32 %v1358, %v1362
        %v1365 = vmax.f32 %v1162, %v1363
        %v1366 = vmax.f32 %v1163, %v1364
        %v1367 = vlaneseq
        %v1368 = vshrl.u32 %v1367, 7
        %v1369 = vsub.s32 5, %v1368
        %v1370 = vrot.slane %v310, %v1369
        %vm1371 = vcmp.eq.s32.totalorder %v322, %v1370
        %vm1372 = vcmp.eq.s32.totalorder %v323, %v1370
        %vm1373 = vcmp.eq.s32.totalorder %v324, %v1370
        %vm1374 = vcmp.eq.s32.totalorder %v325, %v1370
        %vm1375 = vcmp.eq.s32.totalorder %v326, %v1370
        %vm1376 = vcmp.eq.s32.totalorder %v327, %v1370
        %vm1377 = vcmp.eq.s32.totalorder %v328, %v1370
        %vm1378 = vcmp.eq.s32.totalorder %v329, %v1370
        %vm1379 = vcmp.eq.s32.totalorder %v330, %v1370
        %vm1380 = vcmp.eq.s32.totalorder %v331, %v1370
        %vm1381 = vcmp.eq.s32.totalorder %v332, %v1370
        %vm1382 = vcmp.eq.s32.totalorder %v333, %v1370
        %vm1383 = vcmp.eq.s32.totalorder %v334, %v1370
        %vm1384 = vcmp.eq.s32.totalorder %v335, %v1370
        %vm1385 = vcmp.eq.s32.totalorder %v336, %v1370
        %vm1386 = vcmp.eq.s32.totalorder %v337, %v1370
        %vm1387 = vcmp.eq.s32.totalorder %v338, %v1370
        %vm1388 = vcmp.eq.s32.totalorder %v339, %v1370
        %vm1389 = vcmp.eq.s32.totalorder %v340, %v1370
        %vm1390 = vcmp.eq.s32.totalorder %v341, %v1370
        %vm1391 = vcmp.eq.s32.totalorder %v342, %v1370
        %vm1392 = vcmp.eq.s32.totalorder %v343, %v1370
        %vm1393 = vcmp.eq.s32.totalorder %v344, %v1370
        %vm1394 = vcmp.eq.s32.totalorder %v345, %v1370
        %vm1395 = vcmp.eq.s32.totalorder %v346, %v1370
        %vm1396 = vcmp.eq.s32.totalorder %v347, %v1370
        %vm1397 = vcmp.eq.s32.totalorder %v348, %v1370
        %vm1398 = vcmp.eq.s32.totalorder %v349, %v1370
        %vm1399 = vcmp.eq.s32.totalorder %v350, %v1370
        %vm1400 = vcmp.eq.s32.totalorder %v351, %v1370
        %vm1401 = vcmp.eq.s32.totalorder %v352, %v1370
        %vm1402 = vcmp.eq.s32.totalorder %v353, %v1370
        %v1403 = vsel %vm1371, 1, 0
        %v1404 = vsel %vm1372, 1, 0
        %v1405 = vsel %vm1373, 1, 0
        %v1406 = vsel %vm1374, 1, 0
        %v1407 = vsel %vm1375, 1, 0
        %v1408 = vsel %vm1376, 1, 0
        %v1409 = vsel %vm1377, 1, 0
        %v1410 = vsel %vm1378, 1, 0
        %v1411 = vsel %vm1379, 1, 0
        %v1412 = vsel %vm1380, 1, 0
        %v1413 = vsel %vm1381, 1, 0
        %v1414 = vsel %vm1382, 1, 0
        %v1415 = vsel %vm1383, 1, 0
        %v1416 = vsel %vm1384, 1, 0
        %v1417 = vsel %vm1385, 1, 0
        %v1418 = vsel %vm1386, 1, 0
        %v1419 = vsel %vm1387, 1, 0
        %v1420 = vsel %vm1388, 1, 0
        %v1421 = vsel %vm1389, 1, 0
        %v1422 = vsel %vm1390, 1, 0
        %v1423 = vsel %vm1391, 1, 0
        %v1424 = vsel %vm1392, 1, 0
        %v1425 = vsel %vm1393, 1, 0
        %v1426 = vsel %vm1394, 1, 0
        %v1427 = vsel %vm1395, 1, 0
        %v1428 = vsel %vm1396, 1, 0
        %v1429 = vsel %vm1397, 1, 0
        %v1430 = vsel %vm1398, 1, 0
        %v1431 = vsel %vm1399, 1, 0
        %v1432 = vsel %vm1400, 1, 0
        %v1433 = vsel %vm1401, 1, 0
        %v1434 = vsel %vm1402, 1, 0
        %v1435 = vcvt.s32.f32 %v1403
        %v1436 = vcvt.s32.f32 %v1404
        %v1437 = vcvt.s32.f32 %v1405
        %v1438 = vcvt.s32.f32 %v1406
        %v1439 = vcvt.s32.f32 %v1407
        %v1440 = vcvt.s32.f32 %v1408
        %v1441 = vcvt.s32.f32 %v1409
        %v1442 = vcvt.s32.f32 %v1410
        %v1443 = vcvt.s32.f32 %v1411
        %v1444 = vcvt.s32.f32 %v1412
        %v1445 = vcvt.s32.f32 %v1413
        %v1446 = vcvt.s32.f32 %v1414
        %v1447 = vcvt.s32.f32 %v1415
        %v1448 = vcvt.s32.f32 %v1416
        %v1449 = vcvt.s32.f32 %v1417
        %v1450 = vcvt.s32.f32 %v1418
        %v1451 = vcvt.s32.f32 %v1419
        %v1452 = vcvt.s32.f32 %v1420
        %v1453 = vcvt.s32.f32 %v1421
        %v1454 = vcvt.s32.f32 %v1422
        %v1455 = vcvt.s32.f32 %v1423
        %v1456 = vcvt.s32.f32 %v1424
        %v1457 = vcvt.s32.f32 %v1425
        %v1458 = vcvt.s32.f32 %v1426
        %v1459 = vcvt.s32.f32 %v1427
        %v1460 = vcvt.s32.f32 %v1428
        %v1461 = vcvt.s32.f32 %v1429
        %v1462 = vcvt.s32.f32 %v1430
        %v1463 = vcvt.s32.f32 %v1431
        %v1464 = vcvt.s32.f32 %v1432
        %v1465 = vcvt.s32.f32 %v1433
        %v1466 = vcvt.s32.f32 %v1434
        %1467 = vmatprep.subr.mxu0 0.0
        %1468 = vmatpush1.msra.mxu0 %v1435
        %1469 = vmatprep.subr.mxu0 0.0
        %1470 = vmatpush1.msra.mxu0 %v1436
        %1471 = vmatprep.subr.mxu0 0.0
        %1472 = vmatpush1.msra.mxu0 %v1437
        %1473 = vmatprep.subr.mxu0 0.0
        %1474 = vmatpush1.msra.mxu0 %v1438
        %1475 = vmatprep.subr.mxu0 0.0
        %1476 = vmatpush1.msra.mxu0 %v1439
        %1477 = vmatprep.subr.mxu0 0.0
        %1478 = vmatpush1.msra.mxu0 %v1440
        %1479 = vmatprep.subr.mxu0 0.0
        %1480 = vmatpush1.msra.mxu0 %v1441
        %1481 = vmatprep.subr.mxu0 0.0
        %1482 = vmatpush1.msra.mxu0 %v1442
        %1483 = vmatprep.subr.mxu0 0.0
        %1484 = vmatpush1.msra.mxu0 %v1443
        %1485 = vmatprep.subr.mxu0 0.0
        %1486 = vmatpush1.msra.mxu0 %v1444
        %1487 = vmatprep.subr.mxu0 0.0
        %1488 = vmatpush1.msra.mxu0 %v1445
        %1489 = vmatprep.subr.mxu0 0.0
        %1490 = vmatpush1.msra.mxu0 %v1446
        %1491 = vmatprep.subr.mxu0 0.0
        %1492 = vmatpush1.msra.mxu0 %v1447
        %1493 = vmatprep.subr.mxu0 0.0
        %1494 = vmatpush1.msra.mxu0 %v1448
        %1495 = vmatprep.subr.mxu0 0.0
        %1496 = vmatpush1.msra.mxu0 %v1449
        %1497 = vmatprep.subr.mxu0 0.0
        %1498 = vmatpush1.msra.mxu0 %v1450
        %1499 = vmatprep.subr.mxu0 0.0
        %1500 = vmatpush1.msra.mxu0 %v1451
        %1501 = vmatprep.subr.mxu0 0.0
        %1502 = vmatpush1.msra.mxu0 %v1452
        %1503 = vmatprep.subr.mxu0 0.0
        %1504 = vmatpush1.msra.mxu0 %v1453
        %1505 = vmatprep.subr.mxu0 0.0
        %1506 = vmatpush1.msra.mxu0 %v1454
        %1507 = vmatprep.subr.mxu0 0.0
        %1508 = vmatpush1.msra.mxu0 %v1455
        %1509 = vmatprep.subr.mxu0 0.0
        %1510 = vmatpush1.msra.mxu0 %v1456
        %1511 = vmatprep.subr.mxu0 0.0
        %1512 = vmatpush1.msra.mxu0 %v1457
        %1513 = vmatprep.subr.mxu0 0.0
        %1514 = vmatpush1.msra.mxu0 %v1458
        %1515 = vmatprep.subr.mxu0 0.0
        %1516 = vmatpush1.msra.mxu0 %v1459
        %1517 = vmatprep.subr.mxu0 0.0
        %1518 = vmatpush1.msra.mxu0 %v1460
        %1519 = vmatprep.subr.mxu0 0.0
        %1520 = vmatpush1.msra.mxu0 %v1461
        %1521 = vmatprep.subr.mxu0 0.0
        %1522 = vmatpush1.msra.mxu0 %v1462
        %1523 = vmatprep.subr.mxu0 0.0
        %1524 = vmatpush1.msra.mxu0 %v1463
        %1525 = vmatprep.subr.mxu0 0.0
        %1526 = vmatpush1.msra.mxu0 %v1464
        %1527 = vmatprep.subr.mxu0 0.0
        %1528 = vmatpush1.msra.mxu0 %v1465
        %1529 = vmatprep.subr.mxu0 0.0
        %1530 = vmatpush1.msra.mxu0 %v1466
        %1531 = vmatprep.mubr.f32.mxu0 %v313
        %1532 = vmatmul.mubr.f32.gmra.mrb[0].mxu0 %v312
        %v1533 = vpop.f32.mrb[0].mxu0
        %v1534 = vadd.f32 0.0, %v1533
        %v1535 = vpop.f32.mrb[0].mxu0
        %1536 = vmatprep.mubr.f32.mxu0 %v315
        %1537 = vmatmul.mubr.f32.gmra.mrb[0].mxu0 %v314
        %v1538 = vpop.f32.mrb[0].mxu0
        %v1539 = vadd.f32 0.0, %v1538
        %v1540 = vpop.f32.mrb[0].mxu0
        %1541 = vmatprep.mubr.f32.mxu0 %v317
        %1542 = vmatmul.mubr.f32.gmra.mrb[0].mxu0 %v316
        %v1543 = vpop.f32.mrb[0].mxu0
        %v1544 = vadd.f32 0.0, %v1543
        %v1545 = vpop.f32.mrb[0].mxu0
        %1546 = vdwg.mxu0
        %v1547 = vsub.f32 %v1534, %v318
        %v1548 = vsub.f32 %v1539, %v319
        %v1549 = vsub.f32 %v1544, %v320
        %v1550 = vmul.f32 %v1549, %v1549
        %v1552 = vrot.slane %v1550, 1
        %v1554 = vadd.f32 %v1550, %v1552
        %v1555 = vrot.slane %v1550, 2
        %v1557 = vadd.f32 %v1554, %v1555
        %v1558 = vmax.f32 %v1557, 1e-24
        %v1559 = vrsqrt.pop %v1558
        %v1560 = vmax.f32 %v1547, 0.0
        %v1561 = vmax.f32 %v1548, 0.0
        %v1562 = vlaneseq
        %v1563 = vshrl.u32 %v1562, 7
        %v1564 = vsub.s32 0, %v1563
        %v1565 = vrot.slane %v1559, %v1564
        %v1566 = vmul.f32 %v1560, %v1565
        %v1567 = vmul.f32 %v1561, %v1565
        %v1568 = vmax.f32 %v1365, %v1566
        %v1569 = vmax.f32 %v1366, %v1567
        %v1570 = vlaneseq
        %v1571 = vshrl.u32 %v1570, 7
        %v1572 = vsub.s32 6, %v1571
        %v1573 = vrot.slane %v310, %v1572
        %vm1574 = vcmp.eq.s32.totalorder %v322, %v1573
        %vm1575 = vcmp.eq.s32.totalorder %v323, %v1573
        %vm1576 = vcmp.eq.s32.totalorder %v324, %v1573
        %vm1577 = vcmp.eq.s32.totalorder %v325, %v1573
        %vm1578 = vcmp.eq.s32.totalorder %v326, %v1573
        %vm1579 = vcmp.eq.s32.totalorder %v327, %v1573
        %vm1580 = vcmp.eq.s32.totalorder %v328, %v1573
        %vm1581 = vcmp.eq.s32.totalorder %v329, %v1573
        %vm1582 = vcmp.eq.s32.totalorder %v330, %v1573
        %vm1583 = vcmp.eq.s32.totalorder %v331, %v1573
        %vm1584 = vcmp.eq.s32.totalorder %v332, %v1573
        %vm1585 = vcmp.eq.s32.totalorder %v333, %v1573
        %vm1586 = vcmp.eq.s32.totalorder %v334, %v1573
        %vm1587 = vcmp.eq.s32.totalorder %v335, %v1573
        %vm1588 = vcmp.eq.s32.totalorder %v336, %v1573
        %vm1589 = vcmp.eq.s32.totalorder %v337, %v1573
        %vm1590 = vcmp.eq.s32.totalorder %v338, %v1573
        %vm1591 = vcmp.eq.s32.totalorder %v339, %v1573
        %vm1592 = vcmp.eq.s32.totalorder %v340, %v1573
        %vm1593 = vcmp.eq.s32.totalorder %v341, %v1573
        %vm1594 = vcmp.eq.s32.totalorder %v342, %v1573
        %vm1595 = vcmp.eq.s32.totalorder %v343, %v1573
        %vm1596 = vcmp.eq.s32.totalorder %v344, %v1573
        %vm1597 = vcmp.eq.s32.totalorder %v345, %v1573
        %vm1598 = vcmp.eq.s32.totalorder %v346, %v1573
        %vm1599 = vcmp.eq.s32.totalorder %v347, %v1573
        %vm1600 = vcmp.eq.s32.totalorder %v348, %v1573
        %vm1601 = vcmp.eq.s32.totalorder %v349, %v1573
        %vm1602 = vcmp.eq.s32.totalorder %v350, %v1573
        %vm1603 = vcmp.eq.s32.totalorder %v351, %v1573
        %vm1604 = vcmp.eq.s32.totalorder %v352, %v1573
        %vm1605 = vcmp.eq.s32.totalorder %v353, %v1573
        %v1606 = vsel %vm1574, 1, 0
        %v1607 = vsel %vm1575, 1, 0
        %v1608 = vsel %vm1576, 1, 0
        %v1609 = vsel %vm1577, 1, 0
        %v1610 = vsel %vm1578, 1, 0
        %v1611 = vsel %vm1579, 1, 0
        %v1612 = vsel %vm1580, 1, 0
        %v1613 = vsel %vm1581, 1, 0
        %v1614 = vsel %vm1582, 1, 0
        %v1615 = vsel %vm1583, 1, 0
        %v1616 = vsel %vm1584, 1, 0
        %v1617 = vsel %vm1585, 1, 0
        %v1618 = vsel %vm1586, 1, 0
        %v1619 = vsel %vm1587, 1, 0
        %v1620 = vsel %vm1588, 1, 0
        %v1621 = vsel %vm1589, 1, 0
        %v1622 = vsel %vm1590, 1, 0
        %v1623 = vsel %vm1591, 1, 0
        %v1624 = vsel %vm1592, 1, 0
        %v1625 = vsel %vm1593, 1, 0
        %v1626 = vsel %vm1594, 1, 0
        %v1627 = vsel %vm1595, 1, 0
        %v1628 = vsel %vm1596, 1, 0
        %v1629 = vsel %vm1597, 1, 0
        %v1630 = vsel %vm1598, 1, 0
        %v1631 = vsel %vm1599, 1, 0
        %v1632 = vsel %vm1600, 1, 0
        %v1633 = vsel %vm1601, 1, 0
        %v1634 = vsel %vm1602, 1, 0
        %v1635 = vsel %vm1603, 1, 0
        %v1636 = vsel %vm1604, 1, 0
        %v1637 = vsel %vm1605, 1, 0
        %v1638 = vcvt.s32.f32 %v1606
        %v1639 = vcvt.s32.f32 %v1607
        %v1640 = vcvt.s32.f32 %v1608
        %v1641 = vcvt.s32.f32 %v1609
        %v1642 = vcvt.s32.f32 %v1610
        %v1643 = vcvt.s32.f32 %v1611
        %v1644 = vcvt.s32.f32 %v1612
        %v1645 = vcvt.s32.f32 %v1613
        %v1646 = vcvt.s32.f32 %v1614
        %v1647 = vcvt.s32.f32 %v1615
        %v1648 = vcvt.s32.f32 %v1616
        %v1649 = vcvt.s32.f32 %v1617
        %v1650 = vcvt.s32.f32 %v1618
        %v1651 = vcvt.s32.f32 %v1619
        %v1652 = vcvt.s32.f32 %v1620
        %v1653 = vcvt.s32.f32 %v1621
        %v1654 = vcvt.s32.f32 %v1622
        %v1655 = vcvt.s32.f32 %v1623
        %v1656 = vcvt.s32.f32 %v1624
        %v1657 = vcvt.s32.f32 %v1625
        %v1658 = vcvt.s32.f32 %v1626
        %v1659 = vcvt.s32.f32 %v1627
        %v1660 = vcvt.s32.f32 %v1628
        %v1661 = vcvt.s32.f32 %v1629
        %v1662 = vcvt.s32.f32 %v1630
        %v1663 = vcvt.s32.f32 %v1631
        %v1664 = vcvt.s32.f32 %v1632
        %v1665 = vcvt.s32.f32 %v1633
        %v1666 = vcvt.s32.f32 %v1634
        %v1667 = vcvt.s32.f32 %v1635
        %v1668 = vcvt.s32.f32 %v1636
        %v1669 = vcvt.s32.f32 %v1637
        %1670 = vmatprep.subr.mxu0 0.0
        %1671 = vmatpush1.msra.mxu0 %v1638
        %1672 = vmatprep.subr.mxu0 0.0
        %1673 = vmatpush1.msra.mxu0 %v1639
        %1674 = vmatprep.subr.mxu0 0.0
        %1675 = vmatpush1.msra.mxu0 %v1640
        %1676 = vmatprep.subr.mxu0 0.0
        %1677 = vmatpush1.msra.mxu0 %v1641
        %1678 = vmatprep.subr.mxu0 0.0
        %1679 = vmatpush1.msra.mxu0 %v1642
        %1680 = vmatprep.subr.mxu0 0.0
        %1681 = vmatpush1.msra.mxu0 %v1643
        %1682 = vmatprep.subr.mxu0 0.0
        %1683 = vmatpush1.msra.mxu0 %v1644
        %1684 = vmatprep.subr.mxu0 0.0
        %1685 = vmatpush1.msra.mxu0 %v1645
        %1686 = vmatprep.subr.mxu0 0.0
        %1687 = vmatpush1.msra.mxu0 %v1646
        %1688 = vmatprep.subr.mxu0 0.0
        %1689 = vmatpush1.msra.mxu0 %v1647
        %1690 = vmatprep.subr.mxu0 0.0
        %1691 = vmatpush1.msra.mxu0 %v1648
        %1692 = vmatprep.subr.mxu0 0.0
        %1693 = vmatpush1.msra.mxu0 %v1649
        %1694 = vmatprep.subr.mxu0 0.0
        %1695 = vmatpush1.msra.mxu0 %v1650
        %1696 = vmatprep.subr.mxu0 0.0
        %1697 = vmatpush1.msra.mxu0 %v1651
        %1698 = vmatprep.subr.mxu0 0.0
        %1699 = vmatpush1.msra.mxu0 %v1652
        %1700 = vmatprep.subr.mxu0 0.0
        %1701 = vmatpush1.msra.mxu0 %v1653
        %1702 = vmatprep.subr.mxu0 0.0
        %1703 = vmatpush1.msra.mxu0 %v1654
        %1704 = vmatprep.subr.mxu0 0.0
        %1705 = vmatpush1.msra.mxu0 %v1655
        %1706 = vmatprep.subr.mxu0 0.0
        %1707 = vmatpush1.msra.mxu0 %v1656
        %1708 = vmatprep.subr.mxu0 0.0
        %1709 = vmatpush1.msra.mxu0 %v1657
        %1710 = vmatprep.subr.mxu0 0.0
        %1711 = vmatpush1.msra.mxu0 %v1658
        %1712 = vmatprep.subr.mxu0 0.0
        %1713 = vmatpush1.msra.mxu0 %v1659
        %1714 = vmatprep.subr.mxu0 0.0
        %1715 = vmatpush1.msra.mxu0 %v1660
        %1716 = vmatprep.subr.mxu0 0.0
        %1717 = vmatpush1.msra.mxu0 %v1661
        %1718 = vmatprep.subr.mxu0 0.0
        %1719 = vmatpush1.msra.mxu0 %v1662
        %1720 = vmatprep.subr.mxu0 0.0
        %1721 = vmatpush1.msra.mxu0 %v1663
        %1722 = vmatprep.subr.mxu0 0.0
        %1723 = vmatpush1.msra.mxu0 %v1664
        %1724 = vmatprep.subr.mxu0 0.0
        %1725 = vmatpush1.msra.mxu0 %v1665
        %1726 = vmatprep.subr.mxu0 0.0
        %1727 = vmatpush1.msra.mxu0 %v1666
        %1728 = vmatprep.subr.mxu0 0.0
        %1729 = vmatpush1.msra.mxu0 %v1667
        %1730 = vmatprep.subr.mxu0 0.0
        %1731 = vmatpush1.msra.mxu0 %v1668
        %1732 = vmatprep.subr.mxu0 0.0
        %1733 = vmatpush1.msra.mxu0 %v1669
        %1734 = vmatprep.mubr.f32.mxu0 %v313
        %1735 = vmatmul.mubr.f32.gmra.mrb[0].mxu0 %v312
        %v1736 = vpop.f32.mrb[0].mxu0
        %v1737 = vadd.f32 0.0, %v1736
        %v1738 = vpop.f32.mrb[0].mxu0
        %1739 = vmatprep.mubr.f32.mxu0 %v315
        %1740 = vmatmul.mubr.f32.gmra.mrb[0].mxu0 %v314
        %v1741 = vpop.f32.mrb[0].mxu0
        %v1742 = vadd.f32 0.0, %v1741
        %v1743 = vpop.f32.mrb[0].mxu0
        %1744 = vmatprep.mubr.f32.mxu0 %v317
        %1745 = vmatmul.mubr.f32.gmra.mrb[0].mxu0 %v316
        %v1746 = vpop.f32.mrb[0].mxu0
        %v1747 = vadd.f32 0.0, %v1746
        %v1748 = vpop.f32.mrb[0].mxu0
        %1749 = vdwg.mxu0
        %v1750 = vsub.f32 %v1737, %v318
        %v1751 = vsub.f32 %v1742, %v319
        %v1752 = vsub.f32 %v1747, %v320
        %v1753 = vmul.f32 %v1752, %v1752
        %v1755 = vrot.slane %v1753, 1
        %v1757 = vadd.f32 %v1753, %v1755
        %v1758 = vrot.slane %v1753, 2
        %v1760 = vadd.f32 %v1757, %v1758
        %v1761 = vmax.f32 %v1760, 1e-24
        %v1762 = vrsqrt.pop %v1761
        %v1763 = vmax.f32 %v1750, 0.0
        %v1764 = vmax.f32 %v1751, 0.0
        %v1765 = vlaneseq
        %v1766 = vshrl.u32 %v1765, 7
        %v1767 = vsub.s32 0, %v1766
        %v1768 = vrot.slane %v1762, %v1767
        %v1769 = vmul.f32 %v1763, %v1768
        %v1770 = vmul.f32 %v1764, %v1768
        %v1771 = vmax.f32 %v1568, %v1769
        %v1772 = vmax.f32 %v1569, %v1770
        %v1773 = vlaneseq
        %v1774 = vshrl.u32 %v1773, 7
        %v1775 = vsub.s32 7, %v1774
        %v1776 = vrot.slane %v310, %v1775
        %vm1777 = vcmp.eq.s32.totalorder %v322, %v1776
        %vm1778 = vcmp.eq.s32.totalorder %v323, %v1776
        %vm1779 = vcmp.eq.s32.totalorder %v324, %v1776
        %vm1780 = vcmp.eq.s32.totalorder %v325, %v1776
        %vm1781 = vcmp.eq.s32.totalorder %v326, %v1776
        %vm1782 = vcmp.eq.s32.totalorder %v327, %v1776
        %vm1783 = vcmp.eq.s32.totalorder %v328, %v1776
        %vm1784 = vcmp.eq.s32.totalorder %v329, %v1776
        %vm1785 = vcmp.eq.s32.totalorder %v330, %v1776
        %vm1786 = vcmp.eq.s32.totalorder %v331, %v1776
        %vm1787 = vcmp.eq.s32.totalorder %v332, %v1776
        %vm1788 = vcmp.eq.s32.totalorder %v333, %v1776
        %vm1789 = vcmp.eq.s32.totalorder %v334, %v1776
        %vm1790 = vcmp.eq.s32.totalorder %v335, %v1776
        %vm1791 = vcmp.eq.s32.totalorder %v336, %v1776
        %vm1792 = vcmp.eq.s32.totalorder %v337, %v1776
        %vm1793 = vcmp.eq.s32.totalorder %v338, %v1776
        %vm1794 = vcmp.eq.s32.totalorder %v339, %v1776
        %vm1795 = vcmp.eq.s32.totalorder %v340, %v1776
        %vm1796 = vcmp.eq.s32.totalorder %v341, %v1776
        %vm1797 = vcmp.eq.s32.totalorder %v342, %v1776
        %vm1798 = vcmp.eq.s32.totalorder %v343, %v1776
        %vm1799 = vcmp.eq.s32.totalorder %v344, %v1776
        %vm1800 = vcmp.eq.s32.totalorder %v345, %v1776
        %vm1801 = vcmp.eq.s32.totalorder %v346, %v1776
        %vm1802 = vcmp.eq.s32.totalorder %v347, %v1776
        %vm1803 = vcmp.eq.s32.totalorder %v348, %v1776
        %vm1804 = vcmp.eq.s32.totalorder %v349, %v1776
        %vm1805 = vcmp.eq.s32.totalorder %v350, %v1776
        %vm1806 = vcmp.eq.s32.totalorder %v351, %v1776
        %vm1807 = vcmp.eq.s32.totalorder %v352, %v1776
        %vm1808 = vcmp.eq.s32.totalorder %v353, %v1776
        %v1809 = vsel %vm1777, 1, 0
        %v1810 = vsel %vm1778, 1, 0
        %v1811 = vsel %vm1779, 1, 0
        %v1812 = vsel %vm1780, 1, 0
        %v1813 = vsel %vm1781, 1, 0
        %v1814 = vsel %vm1782, 1, 0
        %v1815 = vsel %vm1783, 1, 0
        %v1816 = vsel %vm1784, 1, 0
        %v1817 = vsel %vm1785, 1, 0
        %v1818 = vsel %vm1786, 1, 0
        %v1819 = vsel %vm1787, 1, 0
        %v1820 = vsel %vm1788, 1, 0
        %v1821 = vsel %vm1789, 1, 0
        %v1822 = vsel %vm1790, 1, 0
        %v1823 = vsel %vm1791, 1, 0
        %v1824 = vsel %vm1792, 1, 0
        %v1825 = vsel %vm1793, 1, 0
        %v1826 = vsel %vm1794, 1, 0
        %v1827 = vsel %vm1795, 1, 0
        %v1828 = vsel %vm1796, 1, 0
        %v1829 = vsel %vm1797, 1, 0
        %v1830 = vsel %vm1798, 1, 0
        %v1831 = vsel %vm1799, 1, 0
        %v1832 = vsel %vm1800, 1, 0
        %v1833 = vsel %vm1801, 1, 0
        %v1834 = vsel %vm1802, 1, 0
        %v1835 = vsel %vm1803, 1, 0
        %v1836 = vsel %vm1804, 1, 0
        %v1837 = vsel %vm1805, 1, 0
        %v1838 = vsel %vm1806, 1, 0
        %v1839 = vsel %vm1807, 1, 0
        %v1840 = vsel %vm1808, 1, 0
        %v1841 = vcvt.s32.f32 %v1809
        %v1842 = vcvt.s32.f32 %v1810
        %v1843 = vcvt.s32.f32 %v1811
        %v1844 = vcvt.s32.f32 %v1812
        %v1845 = vcvt.s32.f32 %v1813
        %v1846 = vcvt.s32.f32 %v1814
        %v1847 = vcvt.s32.f32 %v1815
        %v1848 = vcvt.s32.f32 %v1816
        %v1849 = vcvt.s32.f32 %v1817
        %v1850 = vcvt.s32.f32 %v1818
        %v1851 = vcvt.s32.f32 %v1819
        %v1852 = vcvt.s32.f32 %v1820
        %v1853 = vcvt.s32.f32 %v1821
        %v1854 = vcvt.s32.f32 %v1822
        %v1855 = vcvt.s32.f32 %v1823
        %v1856 = vcvt.s32.f32 %v1824
        %v1857 = vcvt.s32.f32 %v1825
        %v1858 = vcvt.s32.f32 %v1826
        %v1859 = vcvt.s32.f32 %v1827
        %v1860 = vcvt.s32.f32 %v1828
        %v1861 = vcvt.s32.f32 %v1829
        %v1862 = vcvt.s32.f32 %v1830
        %v1863 = vcvt.s32.f32 %v1831
        %v1864 = vcvt.s32.f32 %v1832
        %v1865 = vcvt.s32.f32 %v1833
        %v1866 = vcvt.s32.f32 %v1834
        %v1867 = vcvt.s32.f32 %v1835
        %v1868 = vcvt.s32.f32 %v1836
        %v1869 = vcvt.s32.f32 %v1837
        %v1870 = vcvt.s32.f32 %v1838
        %v1871 = vcvt.s32.f32 %v1839
        %v1872 = vcvt.s32.f32 %v1840
        %1873 = vmatprep.subr.mxu0 0.0
        %1874 = vmatpush1.msra.mxu0 %v1841
        %1875 = vmatprep.subr.mxu0 0.0
        %1876 = vmatpush1.msra.mxu0 %v1842
        %1877 = vmatprep.subr.mxu0 0.0
        %1878 = vmatpush1.msra.mxu0 %v1843
        %1879 = vmatprep.subr.mxu0 0.0
        %1880 = vmatpush1.msra.mxu0 %v1844
        %1881 = vmatprep.subr.mxu0 0.0
        %1882 = vmatpush1.msra.mxu0 %v1845
        %1883 = vmatprep.subr.mxu0 0.0
        %1884 = vmatpush1.msra.mxu0 %v1846
        %1885 = vmatprep.subr.mxu0 0.0
        %1886 = vmatpush1.msra.mxu0 %v1847
        %1887 = vmatprep.subr.mxu0 0.0
        %1888 = vmatpush1.msra.mxu0 %v1848
        %1889 = vmatprep.subr.mxu0 0.0
        %1890 = vmatpush1.msra.mxu0 %v1849
        %1891 = vmatprep.subr.mxu0 0.0
        %1892 = vmatpush1.msra.mxu0 %v1850
        %1893 = vmatprep.subr.mxu0 0.0
        %1894 = vmatpush1.msra.mxu0 %v1851
        %1895 = vmatprep.subr.mxu0 0.0
        %1896 = vmatpush1.msra.mxu0 %v1852
        %1897 = vmatprep.subr.mxu0 0.0
        %1898 = vmatpush1.msra.mxu0 %v1853
        %1899 = vmatprep.subr.mxu0 0.0
        %1900 = vmatpush1.msra.mxu0 %v1854
        %1901 = vmatprep.subr.mxu0 0.0
        %1902 = vmatpush1.msra.mxu0 %v1855
        %1903 = vmatprep.subr.mxu0 0.0
        %1904 = vmatpush1.msra.mxu0 %v1856
        %1905 = vmatprep.subr.mxu0 0.0
        %1906 = vmatpush1.msra.mxu0 %v1857
        %1907 = vmatprep.subr.mxu0 0.0
        %1908 = vmatpush1.msra.mxu0 %v1858
        %1909 = vmatprep.subr.mxu0 0.0
        %1910 = vmatpush1.msra.mxu0 %v1859
        %1911 = vmatprep.subr.mxu0 0.0
        %1912 = vmatpush1.msra.mxu0 %v1860
        %1913 = vmatprep.subr.mxu0 0.0
        %1914 = vmatpush1.msra.mxu0 %v1861
        %1915 = vmatprep.subr.mxu0 0.0
        %1916 = vmatpush1.msra.mxu0 %v1862
        %1917 = vmatprep.subr.mxu0 0.0
        %1918 = vmatpush1.msra.mxu0 %v1863
        %1919 = vmatprep.subr.mxu0 0.0
        %1920 = vmatpush1.msra.mxu0 %v1864
        %1921 = vmatprep.subr.mxu0 0.0
        %1922 = vmatpush1.msra.mxu0 %v1865
        %1923 = vmatprep.subr.mxu0 0.0
        %1924 = vmatpush1.msra.mxu0 %v1866
        %1925 = vmatprep.subr.mxu0 0.0
        %1926 = vmatpush1.msra.mxu0 %v1867
        %1927 = vmatprep.subr.mxu0 0.0
        %1928 = vmatpush1.msra.mxu0 %v1868
        %1929 = vmatprep.subr.mxu0 0.0
        %1930 = vmatpush1.msra.mxu0 %v1869
        %1931 = vmatprep.subr.mxu0 0.0
        %1932 = vmatpush1.msra.mxu0 %v1870
        %1933 = vmatprep.subr.mxu0 0.0
        %1934 = vmatpush1.msra.mxu0 %v1871
        %1935 = vmatprep.subr.mxu0 0.0
        %1936 = vmatpush1.msra.mxu0 %v1872
        %1937 = vmatprep.mubr.f32.mxu0 %v313
        %1938 = vmatmul.mubr.f32.gmra.mrb[0].mxu0 %v312
        %v1939 = vpop.f32.mrb[0].mxu0
        %v1940 = vadd.f32 0.0, %v1939
        %v1941 = vpop.f32.mrb[0].mxu0
        %1942 = vmatprep.mubr.f32.mxu0 %v315
        %1943 = vmatmul.mubr.f32.gmra.mrb[0].mxu0 %v314
        %v1944 = vpop.f32.mrb[0].mxu0
        %v1945 = vadd.f32 0.0, %v1944
        %v1946 = vpop.f32.mrb[0].mxu0
        %1947 = vmatprep.mubr.f32.mxu0 %v317
        %1948 = vmatmul.mubr.f32.gmra.mrb[0].mxu0 %v316
        %v1949 = vpop.f32.mrb[0].mxu0
        %v1950 = vadd.f32 0.0, %v1949
        %v1951 = vpop.f32.mrb[0].mxu0
        %1952 = vdwg.mxu0
        %v1953 = vsub.f32 %v1940, %v318
        %v1954 = vsub.f32 %v1945, %v319
        %v1955 = vsub.f32 %v1950, %v320
        %v1956 = vmul.f32 %v1955, %v1955
        %v1958 = vrot.slane %v1956, 1
        %v1960 = vadd.f32 %v1956, %v1958
        %v1961 = vrot.slane %v1956, 2
        %v1963 = vadd.f32 %v1960, %v1961
        %v1964 = vmax.f32 %v1963, 1e-24
        %v1965 = vrsqrt.pop %v1964
        %v1966 = vmax.f32 %v1953, 0.0
        %v1967 = vmax.f32 %v1954, 0.0
        %v1968 = vlaneseq
        %v1969 = vshrl.u32 %v1968, 7
        %v1970 = vsub.s32 0, %v1969
        %v1971 = vrot.slane %v1965, %v1970
        %v1972 = vmul.f32 %v1966, %v1971
        %v1973 = vmul.f32 %v1967, %v1971
        %v1974 = vmax.f32 %v1771, %v1972
        %v1975 = vmax.f32 %v1772, %v1973
        %v1976 = vlaneseq
        %v1977 = vshrl.u32 %v1976, 7
        %v1978 = vsub.s32 0, %v1977
        %v1979 = vrot.slane %v311, %v1978
        %vm1980 = vcmp.eq.s32.totalorder %v322, %v1979
        %vm1981 = vcmp.eq.s32.totalorder %v323, %v1979
        %vm1982 = vcmp.eq.s32.totalorder %v324, %v1979
        %vm1983 = vcmp.eq.s32.totalorder %v325, %v1979
        %vm1984 = vcmp.eq.s32.totalorder %v326, %v1979
        %vm1985 = vcmp.eq.s32.totalorder %v327, %v1979
        %vm1986 = vcmp.eq.s32.totalorder %v328, %v1979
        %vm1987 = vcmp.eq.s32.totalorder %v329, %v1979
        %vm1988 = vcmp.eq.s32.totalorder %v330, %v1979
        %vm1989 = vcmp.eq.s32.totalorder %v331, %v1979
        %vm1990 = vcmp.eq.s32.totalorder %v332, %v1979
        %vm1991 = vcmp.eq.s32.totalorder %v333, %v1979
        %vm1992 = vcmp.eq.s32.totalorder %v334, %v1979
        %vm1993 = vcmp.eq.s32.totalorder %v335, %v1979
        %vm1994 = vcmp.eq.s32.totalorder %v336, %v1979
        %vm1995 = vcmp.eq.s32.totalorder %v337, %v1979
        %vm1996 = vcmp.eq.s32.totalorder %v338, %v1979
        %vm1997 = vcmp.eq.s32.totalorder %v339, %v1979
        %vm1998 = vcmp.eq.s32.totalorder %v340, %v1979
        %vm1999 = vcmp.eq.s32.totalorder %v341, %v1979
        %vm2000 = vcmp.eq.s32.totalorder %v342, %v1979
        %vm2001 = vcmp.eq.s32.totalorder %v343, %v1979
        %vm2002 = vcmp.eq.s32.totalorder %v344, %v1979
        %vm2003 = vcmp.eq.s32.totalorder %v345, %v1979
        %vm2004 = vcmp.eq.s32.totalorder %v346, %v1979
        %vm2005 = vcmp.eq.s32.totalorder %v347, %v1979
        %vm2006 = vcmp.eq.s32.totalorder %v348, %v1979
        %vm2007 = vcmp.eq.s32.totalorder %v349, %v1979
        %vm2008 = vcmp.eq.s32.totalorder %v350, %v1979
        %vm2009 = vcmp.eq.s32.totalorder %v351, %v1979
        %vm2010 = vcmp.eq.s32.totalorder %v352, %v1979
        %vm2011 = vcmp.eq.s32.totalorder %v353, %v1979
        %v2012 = vsel %vm1980, 1, 0
        %v2013 = vsel %vm1981, 1, 0
        %v2014 = vsel %vm1982, 1, 0
        %v2015 = vsel %vm1983, 1, 0
        %v2016 = vsel %vm1984, 1, 0
        %v2017 = vsel %vm1985, 1, 0
        %v2018 = vsel %vm1986, 1, 0
        %v2019 = vsel %vm1987, 1, 0
        %v2020 = vsel %vm1988, 1, 0
        %v2021 = vsel %vm1989, 1, 0
        %v2022 = vsel %vm1990, 1, 0
        %v2023 = vsel %vm1991, 1, 0
        %v2024 = vsel %vm1992, 1, 0
        %v2025 = vsel %vm1993, 1, 0
        %v2026 = vsel %vm1994, 1, 0
        %v2027 = vsel %vm1995, 1, 0
        %v2028 = vsel %vm1996, 1, 0
        %v2029 = vsel %vm1997, 1, 0
        %v2030 = vsel %vm1998, 1, 0
        %v2031 = vsel %vm1999, 1, 0
        %v2032 = vsel %vm2000, 1, 0
        %v2033 = vsel %vm2001, 1, 0
        %v2034 = vsel %vm2002, 1, 0
        %v2035 = vsel %vm2003, 1, 0
        %v2036 = vsel %vm2004, 1, 0
        %v2037 = vsel %vm2005, 1, 0
        %v2038 = vsel %vm2006, 1, 0
        %v2039 = vsel %vm2007, 1, 0
        %v2040 = vsel %vm2008, 1, 0
        %v2041 = vsel %vm2009, 1, 0
        %v2042 = vsel %vm2010, 1, 0
        %v2043 = vsel %vm2011, 1, 0
        %v2044 = vcvt.s32.f32 %v2012
        %v2045 = vcvt.s32.f32 %v2013
        %v2046 = vcvt.s32.f32 %v2014
        %v2047 = vcvt.s32.f32 %v2015
        %v2048 = vcvt.s32.f32 %v2016
        %v2049 = vcvt.s32.f32 %v2017
        %v2050 = vcvt.s32.f32 %v2018
        %v2051 = vcvt.s32.f32 %v2019
        %v2052 = vcvt.s32.f32 %v2020
        %v2053 = vcvt.s32.f32 %v2021
        %v2054 = vcvt.s32.f32 %v2022
        %v2055 = vcvt.s32.f32 %v2023
        %v2056 = vcvt.s32.f32 %v2024
        %v2057 = vcvt.s32.f32 %v2025
        %v2058 = vcvt.s32.f32 %v2026
        %v2059 = vcvt.s32.f32 %v2027
        %v2060 = vcvt.s32.f32 %v2028
        %v2061 = vcvt.s32.f32 %v2029
        %v2062 = vcvt.s32.f32 %v2030
        %v2063 = vcvt.s32.f32 %v2031
        %v2064 = vcvt.s32.f32 %v2032
        %v2065 = vcvt.s32.f32 %v2033
        %v2066 = vcvt.s32.f32 %v2034
        %v2067 = vcvt.s32.f32 %v2035
        %v2068 = vcvt.s32.f32 %v2036
        %v2069 = vcvt.s32.f32 %v2037
        %v2070 = vcvt.s32.f32 %v2038
        %v2071 = vcvt.s32.f32 %v2039
        %v2072 = vcvt.s32.f32 %v2040
        %v2073 = vcvt.s32.f32 %v2041
        %v2074 = vcvt.s32.f32 %v2042
        %v2075 = vcvt.s32.f32 %v2043
        %2076 = vmatprep.subr.mxu0 0.0
        %2077 = vmatpush1.msra.mxu0 %v2044
        %2078 = vmatprep.subr.mxu0 0.0
        %2079 = vmatpush1.msra.mxu0 %v2045
        %2080 = vmatprep.subr.mxu0 0.0
        %2081 = vmatpush1.msra.mxu0 %v2046
        %2082 = vmatprep.subr.mxu0 0.0
        %2083 = vmatpush1.msra.mxu0 %v2047
        %2084 = vmatprep.subr.mxu0 0.0
        %2085 = vmatpush1.msra.mxu0 %v2048
        %2086 = vmatprep.subr.mxu0 0.0
        %2087 = vmatpush1.msra.mxu0 %v2049
        %2088 = vmatprep.subr.mxu0 0.0
        %2089 = vmatpush1.msra.mxu0 %v2050
        %2090 = vmatprep.subr.mxu0 0.0
        %2091 = vmatpush1.msra.mxu0 %v2051
        %2092 = vmatprep.subr.mxu0 0.0
        %2093 = vmatpush1.msra.mxu0 %v2052
        %2094 = vmatprep.subr.mxu0 0.0
        %2095 = vmatpush1.msra.mxu0 %v2053
        %2096 = vmatprep.subr.mxu0 0.0
        %2097 = vmatpush1.msra.mxu0 %v2054
        %2098 = vmatprep.subr.mxu0 0.0
        %2099 = vmatpush1.msra.mxu0 %v2055
        %2100 = vmatprep.subr.mxu0 0.0
        %2101 = vmatpush1.msra.mxu0 %v2056
        %2102 = vmatprep.subr.mxu0 0.0
        %2103 = vmatpush1.msra.mxu0 %v2057
        %2104 = vmatprep.subr.mxu0 0.0
        %2105 = vmatpush1.msra.mxu0 %v2058
        %2106 = vmatprep.subr.mxu0 0.0
        %2107 = vmatpush1.msra.mxu0 %v2059
        %2108 = vmatprep.subr.mxu0 0.0
        %2109 = vmatpush1.msra.mxu0 %v2060
        %2110 = vmatprep.subr.mxu0 0.0
        %2111 = vmatpush1.msra.mxu0 %v2061
        %2112 = vmatprep.subr.mxu0 0.0
        %2113 = vmatpush1.msra.mxu0 %v2062
        %2114 = vmatprep.subr.mxu0 0.0
        %2115 = vmatpush1.msra.mxu0 %v2063
        %2116 = vmatprep.subr.mxu0 0.0
        %2117 = vmatpush1.msra.mxu0 %v2064
        %2118 = vmatprep.subr.mxu0 0.0
        %2119 = vmatpush1.msra.mxu0 %v2065
        %2120 = vmatprep.subr.mxu0 0.0
        %2121 = vmatpush1.msra.mxu0 %v2066
        %2122 = vmatprep.subr.mxu0 0.0
        %2123 = vmatpush1.msra.mxu0 %v2067
        %2124 = vmatprep.subr.mxu0 0.0
        %2125 = vmatpush1.msra.mxu0 %v2068
        %2126 = vmatprep.subr.mxu0 0.0
        %2127 = vmatpush1.msra.mxu0 %v2069
        %2128 = vmatprep.subr.mxu0 0.0
        %2129 = vmatpush1.msra.mxu0 %v2070
        %2130 = vmatprep.subr.mxu0 0.0
        %2131 = vmatpush1.msra.mxu0 %v2071
        %2132 = vmatprep.subr.mxu0 0.0
        %2133 = vmatpush1.msra.mxu0 %v2072
        %2134 = vmatprep.subr.mxu0 0.0
        %2135 = vmatpush1.msra.mxu0 %v2073
        %2136 = vmatprep.subr.mxu0 0.0
        %2137 = vmatpush1.msra.mxu0 %v2074
        %2138 = vmatprep.subr.mxu0 0.0
        %2139 = vmatpush1.msra.mxu0 %v2075
        %2140 = vmatprep.mubr.f32.mxu0 %v313
        %2141 = vmatmul.mubr.f32.gmra.mrb[0].mxu0 %v312
        %v2142 = vpop.f32.mrb[0].mxu0
        %v2143 = vadd.f32 0.0, %v2142
        %v2144 = vpop.f32.mrb[0].mxu0
        %2145 = vmatprep.mubr.f32.mxu0 %v315
        %2146 = vmatmul.mubr.f32.gmra.mrb[0].mxu0 %v314
        %v2147 = vpop.f32.mrb[0].mxu0
        %v2148 = vadd.f32 0.0, %v2147
        %v2149 = vpop.f32.mrb[0].mxu0
        %2150 = vmatprep.mubr.f32.mxu0 %v317
        %2151 = vmatmul.mubr.f32.gmra.mrb[0].mxu0 %v316
        %v2152 = vpop.f32.mrb[0].mxu0
        %v2153 = vadd.f32 0.0, %v2152
        %v2154 = vpop.f32.mrb[0].mxu0
        %2155 = vdwg.mxu0
        %v2156 = vsub.f32 %v2143, %v318
        %v2157 = vsub.f32 %v2148, %v319
        %v2158 = vsub.f32 %v2153, %v320
        %v2159 = vmul.f32 %v2158, %v2158
        %v2161 = vrot.slane %v2159, 1
        %v2163 = vadd.f32 %v2159, %v2161
        %v2164 = vrot.slane %v2159, 2
        %v2166 = vadd.f32 %v2163, %v2164
        %v2167 = vmax.f32 %v2166, 1e-24
        %v2168 = vrsqrt.pop %v2167
        %v2169 = vmax.f32 %v2156, 0.0
        %v2170 = vmax.f32 %v2157, 0.0
        %v2171 = vlaneseq
        %v2172 = vshrl.u32 %v2171, 7
        %v2173 = vsub.s32 0, %v2172
        %v2174 = vrot.slane %v2168, %v2173
        %v2175 = vmul.f32 %v2169, %v2174
        %v2176 = vmul.f32 %v2170, %v2174
        %v2177 = vmax.f32 %v1974, %v2175
        %v2178 = vmax.f32 %v1975, %v2176
        %v2179 = vlaneseq
        %v2180 = vshrl.u32 %v2179, 7
        %v2181 = vsub.s32 1, %v2180
        %v2182 = vrot.slane %v311, %v2181
        %vm2183 = vcmp.eq.s32.totalorder %v322, %v2182
        %vm2184 = vcmp.eq.s32.totalorder %v323, %v2182
        %vm2185 = vcmp.eq.s32.totalorder %v324, %v2182
        %vm2186 = vcmp.eq.s32.totalorder %v325, %v2182
        %vm2187 = vcmp.eq.s32.totalorder %v326, %v2182
        %vm2188 = vcmp.eq.s32.totalorder %v327, %v2182
        %vm2189 = vcmp.eq.s32.totalorder %v328, %v2182
        %vm2190 = vcmp.eq.s32.totalorder %v329, %v2182
        %vm2191 = vcmp.eq.s32.totalorder %v330, %v2182
        %vm2192 = vcmp.eq.s32.totalorder %v331, %v2182
        %vm2193 = vcmp.eq.s32.totalorder %v332, %v2182
        %vm2194 = vcmp.eq.s32.totalorder %v333, %v2182
        %vm2195 = vcmp.eq.s32.totalorder %v334, %v2182
        %vm2196 = vcmp.eq.s32.totalorder %v335, %v2182
        %vm2197 = vcmp.eq.s32.totalorder %v336, %v2182
        %vm2198 = vcmp.eq.s32.totalorder %v337, %v2182
        %vm2199 = vcmp.eq.s32.totalorder %v338, %v2182
        %vm2200 = vcmp.eq.s32.totalorder %v339, %v2182
        %vm2201 = vcmp.eq.s32.totalorder %v340, %v2182
        %vm2202 = vcmp.eq.s32.totalorder %v341, %v2182
        %vm2203 = vcmp.eq.s32.totalorder %v342, %v2182
        %vm2204 = vcmp.eq.s32.totalorder %v343, %v2182
        %vm2205 = vcmp.eq.s32.totalorder %v344, %v2182
        %vm2206 = vcmp.eq.s32.totalorder %v345, %v2182
        %vm2207 = vcmp.eq.s32.totalorder %v346, %v2182
        %vm2208 = vcmp.eq.s32.totalorder %v347, %v2182
        %vm2209 = vcmp.eq.s32.totalorder %v348, %v2182
        %vm2210 = vcmp.eq.s32.totalorder %v349, %v2182
        %vm2211 = vcmp.eq.s32.totalorder %v350, %v2182
        %vm2212 = vcmp.eq.s32.totalorder %v351, %v2182
        %vm2213 = vcmp.eq.s32.totalorder %v352, %v2182
        %vm2214 = vcmp.eq.s32.totalorder %v353, %v2182
        %v2215 = vsel %vm2183, 1, 0
        %v2216 = vsel %vm2184, 1, 0
        %v2217 = vsel %vm2185, 1, 0
        %v2218 = vsel %vm2186, 1, 0
        %v2219 = vsel %vm2187, 1, 0
        %v2220 = vsel %vm2188, 1, 0
        %v2221 = vsel %vm2189, 1, 0
        %v2222 = vsel %vm2190, 1, 0
        %v2223 = vsel %vm2191, 1, 0
        %v2224 = vsel %vm2192, 1, 0
        %v2225 = vsel %vm2193, 1, 0
        %v2226 = vsel %vm2194, 1, 0
        %v2227 = vsel %vm2195, 1, 0
        %v2228 = vsel %vm2196, 1, 0
        %v2229 = vsel %vm2197, 1, 0
        %v2230 = vsel %vm2198, 1, 0
        %v2231 = vsel %vm2199, 1, 0
        %v2232 = vsel %vm2200, 1, 0
        %v2233 = vsel %vm2201, 1, 0
        %v2234 = vsel %vm2202, 1, 0
        %v2235 = vsel %vm2203, 1, 0
        %v2236 = vsel %vm2204, 1, 0
        %v2237 = vsel %vm2205, 1, 0
        %v2238 = vsel %vm2206, 1, 0
        %v2239 = vsel %vm2207, 1, 0
        %v2240 = vsel %vm2208, 1, 0
        %v2241 = vsel %vm2209, 1, 0
        %v2242 = vsel %vm2210, 1, 0
        %v2243 = vsel %vm2211, 1, 0
        %v2244 = vsel %vm2212, 1, 0
        %v2245 = vsel %vm2213, 1, 0
        %v2246 = vsel %vm2214, 1, 0
        %v2247 = vcvt.s32.f32 %v2215
        %v2248 = vcvt.s32.f32 %v2216
        %v2249 = vcvt.s32.f32 %v2217
        %v2250 = vcvt.s32.f32 %v2218
        %v2251 = vcvt.s32.f32 %v2219
        %v2252 = vcvt.s32.f32 %v2220
        %v2253 = vcvt.s32.f32 %v2221
        %v2254 = vcvt.s32.f32 %v2222
        %v2255 = vcvt.s32.f32 %v2223
        %v2256 = vcvt.s32.f32 %v2224
        %v2257 = vcvt.s32.f32 %v2225
        %v2258 = vcvt.s32.f32 %v2226
        %v2259 = vcvt.s32.f32 %v2227
        %v2260 = vcvt.s32.f32 %v2228
        %v2261 = vcvt.s32.f32 %v2229
        %v2262 = vcvt.s32.f32 %v2230
        %v2263 = vcvt.s32.f32 %v2231
        %v2264 = vcvt.s32.f32 %v2232
        %v2265 = vcvt.s32.f32 %v2233
        %v2266 = vcvt.s32.f32 %v2234
        %v2267 = vcvt.s32.f32 %v2235
        %v2268 = vcvt.s32.f32 %v2236
        %v2269 = vcvt.s32.f32 %v2237
        %v2270 = vcvt.s32.f32 %v2238
        %v2271 = vcvt.s32.f32 %v2239
        %v2272 = vcvt.s32.f32 %v2240
        %v2273 = vcvt.s32.f32 %v2241
        %v2274 = vcvt.s32.f32 %v2242
        %v2275 = vcvt.s32.f32 %v2243
        %v2276 = vcvt.s32.f32 %v2244
        %v2277 = vcvt.s32.f32 %v2245
        %v2278 = vcvt.s32.f32 %v2246
        %2279 = vmatprep.subr.mxu0 0.0
        %2280 = vmatpush1.msra.mxu0 %v2247
        %2281 = vmatprep.subr.mxu0 0.0
        %2282 = vmatpush1.msra.mxu0 %v2248
        %2283 = vmatprep.subr.mxu0 0.0
        %2284 = vmatpush1.msra.mxu0 %v2249
        %2285 = vmatprep.subr.mxu0 0.0
        %2286 = vmatpush1.msra.mxu0 %v2250
        %2287 = vmatprep.subr.mxu0 0.0
        %2288 = vmatpush1.msra.mxu0 %v2251
        %2289 = vmatprep.subr.mxu0 0.0
        %2290 = vmatpush1.msra.mxu0 %v2252
        %2291 = vmatprep.subr.mxu0 0.0
        %2292 = vmatpush1.msra.mxu0 %v2253
        %2293 = vmatprep.subr.mxu0 0.0
        %2294 = vmatpush1.msra.mxu0 %v2254
        %2295 = vmatprep.subr.mxu0 0.0
        %2296 = vmatpush1.msra.mxu0 %v2255
        %2297 = vmatprep.subr.mxu0 0.0
        %2298 = vmatpush1.msra.mxu0 %v2256
        %2299 = vmatprep.subr.mxu0 0.0
        %2300 = vmatpush1.msra.mxu0 %v2257
        %2301 = vmatprep.subr.mxu0 0.0
        %2302 = vmatpush1.msra.mxu0 %v2258
        %2303 = vmatprep.subr.mxu0 0.0
        %2304 = vmatpush1.msra.mxu0 %v2259
        %2305 = vmatprep.subr.mxu0 0.0
        %2306 = vmatpush1.msra.mxu0 %v2260
        %2307 = vmatprep.subr.mxu0 0.0
        %2308 = vmatpush1.msra.mxu0 %v2261
        %2309 = vmatprep.subr.mxu0 0.0
        %2310 = vmatpush1.msra.mxu0 %v2262
        %2311 = vmatprep.subr.mxu0 0.0
        %2312 = vmatpush1.msra.mxu0 %v2263
        %2313 = vmatprep.subr.mxu0 0.0
        %2314 = vmatpush1.msra.mxu0 %v2264
        %2315 = vmatprep.subr.mxu0 0.0
        %2316 = vmatpush1.msra.mxu0 %v2265
        %2317 = vmatprep.subr.mxu0 0.0
        %2318 = vmatpush1.msra.mxu0 %v2266
        %2319 = vmatprep.subr.mxu0 0.0
        %2320 = vmatpush1.msra.mxu0 %v2267
        %2321 = vmatprep.subr.mxu0 0.0
        %2322 = vmatpush1.msra.mxu0 %v2268
        %2323 = vmatprep.subr.mxu0 0.0
        %2324 = vmatpush1.msra.mxu0 %v2269
        %2325 = vmatprep.subr.mxu0 0.0
        %2326 = vmatpush1.msra.mxu0 %v2270
        %2327 = vmatprep.subr.mxu0 0.0
        %2328 = vmatpush1.msra.mxu0 %v2271
        %2329 = vmatprep.subr.mxu0 0.0
        %2330 = vmatpush1.msra.mxu0 %v2272
        %2331 = vmatprep.subr.mxu0 0.0
        %2332 = vmatpush1.msra.mxu0 %v2273
        %2333 = vmatprep.subr.mxu0 0.0
        %2334 = vmatpush1.msra.mxu0 %v2274
        %2335 = vmatprep.subr.mxu0 0.0
        %2336 = vmatpush1.msra.mxu0 %v2275
        %2337 = vmatprep.subr.mxu0 0.0
        %2338 = vmatpush1.msra.mxu0 %v2276
        %2339 = vmatprep.subr.mxu0 0.0
        %2340 = vmatpush1.msra.mxu0 %v2277
        %2341 = vmatprep.subr.mxu0 0.0
        %2342 = vmatpush1.msra.mxu0 %v2278
        %2343 = vmatprep.mubr.f32.mxu0 %v313
        %2344 = vmatmul.mubr.f32.gmra.mrb[0].mxu0 %v312
        %v2345 = vpop.f32.mrb[0].mxu0
        %v2346 = vadd.f32 0.0, %v2345
        %v2347 = vpop.f32.mrb[0].mxu0
        %2348 = vmatprep.mubr.f32.mxu0 %v315
        %2349 = vmatmul.mubr.f32.gmra.mrb[0].mxu0 %v314
        %v2350 = vpop.f32.mrb[0].mxu0
        %v2351 = vadd.f32 0.0, %v2350
        %v2352 = vpop.f32.mrb[0].mxu0
        %2353 = vmatprep.mubr.f32.mxu0 %v317
        %2354 = vmatmul.mubr.f32.gmra.mrb[0].mxu0 %v316
        %v2355 = vpop.f32.mrb[0].mxu0
        %v2356 = vadd.f32 0.0, %v2355
        %v2357 = vpop.f32.mrb[0].mxu0
        %2358 = vdwg.mxu0
        %v2359 = vsub.f32 %v2346, %v318
        %v2360 = vsub.f32 %v2351, %v319
        %v2361 = vsub.f32 %v2356, %v320
        %v2362 = vmul.f32 %v2361, %v2361
        %v2364 = vrot.slane %v2362, 1
        %v2366 = vadd.f32 %v2362, %v2364
        %v2367 = vrot.slane %v2362, 2
        %v2369 = vadd.f32 %v2366, %v2367
        %v2370 = vmax.f32 %v2369, 1e-24
        %v2371 = vrsqrt.pop %v2370
        %v2372 = vmax.f32 %v2359, 0.0
        %v2373 = vmax.f32 %v2360, 0.0
        %v2374 = vlaneseq
        %v2375 = vshrl.u32 %v2374, 7
        %v2376 = vsub.s32 0, %v2375
        %v2377 = vrot.slane %v2371, %v2376
        %v2378 = vmul.f32 %v2372, %v2377
        %v2379 = vmul.f32 %v2373, %v2377
        %v2380 = vmax.f32 %v2177, %v2378
        %v2381 = vmax.f32 %v2178, %v2379
        %v2382 = vlaneseq
        %v2383 = vshrl.u32 %v2382, 7
        %v2384 = vsub.s32 2, %v2383
        %v2385 = vrot.slane %v311, %v2384
        %vm2386 = vcmp.eq.s32.totalorder %v322, %v2385
        %vm2387 = vcmp.eq.s32.totalorder %v323, %v2385
        %vm2388 = vcmp.eq.s32.totalorder %v324, %v2385
        %vm2389 = vcmp.eq.s32.totalorder %v325, %v2385
        %vm2390 = vcmp.eq.s32.totalorder %v326, %v2385
        %vm2391 = vcmp.eq.s32.totalorder %v327, %v2385
        %vm2392 = vcmp.eq.s32.totalorder %v328, %v2385
        %vm2393 = vcmp.eq.s32.totalorder %v329, %v2385
        %vm2394 = vcmp.eq.s32.totalorder %v330, %v2385
        %vm2395 = vcmp.eq.s32.totalorder %v331, %v2385
        %vm2396 = vcmp.eq.s32.totalorder %v332, %v2385
        %vm2397 = vcmp.eq.s32.totalorder %v333, %v2385
        %vm2398 = vcmp.eq.s32.totalorder %v334, %v2385
        %vm2399 = vcmp.eq.s32.totalorder %v335, %v2385
        %vm2400 = vcmp.eq.s32.totalorder %v336, %v2385
        %vm2401 = vcmp.eq.s32.totalorder %v337, %v2385
        %vm2402 = vcmp.eq.s32.totalorder %v338, %v2385
        %vm2403 = vcmp.eq.s32.totalorder %v339, %v2385
        %vm2404 = vcmp.eq.s32.totalorder %v340, %v2385
        %vm2405 = vcmp.eq.s32.totalorder %v341, %v2385
        %vm2406 = vcmp.eq.s32.totalorder %v342, %v2385
        %vm2407 = vcmp.eq.s32.totalorder %v343, %v2385
        %vm2408 = vcmp.eq.s32.totalorder %v344, %v2385
        %vm2409 = vcmp.eq.s32.totalorder %v345, %v2385
        %vm2410 = vcmp.eq.s32.totalorder %v346, %v2385
        %vm2411 = vcmp.eq.s32.totalorder %v347, %v2385
        %vm2412 = vcmp.eq.s32.totalorder %v348, %v2385
        %vm2413 = vcmp.eq.s32.totalorder %v349, %v2385
        %vm2414 = vcmp.eq.s32.totalorder %v350, %v2385
        %vm2415 = vcmp.eq.s32.totalorder %v351, %v2385
        %vm2416 = vcmp.eq.s32.totalorder %v352, %v2385
        %vm2417 = vcmp.eq.s32.totalorder %v353, %v2385
        %v2418 = vsel %vm2386, 1, 0
        %v2419 = vsel %vm2387, 1, 0
        %v2420 = vsel %vm2388, 1, 0
        %v2421 = vsel %vm2389, 1, 0
        %v2422 = vsel %vm2390, 1, 0
        %v2423 = vsel %vm2391, 1, 0
        %v2424 = vsel %vm2392, 1, 0
        %v2425 = vsel %vm2393, 1, 0
        %v2426 = vsel %vm2394, 1, 0
        %v2427 = vsel %vm2395, 1, 0
        %v2428 = vsel %vm2396, 1, 0
        %v2429 = vsel %vm2397, 1, 0
        %v2430 = vsel %vm2398, 1, 0
        %v2431 = vsel %vm2399, 1, 0
        %v2432 = vsel %vm2400, 1, 0
        %v2433 = vsel %vm2401, 1, 0
        %v2434 = vsel %vm2402, 1, 0
        %v2435 = vsel %vm2403, 1, 0
        %v2436 = vsel %vm2404, 1, 0
        %v2437 = vsel %vm2405, 1, 0
        %v2438 = vsel %vm2406, 1, 0
        %v2439 = vsel %vm2407, 1, 0
        %v2440 = vsel %vm2408, 1, 0
        %v2441 = vsel %vm2409, 1, 0
        %v2442 = vsel %vm2410, 1, 0
        %v2443 = vsel %vm2411, 1, 0
        %v2444 = vsel %vm2412, 1, 0
        %v2445 = vsel %vm2413, 1, 0
        %v2446 = vsel %vm2414, 1, 0
        %v2447 = vsel %vm2415, 1, 0
        %v2448 = vsel %vm2416, 1, 0
        %v2449 = vsel %vm2417, 1, 0
        %v2450 = vcvt.s32.f32 %v2418
        %v2451 = vcvt.s32.f32 %v2419
        %v2452 = vcvt.s32.f32 %v2420
        %v2453 = vcvt.s32.f32 %v2421
        %v2454 = vcvt.s32.f32 %v2422
        %v2455 = vcvt.s32.f32 %v2423
        %v2456 = vcvt.s32.f32 %v2424
        %v2457 = vcvt.s32.f32 %v2425
        %v2458 = vcvt.s32.f32 %v2426
        %v2459 = vcvt.s32.f32 %v2427
        %v2460 = vcvt.s32.f32 %v2428
        %v2461 = vcvt.s32.f32 %v2429
        %v2462 = vcvt.s32.f32 %v2430
        %v2463 = vcvt.s32.f32 %v2431
        %v2464 = vcvt.s32.f32 %v2432
        %v2465 = vcvt.s32.f32 %v2433
        %v2466 = vcvt.s32.f32 %v2434
        %v2467 = vcvt.s32.f32 %v2435
        %v2468 = vcvt.s32.f32 %v2436
        %v2469 = vcvt.s32.f32 %v2437
        %v2470 = vcvt.s32.f32 %v2438
        %v2471 = vcvt.s32.f32 %v2439
        %v2472 = vcvt.s32.f32 %v2440
        %v2473 = vcvt.s32.f32 %v2441
        %v2474 = vcvt.s32.f32 %v2442
        %v2475 = vcvt.s32.f32 %v2443
        %v2476 = vcvt.s32.f32 %v2444
        %v2477 = vcvt.s32.f32 %v2445
        %v2478 = vcvt.s32.f32 %v2446
        %v2479 = vcvt.s32.f32 %v2447
        %v2480 = vcvt.s32.f32 %v2448
        %v2481 = vcvt.s32.f32 %v2449
        %2482 = vmatprep.subr.mxu0 0.0
        %2483 = vmatpush1.msra.mxu0 %v2450
        %2484 = vmatprep.subr.mxu0 0.0
        %2485 = vmatpush1.msra.mxu0 %v2451
        %2486 = vmatprep.subr.mxu0 0.0
        %2487 = vmatpush1.msra.mxu0 %v2452
        %2488 = vmatprep.subr.mxu0 0.0
        %2489 = vmatpush1.msra.mxu0 %v2453
        %2490 = vmatprep.subr.mxu0 0.0
        %2491 = vmatpush1.msra.mxu0 %v2454
        %2492 = vmatprep.subr.mxu0 0.0
        %2493 = vmatpush1.msra.mxu0 %v2455
        %2494 = vmatprep.subr.mxu0 0.0
        %2495 = vmatpush1.msra.mxu0 %v2456
        %2496 = vmatprep.subr.mxu0 0.0
        %2497 = vmatpush1.msra.mxu0 %v2457
        %2498 = vmatprep.subr.mxu0 0.0
        %2499 = vmatpush1.msra.mxu0 %v2458
        %2500 = vmatprep.subr.mxu0 0.0
        %2501 = vmatpush1.msra.mxu0 %v2459
        %2502 = vmatprep.subr.mxu0 0.0
        %2503 = vmatpush1.msra.mxu0 %v2460
        %2504 = vmatprep.subr.mxu0 0.0
        %2505 = vmatpush1.msra.mxu0 %v2461
        %2506 = vmatprep.subr.mxu0 0.0
        %2507 = vmatpush1.msra.mxu0 %v2462
        %2508 = vmatprep.subr.mxu0 0.0
        %2509 = vmatpush1.msra.mxu0 %v2463
        %2510 = vmatprep.subr.mxu0 0.0
        %2511 = vmatpush1.msra.mxu0 %v2464
        %2512 = vmatprep.subr.mxu0 0.0
        %2513 = vmatpush1.msra.mxu0 %v2465
        %2514 = vmatprep.subr.mxu0 0.0
        %2515 = vmatpush1.msra.mxu0 %v2466
        %2516 = vmatprep.subr.mxu0 0.0
        %2517 = vmatpush1.msra.mxu0 %v2467
        %2518 = vmatprep.subr.mxu0 0.0
        %2519 = vmatpush1.msra.mxu0 %v2468
        %2520 = vmatprep.subr.mxu0 0.0
        %2521 = vmatpush1.msra.mxu0 %v2469
        %2522 = vmatprep.subr.mxu0 0.0
        %2523 = vmatpush1.msra.mxu0 %v2470
        %2524 = vmatprep.subr.mxu0 0.0
        %2525 = vmatpush1.msra.mxu0 %v2471
        %2526 = vmatprep.subr.mxu0 0.0
        %2527 = vmatpush1.msra.mxu0 %v2472
        %2528 = vmatprep.subr.mxu0 0.0
        %2529 = vmatpush1.msra.mxu0 %v2473
        %2530 = vmatprep.subr.mxu0 0.0
        %2531 = vmatpush1.msra.mxu0 %v2474
        %2532 = vmatprep.subr.mxu0 0.0
        %2533 = vmatpush1.msra.mxu0 %v2475
        %2534 = vmatprep.subr.mxu0 0.0
        %2535 = vmatpush1.msra.mxu0 %v2476
        %2536 = vmatprep.subr.mxu0 0.0
        %2537 = vmatpush1.msra.mxu0 %v2477
        %2538 = vmatprep.subr.mxu0 0.0
        %2539 = vmatpush1.msra.mxu0 %v2478
        %2540 = vmatprep.subr.mxu0 0.0
        %2541 = vmatpush1.msra.mxu0 %v2479
        %2542 = vmatprep.subr.mxu0 0.0
        %2543 = vmatpush1.msra.mxu0 %v2480
        %2544 = vmatprep.subr.mxu0 0.0
        %2545 = vmatpush1.msra.mxu0 %v2481
        %2546 = vmatprep.mubr.f32.mxu0 %v313
        %2547 = vmatmul.mubr.f32.gmra.mrb[0].mxu0 %v312
        %v2548 = vpop.f32.mrb[0].mxu0
        %v2549 = vadd.f32 0.0, %v2548
        %v2550 = vpop.f32.mrb[0].mxu0
        %2551 = vmatprep.mubr.f32.mxu0 %v315
        %2552 = vmatmul.mubr.f32.gmra.mrb[0].mxu0 %v314
        %v2553 = vpop.f32.mrb[0].mxu0
        %v2554 = vadd.f32 0.0, %v2553
        %v2555 = vpop.f32.mrb[0].mxu0
        %2556 = vmatprep.mubr.f32.mxu0 %v317
        %2557 = vmatmul.mubr.f32.gmra.mrb[0].mxu0 %v316
        %v2558 = vpop.f32.mrb[0].mxu0
        %v2559 = vadd.f32 0.0, %v2558
        %v2560 = vpop.f32.mrb[0].mxu0
        %2561 = vdwg.mxu0
        %v2562 = vsub.f32 %v2549, %v318
        %v2563 = vsub.f32 %v2554, %v319
        %v2564 = vsub.f32 %v2559, %v320
        %v2565 = vmul.f32 %v2564, %v2564
        %v2567 = vrot.slane %v2565, 1
        %v2569 = vadd.f32 %v2565, %v2567
        %v2570 = vrot.slane %v2565, 2
        %v2572 = vadd.f32 %v2569, %v2570
        %v2573 = vmax.f32 %v2572, 1e-24
        %v2574 = vrsqrt.pop %v2573
        %v2575 = vmax.f32 %v2562, 0.0
        %v2576 = vmax.f32 %v2563, 0.0
        %v2577 = vlaneseq
        %v2578 = vshrl.u32 %v2577, 7
        %v2579 = vsub.s32 0, %v2578
        %v2580 = vrot.slane %v2574, %v2579
        %v2581 = vmul.f32 %v2575, %v2580
        %v2582 = vmul.f32 %v2576, %v2580
        %v2583 = vmax.f32 %v2380, %v2581
        %v2584 = vmax.f32 %v2381, %v2582
        %v2585 = vlaneseq
        %v2586 = vshrl.u32 %v2585, 7
        %v2587 = vsub.s32 3, %v2586
        %v2588 = vrot.slane %v311, %v2587
        %vm2589 = vcmp.eq.s32.totalorder %v322, %v2588
        %vm2590 = vcmp.eq.s32.totalorder %v323, %v2588
        %vm2591 = vcmp.eq.s32.totalorder %v324, %v2588
        %vm2592 = vcmp.eq.s32.totalorder %v325, %v2588
        %vm2593 = vcmp.eq.s32.totalorder %v326, %v2588
        %vm2594 = vcmp.eq.s32.totalorder %v327, %v2588
        %vm2595 = vcmp.eq.s32.totalorder %v328, %v2588
        %vm2596 = vcmp.eq.s32.totalorder %v329, %v2588
        %vm2597 = vcmp.eq.s32.totalorder %v330, %v2588
        %vm2598 = vcmp.eq.s32.totalorder %v331, %v2588
        %vm2599 = vcmp.eq.s32.totalorder %v332, %v2588
        %vm2600 = vcmp.eq.s32.totalorder %v333, %v2588
        %vm2601 = vcmp.eq.s32.totalorder %v334, %v2588
        %vm2602 = vcmp.eq.s32.totalorder %v335, %v2588
        %vm2603 = vcmp.eq.s32.totalorder %v336, %v2588
        %vm2604 = vcmp.eq.s32.totalorder %v337, %v2588
        %vm2605 = vcmp.eq.s32.totalorder %v338, %v2588
        %vm2606 = vcmp.eq.s32.totalorder %v339, %v2588
        %vm2607 = vcmp.eq.s32.totalorder %v340, %v2588
        %vm2608 = vcmp.eq.s32.totalorder %v341, %v2588
        %vm2609 = vcmp.eq.s32.totalorder %v342, %v2588
        %vm2610 = vcmp.eq.s32.totalorder %v343, %v2588
        %vm2611 = vcmp.eq.s32.totalorder %v344, %v2588
        %vm2612 = vcmp.eq.s32.totalorder %v345, %v2588
        %vm2613 = vcmp.eq.s32.totalorder %v346, %v2588
        %vm2614 = vcmp.eq.s32.totalorder %v347, %v2588
        %vm2615 = vcmp.eq.s32.totalorder %v348, %v2588
        %vm2616 = vcmp.eq.s32.totalorder %v349, %v2588
        %vm2617 = vcmp.eq.s32.totalorder %v350, %v2588
        %vm2618 = vcmp.eq.s32.totalorder %v351, %v2588
        %vm2619 = vcmp.eq.s32.totalorder %v352, %v2588
        %vm2620 = vcmp.eq.s32.totalorder %v353, %v2588
        %v2621 = vsel %vm2589, 1, 0
        %v2622 = vsel %vm2590, 1, 0
        %v2623 = vsel %vm2591, 1, 0
        %v2624 = vsel %vm2592, 1, 0
        %v2625 = vsel %vm2593, 1, 0
        %v2626 = vsel %vm2594, 1, 0
        %v2627 = vsel %vm2595, 1, 0
        %v2628 = vsel %vm2596, 1, 0
        %v2629 = vsel %vm2597, 1, 0
        %v2630 = vsel %vm2598, 1, 0
        %v2631 = vsel %vm2599, 1, 0
        %v2632 = vsel %vm2600, 1, 0
        %v2633 = vsel %vm2601, 1, 0
        %v2634 = vsel %vm2602, 1, 0
        %v2635 = vsel %vm2603, 1, 0
        %v2636 = vsel %vm2604, 1, 0
        %v2637 = vsel %vm2605, 1, 0
        %v2638 = vsel %vm2606, 1, 0
        %v2639 = vsel %vm2607, 1, 0
        %v2640 = vsel %vm2608, 1, 0
        %v2641 = vsel %vm2609, 1, 0
        %v2642 = vsel %vm2610, 1, 0
        %v2643 = vsel %vm2611, 1, 0
        %v2644 = vsel %vm2612, 1, 0
        %v2645 = vsel %vm2613, 1, 0
        %v2646 = vsel %vm2614, 1, 0
        %v2647 = vsel %vm2615, 1, 0
        %v2648 = vsel %vm2616, 1, 0
        %v2649 = vsel %vm2617, 1, 0
        %v2650 = vsel %vm2618, 1, 0
        %v2651 = vsel %vm2619, 1, 0
        %v2652 = vsel %vm2620, 1, 0
        %v2653 = vcvt.s32.f32 %v2621
        %v2654 = vcvt.s32.f32 %v2622
        %v2655 = vcvt.s32.f32 %v2623
        %v2656 = vcvt.s32.f32 %v2624
        %v2657 = vcvt.s32.f32 %v2625
        %v2658 = vcvt.s32.f32 %v2626
        %v2659 = vcvt.s32.f32 %v2627
        %v2660 = vcvt.s32.f32 %v2628
        %v2661 = vcvt.s32.f32 %v2629
        %v2662 = vcvt.s32.f32 %v2630
        %v2663 = vcvt.s32.f32 %v2631
        %v2664 = vcvt.s32.f32 %v2632
        %v2665 = vcvt.s32.f32 %v2633
        %v2666 = vcvt.s32.f32 %v2634
        %v2667 = vcvt.s32.f32 %v2635
        %v2668 = vcvt.s32.f32 %v2636
        %v2669 = vcvt.s32.f32 %v2637
        %v2670 = vcvt.s32.f32 %v2638
        %v2671 = vcvt.s32.f32 %v2639
        %v2672 = vcvt.s32.f32 %v2640
        %v2673 = vcvt.s32.f32 %v2641
        %v2674 = vcvt.s32.f32 %v2642
        %v2675 = vcvt.s32.f32 %v2643
        %v2676 = vcvt.s32.f32 %v2644
        %v2677 = vcvt.s32.f32 %v2645
        %v2678 = vcvt.s32.f32 %v2646
        %v2679 = vcvt.s32.f32 %v2647
        %v2680 = vcvt.s32.f32 %v2648
        %v2681 = vcvt.s32.f32 %v2649
        %v2682 = vcvt.s32.f32 %v2650
        %v2683 = vcvt.s32.f32 %v2651
        %v2684 = vcvt.s32.f32 %v2652
        %2685 = vmatprep.subr.mxu0 0.0
        %2686 = vmatpush1.msra.mxu0 %v2653
        %2687 = vmatprep.subr.mxu0 0.0
        %2688 = vmatpush1.msra.mxu0 %v2654
        %2689 = vmatprep.subr.mxu0 0.0
        %2690 = vmatpush1.msra.mxu0 %v2655
        %2691 = vmatprep.subr.mxu0 0.0
        %2692 = vmatpush1.msra.mxu0 %v2656
        %2693 = vmatprep.subr.mxu0 0.0
        %2694 = vmatpush1.msra.mxu0 %v2657
        %2695 = vmatprep.subr.mxu0 0.0
        %2696 = vmatpush1.msra.mxu0 %v2658
        %2697 = vmatprep.subr.mxu0 0.0
        %2698 = vmatpush1.msra.mxu0 %v2659
        %2699 = vmatprep.subr.mxu0 0.0
        %2700 = vmatpush1.msra.mxu0 %v2660
        %2701 = vmatprep.subr.mxu0 0.0
        %2702 = vmatpush1.msra.mxu0 %v2661
        %2703 = vmatprep.subr.mxu0 0.0
        %2704 = vmatpush1.msra.mxu0 %v2662
        %2705 = vmatprep.subr.mxu0 0.0
        %2706 = vmatpush1.msra.mxu0 %v2663
        %2707 = vmatprep.subr.mxu0 0.0
        %2708 = vmatpush1.msra.mxu0 %v2664
        %2709 = vmatprep.subr.mxu0 0.0
        %2710 = vmatpush1.msra.mxu0 %v2665
        %2711 = vmatprep.subr.mxu0 0.0
        %2712 = vmatpush1.msra.mxu0 %v2666
        %2713 = vmatprep.subr.mxu0 0.0
        %2714 = vmatpush1.msra.mxu0 %v2667
        %2715 = vmatprep.subr.mxu0 0.0
        %2716 = vmatpush1.msra.mxu0 %v2668
        %2717 = vmatprep.subr.mxu0 0.0
        %2718 = vmatpush1.msra.mxu0 %v2669
        %2719 = vmatprep.subr.mxu0 0.0
        %2720 = vmatpush1.msra.mxu0 %v2670
        %2721 = vmatprep.subr.mxu0 0.0
        %2722 = vmatpush1.msra.mxu0 %v2671
        %2723 = vmatprep.subr.mxu0 0.0
        %2724 = vmatpush1.msra.mxu0 %v2672
        %2725 = vmatprep.subr.mxu0 0.0
        %2726 = vmatpush1.msra.mxu0 %v2673
        %2727 = vmatprep.subr.mxu0 0.0
        %2728 = vmatpush1.msra.mxu0 %v2674
        %2729 = vmatprep.subr.mxu0 0.0
        %2730 = vmatpush1.msra.mxu0 %v2675
        %2731 = vmatprep.subr.mxu0 0.0
        %2732 = vmatpush1.msra.mxu0 %v2676
        %2733 = vmatprep.subr.mxu0 0.0
        %2734 = vmatpush1.msra.mxu0 %v2677
        %2735 = vmatprep.subr.mxu0 0.0
        %2736 = vmatpush1.msra.mxu0 %v2678
        %2737 = vmatprep.subr.mxu0 0.0
        %2738 = vmatpush1.msra.mxu0 %v2679
        %2739 = vmatprep.subr.mxu0 0.0
        %2740 = vmatpush1.msra.mxu0 %v2680
        %2741 = vmatprep.subr.mxu0 0.0
        %2742 = vmatpush1.msra.mxu0 %v2681
        %2743 = vmatprep.subr.mxu0 0.0
        %2744 = vmatpush1.msra.mxu0 %v2682
        %2745 = vmatprep.subr.mxu0 0.0
        %2746 = vmatpush1.msra.mxu0 %v2683
        %2747 = vmatprep.subr.mxu0 0.0
        %2748 = vmatpush1.msra.mxu0 %v2684
        %2749 = vmatprep.mubr.f32.mxu0 %v313
        %2750 = vmatmul.mubr.f32.gmra.mrb[0].mxu0 %v312
        %v2751 = vpop.f32.mrb[0].mxu0
        %v2752 = vadd.f32 0.0, %v2751
        %v2753 = vpop.f32.mrb[0].mxu0
        %2754 = vmatprep.mubr.f32.mxu0 %v315
        %2755 = vmatmul.mubr.f32.gmra.mrb[0].mxu0 %v314
        %v2756 = vpop.f32.mrb[0].mxu0
        %v2757 = vadd.f32 0.0, %v2756
        %v2758 = vpop.f32.mrb[0].mxu0
        %2759 = vmatprep.mubr.f32.mxu0 %v317
        %2760 = vmatmul.mubr.f32.gmra.mrb[0].mxu0 %v316
        %v2761 = vpop.f32.mrb[0].mxu0
        %v2762 = vadd.f32 0.0, %v2761
        %v2763 = vpop.f32.mrb[0].mxu0
        %2764 = vdwg.mxu0
        %v2765 = vsub.f32 %v2752, %v318
        %v2766 = vsub.f32 %v2757, %v319
        %v2767 = vsub.f32 %v2762, %v320
        %v2768 = vmul.f32 %v2767, %v2767
        %v2770 = vrot.slane %v2768, 1
        %v2772 = vadd.f32 %v2768, %v2770
        %v2773 = vrot.slane %v2768, 2
        %v2775 = vadd.f32 %v2772, %v2773
        %v2776 = vmax.f32 %v2775, 1e-24
        %v2777 = vrsqrt.pop %v2776
        %v2778 = vmax.f32 %v2765, 0.0
        %v2779 = vmax.f32 %v2766, 0.0
        %v2780 = vlaneseq
        %v2781 = vshrl.u32 %v2780, 7
        %v2782 = vsub.s32 0, %v2781
        %v2783 = vrot.slane %v2777, %v2782
        %v2784 = vmul.f32 %v2778, %v2783
        %v2785 = vmul.f32 %v2779, %v2783
        %v2786 = vmax.f32 %v2583, %v2784
        %v2787 = vmax.f32 %v2584, %v2785
        %v2788 = vlaneseq
        %v2789 = vshrl.u32 %v2788, 7
        %v2790 = vsub.s32 4, %v2789
        %v2791 = vrot.slane %v311, %v2790
        %vm2792 = vcmp.eq.s32.totalorder %v322, %v2791
        %vm2793 = vcmp.eq.s32.totalorder %v323, %v2791
        %vm2794 = vcmp.eq.s32.totalorder %v324, %v2791
        %vm2795 = vcmp.eq.s32.totalorder %v325, %v2791
        %vm2796 = vcmp.eq.s32.totalorder %v326, %v2791
        %vm2797 = vcmp.eq.s32.totalorder %v327, %v2791
        %vm2798 = vcmp.eq.s32.totalorder %v328, %v2791
        %vm2799 = vcmp.eq.s32.totalorder %v329, %v2791
        %vm2800 = vcmp.eq.s32.totalorder %v330, %v2791
        %vm2801 = vcmp.eq.s32.totalorder %v331, %v2791
        %vm2802 = vcmp.eq.s32.totalorder %v332, %v2791
        %vm2803 = vcmp.eq.s32.totalorder %v333, %v2791
        %vm2804 = vcmp.eq.s32.totalorder %v334, %v2791
        %vm2805 = vcmp.eq.s32.totalorder %v335, %v2791
        %vm2806 = vcmp.eq.s32.totalorder %v336, %v2791
        %vm2807 = vcmp.eq.s32.totalorder %v337, %v2791
        %vm2808 = vcmp.eq.s32.totalorder %v338, %v2791
        %vm2809 = vcmp.eq.s32.totalorder %v339, %v2791
        %vm2810 = vcmp.eq.s32.totalorder %v340, %v2791
        %vm2811 = vcmp.eq.s32.totalorder %v341, %v2791
        %vm2812 = vcmp.eq.s32.totalorder %v342, %v2791
        %vm2813 = vcmp.eq.s32.totalorder %v343, %v2791
        %vm2814 = vcmp.eq.s32.totalorder %v344, %v2791
        %vm2815 = vcmp.eq.s32.totalorder %v345, %v2791
        %vm2816 = vcmp.eq.s32.totalorder %v346, %v2791
        %vm2817 = vcmp.eq.s32.totalorder %v347, %v2791
        %vm2818 = vcmp.eq.s32.totalorder %v348, %v2791
        %vm2819 = vcmp.eq.s32.totalorder %v349, %v2791
        %vm2820 = vcmp.eq.s32.totalorder %v350, %v2791
        %vm2821 = vcmp.eq.s32.totalorder %v351, %v2791
        %vm2822 = vcmp.eq.s32.totalorder %v352, %v2791
        %vm2823 = vcmp.eq.s32.totalorder %v353, %v2791
        %v2824 = vsel %vm2792, 1, 0
        %v2825 = vsel %vm2793, 1, 0
        %v2826 = vsel %vm2794, 1, 0
        %v2827 = vsel %vm2795, 1, 0
        %v2828 = vsel %vm2796, 1, 0
        %v2829 = vsel %vm2797, 1, 0
        %v2830 = vsel %vm2798, 1, 0
        %v2831 = vsel %vm2799, 1, 0
        %v2832 = vsel %vm2800, 1, 0
        %v2833 = vsel %vm2801, 1, 0
        %v2834 = vsel %vm2802, 1, 0
        %v2835 = vsel %vm2803, 1, 0
        %v2836 = vsel %vm2804, 1, 0
        %v2837 = vsel %vm2805, 1, 0
        %v2838 = vsel %vm2806, 1, 0
        %v2839 = vsel %vm2807, 1, 0
        %v2840 = vsel %vm2808, 1, 0
        %v2841 = vsel %vm2809, 1, 0
        %v2842 = vsel %vm2810, 1, 0
        %v2843 = vsel %vm2811, 1, 0
        %v2844 = vsel %vm2812, 1, 0
        %v2845 = vsel %vm2813, 1, 0
        %v2846 = vsel %vm2814, 1, 0
        %v2847 = vsel %vm2815, 1, 0
        %v2848 = vsel %vm2816, 1, 0
        %v2849 = vsel %vm2817, 1, 0
        %v2850 = vsel %vm2818, 1, 0
        %v2851 = vsel %vm2819, 1, 0
        %v2852 = vsel %vm2820, 1, 0
        %v2853 = vsel %vm2821, 1, 0
        %v2854 = vsel %vm2822, 1, 0
        %v2855 = vsel %vm2823, 1, 0
        %v2856 = vcvt.s32.f32 %v2824
        %v2857 = vcvt.s32.f32 %v2825
        %v2858 = vcvt.s32.f32 %v2826
        %v2859 = vcvt.s32.f32 %v2827
        %v2860 = vcvt.s32.f32 %v2828
        %v2861 = vcvt.s32.f32 %v2829
        %v2862 = vcvt.s32.f32 %v2830
        %v2863 = vcvt.s32.f32 %v2831
        %v2864 = vcvt.s32.f32 %v2832
        %v2865 = vcvt.s32.f32 %v2833
        %v2866 = vcvt.s32.f32 %v2834
        %v2867 = vcvt.s32.f32 %v2835
        %v2868 = vcvt.s32.f32 %v2836
        %v2869 = vcvt.s32.f32 %v2837
        %v2870 = vcvt.s32.f32 %v2838
        %v2871 = vcvt.s32.f32 %v2839
        %v2872 = vcvt.s32.f32 %v2840
        %v2873 = vcvt.s32.f32 %v2841
        %v2874 = vcvt.s32.f32 %v2842
        %v2875 = vcvt.s32.f32 %v2843
        %v2876 = vcvt.s32.f32 %v2844
        %v2877 = vcvt.s32.f32 %v2845
        %v2878 = vcvt.s32.f32 %v2846
        %v2879 = vcvt.s32.f32 %v2847
        %v2880 = vcvt.s32.f32 %v2848
        %v2881 = vcvt.s32.f32 %v2849
        %v2882 = vcvt.s32.f32 %v2850
        %v2883 = vcvt.s32.f32 %v2851
        %v2884 = vcvt.s32.f32 %v2852
        %v2885 = vcvt.s32.f32 %v2853
        %v2886 = vcvt.s32.f32 %v2854
        %v2887 = vcvt.s32.f32 %v2855
        %2888 = vmatprep.subr.mxu0 0.0
        %2889 = vmatpush1.msra.mxu0 %v2856
        %2890 = vmatprep.subr.mxu0 0.0
        %2891 = vmatpush1.msra.mxu0 %v2857
        %2892 = vmatprep.subr.mxu0 0.0
        %2893 = vmatpush1.msra.mxu0 %v2858
        %2894 = vmatprep.subr.mxu0 0.0
        %2895 = vmatpush1.msra.mxu0 %v2859
        %2896 = vmatprep.subr.mxu0 0.0
        %2897 = vmatpush1.msra.mxu0 %v2860
        %2898 = vmatprep.subr.mxu0 0.0
        %2899 = vmatpush1.msra.mxu0 %v2861
        %2900 = vmatprep.subr.mxu0 0.0
        %2901 = vmatpush1.msra.mxu0 %v2862
        %2902 = vmatprep.subr.mxu0 0.0
        %2903 = vmatpush1.msra.mxu0 %v2863
        %2904 = vmatprep.subr.mxu0 0.0
        %2905 = vmatpush1.msra.mxu0 %v2864
        %2906 = vmatprep.subr.mxu0 0.0
        %2907 = vmatpush1.msra.mxu0 %v2865
        %2908 = vmatprep.subr.mxu0 0.0
        %2909 = vmatpush1.msra.mxu0 %v2866
        %2910 = vmatprep.subr.mxu0 0.0
        %2911 = vmatpush1.msra.mxu0 %v2867
        %2912 = vmatprep.subr.mxu0 0.0
        %2913 = vmatpush1.msra.mxu0 %v2868
        %2914 = vmatprep.subr.mxu0 0.0
        %2915 = vmatpush1.msra.mxu0 %v2869
        %2916 = vmatprep.subr.mxu0 0.0
        %2917 = vmatpush1.msra.mxu0 %v2870
        %2918 = vmatprep.subr.mxu0 0.0
        %2919 = vmatpush1.msra.mxu0 %v2871
        %2920 = vmatprep.subr.mxu0 0.0
        %2921 = vmatpush1.msra.mxu0 %v2872
        %2922 = vmatprep.subr.mxu0 0.0
        %2923 = vmatpush1.msra.mxu0 %v2873
        %2924 = vmatprep.subr.mxu0 0.0
        %2925 = vmatpush1.msra.mxu0 %v2874
        %2926 = vmatprep.subr.mxu0 0.0
        %2927 = vmatpush1.msra.mxu0 %v2875
        %2928 = vmatprep.subr.mxu0 0.0
        %2929 = vmatpush1.msra.mxu0 %v2876
        %2930 = vmatprep.subr.mxu0 0.0
        %2931 = vmatpush1.msra.mxu0 %v2877
        %2932 = vmatprep.subr.mxu0 0.0
        %2933 = vmatpush1.msra.mxu0 %v2878
        %2934 = vmatprep.subr.mxu0 0.0
        %2935 = vmatpush1.msra.mxu0 %v2879
        %2936 = vmatprep.subr.mxu0 0.0
        %2937 = vmatpush1.msra.mxu0 %v2880
        %2938 = vmatprep.subr.mxu0 0.0
        %2939 = vmatpush1.msra.mxu0 %v2881
        %2940 = vmatprep.subr.mxu0 0.0
        %2941 = vmatpush1.msra.mxu0 %v2882
        %2942 = vmatprep.subr.mxu0 0.0
        %2943 = vmatpush1.msra.mxu0 %v2883
        %2944 = vmatprep.subr.mxu0 0.0
        %2945 = vmatpush1.msra.mxu0 %v2884
        %2946 = vmatprep.subr.mxu0 0.0
        %2947 = vmatpush1.msra.mxu0 %v2885
        %2948 = vmatprep.subr.mxu0 0.0
        %2949 = vmatpush1.msra.mxu0 %v2886
        %2950 = vmatprep.subr.mxu0 0.0
        %2951 = vmatpush1.msra.mxu0 %v2887
        %2952 = vmatprep.mubr.f32.mxu0 %v313
        %2953 = vmatmul.mubr.f32.gmra.mrb[0].mxu0 %v312
        %v2954 = vpop.f32.mrb[0].mxu0
        %v2955 = vadd.f32 0.0, %v2954
        %v2956 = vpop.f32.mrb[0].mxu0
        %2957 = vmatprep.mubr.f32.mxu0 %v315
        %2958 = vmatmul.mubr.f32.gmra.mrb[0].mxu0 %v314
        %v2959 = vpop.f32.mrb[0].mxu0
        %v2960 = vadd.f32 0.0, %v2959
        %v2961 = vpop.f32.mrb[0].mxu0
        %2962 = vmatprep.mubr.f32.mxu0 %v317
        %2963 = vmatmul.mubr.f32.gmra.mrb[0].mxu0 %v316
        %v2964 = vpop.f32.mrb[0].mxu0
        %v2965 = vadd.f32 0.0, %v2964
        %v2966 = vpop.f32.mrb[0].mxu0
        %2967 = vdwg.mxu0
        %v2968 = vsub.f32 %v2955, %v318
        %v2969 = vsub.f32 %v2960, %v319
        %v2970 = vsub.f32 %v2965, %v320
        %v2971 = vmul.f32 %v2970, %v2970
        %v2973 = vrot.slane %v2971, 1
        %v2975 = vadd.f32 %v2971, %v2973
        %v2976 = vrot.slane %v2971, 2
        %v2978 = vadd.f32 %v2975, %v2976
        %v2979 = vmax.f32 %v2978, 1e-24
        %v2980 = vrsqrt.pop %v2979
        %v2981 = vmax.f32 %v2968, 0.0
        %v2982 = vmax.f32 %v2969, 0.0
        %v2983 = vlaneseq
        %v2984 = vshrl.u32 %v2983, 7
        %v2985 = vsub.s32 0, %v2984
        %v2986 = vrot.slane %v2980, %v2985
        %v2987 = vmul.f32 %v2981, %v2986
        %v2988 = vmul.f32 %v2982, %v2986
        %v2989 = vmax.f32 %v2786, %v2987
        %v2990 = vmax.f32 %v2787, %v2988
        %v2991 = vlaneseq
        %v2992 = vshrl.u32 %v2991, 7
        %v2993 = vsub.s32 5, %v2992
        %v2994 = vrot.slane %v311, %v2993
        %vm2995 = vcmp.eq.s32.totalorder %v322, %v2994
        %vm2996 = vcmp.eq.s32.totalorder %v323, %v2994
        %vm2997 = vcmp.eq.s32.totalorder %v324, %v2994
        %vm2998 = vcmp.eq.s32.totalorder %v325, %v2994
        %vm2999 = vcmp.eq.s32.totalorder %v326, %v2994
        %vm3000 = vcmp.eq.s32.totalorder %v327, %v2994
        %vm3001 = vcmp.eq.s32.totalorder %v328, %v2994
        %vm3002 = vcmp.eq.s32.totalorder %v329, %v2994
        %vm3003 = vcmp.eq.s32.totalorder %v330, %v2994
        %vm3004 = vcmp.eq.s32.totalorder %v331, %v2994
        %vm3005 = vcmp.eq.s32.totalorder %v332, %v2994
        %vm3006 = vcmp.eq.s32.totalorder %v333, %v2994
        %vm3007 = vcmp.eq.s32.totalorder %v334, %v2994
        %vm3008 = vcmp.eq.s32.totalorder %v335, %v2994
        %vm3009 = vcmp.eq.s32.totalorder %v336, %v2994
        %vm3010 = vcmp.eq.s32.totalorder %v337, %v2994
        %vm3011 = vcmp.eq.s32.totalorder %v338, %v2994
        %vm3012 = vcmp.eq.s32.totalorder %v339, %v2994
        %vm3013 = vcmp.eq.s32.totalorder %v340, %v2994
        %vm3014 = vcmp.eq.s32.totalorder %v341, %v2994
        %vm3015 = vcmp.eq.s32.totalorder %v342, %v2994
        %vm3016 = vcmp.eq.s32.totalorder %v343, %v2994
        %vm3017 = vcmp.eq.s32.totalorder %v344, %v2994
        %vm3018 = vcmp.eq.s32.totalorder %v345, %v2994
        %vm3019 = vcmp.eq.s32.totalorder %v346, %v2994
        %vm3020 = vcmp.eq.s32.totalorder %v347, %v2994
        %vm3021 = vcmp.eq.s32.totalorder %v348, %v2994
        %vm3022 = vcmp.eq.s32.totalorder %v349, %v2994
        %vm3023 = vcmp.eq.s32.totalorder %v350, %v2994
        %vm3024 = vcmp.eq.s32.totalorder %v351, %v2994
        %vm3025 = vcmp.eq.s32.totalorder %v352, %v2994
        %vm3026 = vcmp.eq.s32.totalorder %v353, %v2994
        %v3027 = vsel %vm2995, 1, 0
        %v3028 = vsel %vm2996, 1, 0
        %v3029 = vsel %vm2997, 1, 0
        %v3030 = vsel %vm2998, 1, 0
        %v3031 = vsel %vm2999, 1, 0
        %v3032 = vsel %vm3000, 1, 0
        %v3033 = vsel %vm3001, 1, 0
        %v3034 = vsel %vm3002, 1, 0
        %v3035 = vsel %vm3003, 1, 0
        %v3036 = vsel %vm3004, 1, 0
        %v3037 = vsel %vm3005, 1, 0
        %v3038 = vsel %vm3006, 1, 0
        %v3039 = vsel %vm3007, 1, 0
        %v3040 = vsel %vm3008, 1, 0
        %v3041 = vsel %vm3009, 1, 0
        %v3042 = vsel %vm3010, 1, 0
        %v3043 = vsel %vm3011, 1, 0
        %v3044 = vsel %vm3012, 1, 0
        %v3045 = vsel %vm3013, 1, 0
        %v3046 = vsel %vm3014, 1, 0
        %v3047 = vsel %vm3015, 1, 0
        %v3048 = vsel %vm3016, 1, 0
        %v3049 = vsel %vm3017, 1, 0
        %v3050 = vsel %vm3018, 1, 0
        %v3051 = vsel %vm3019, 1, 0
        %v3052 = vsel %vm3020, 1, 0
        %v3053 = vsel %vm3021, 1, 0
        %v3054 = vsel %vm3022, 1, 0
        %v3055 = vsel %vm3023, 1, 0
        %v3056 = vsel %vm3024, 1, 0
        %v3057 = vsel %vm3025, 1, 0
        %v3058 = vsel %vm3026, 1, 0
        %v3059 = vcvt.s32.f32 %v3027
        %v3060 = vcvt.s32.f32 %v3028
        %v3061 = vcvt.s32.f32 %v3029
        %v3062 = vcvt.s32.f32 %v3030
        %v3063 = vcvt.s32.f32 %v3031
        %v3064 = vcvt.s32.f32 %v3032
        %v3065 = vcvt.s32.f32 %v3033
        %v3066 = vcvt.s32.f32 %v3034
        %v3067 = vcvt.s32.f32 %v3035
        %v3068 = vcvt.s32.f32 %v3036
        %v3069 = vcvt.s32.f32 %v3037
        %v3070 = vcvt.s32.f32 %v3038
        %v3071 = vcvt.s32.f32 %v3039
        %v3072 = vcvt.s32.f32 %v3040
        %v3073 = vcvt.s32.f32 %v3041
        %v3074 = vcvt.s32.f32 %v3042
        %v3075 = vcvt.s32.f32 %v3043
        %v3076 = vcvt.s32.f32 %v3044
        %v3077 = vcvt.s32.f32 %v3045
        %v3078 = vcvt.s32.f32 %v3046
        %v3079 = vcvt.s32.f32 %v3047
        %v3080 = vcvt.s32.f32 %v3048
        %v3081 = vcvt.s32.f32 %v3049
        %v3082 = vcvt.s32.f32 %v3050
        %v3083 = vcvt.s32.f32 %v3051
        %v3084 = vcvt.s32.f32 %v3052
        %v3085 = vcvt.s32.f32 %v3053
        %v3086 = vcvt.s32.f32 %v3054
        %v3087 = vcvt.s32.f32 %v3055
        %v3088 = vcvt.s32.f32 %v3056
        %v3089 = vcvt.s32.f32 %v3057
        %v3090 = vcvt.s32.f32 %v3058
        %3091 = vmatprep.subr.mxu0 0.0
        %3092 = vmatpush1.msra.mxu0 %v3059
        %3093 = vmatprep.subr.mxu0 0.0
        %3094 = vmatpush1.msra.mxu0 %v3060
        %3095 = vmatprep.subr.mxu0 0.0
        %3096 = vmatpush1.msra.mxu0 %v3061
        %3097 = vmatprep.subr.mxu0 0.0
        %3098 = vmatpush1.msra.mxu0 %v3062
        %3099 = vmatprep.subr.mxu0 0.0
        %3100 = vmatpush1.msra.mxu0 %v3063
        %3101 = vmatprep.subr.mxu0 0.0
        %3102 = vmatpush1.msra.mxu0 %v3064
        %3103 = vmatprep.subr.mxu0 0.0
        %3104 = vmatpush1.msra.mxu0 %v3065
        %3105 = vmatprep.subr.mxu0 0.0
        %3106 = vmatpush1.msra.mxu0 %v3066
        %3107 = vmatprep.subr.mxu0 0.0
        %3108 = vmatpush1.msra.mxu0 %v3067
        %3109 = vmatprep.subr.mxu0 0.0
        %3110 = vmatpush1.msra.mxu0 %v3068
        %3111 = vmatprep.subr.mxu0 0.0
        %3112 = vmatpush1.msra.mxu0 %v3069
        %3113 = vmatprep.subr.mxu0 0.0
        %3114 = vmatpush1.msra.mxu0 %v3070
        %3115 = vmatprep.subr.mxu0 0.0
        %3116 = vmatpush1.msra.mxu0 %v3071
        %3117 = vmatprep.subr.mxu0 0.0
        %3118 = vmatpush1.msra.mxu0 %v3072
        %3119 = vmatprep.subr.mxu0 0.0
        %3120 = vmatpush1.msra.mxu0 %v3073
        %3121 = vmatprep.subr.mxu0 0.0
        %3122 = vmatpush1.msra.mxu0 %v3074
        %3123 = vmatprep.subr.mxu0 0.0
        %3124 = vmatpush1.msra.mxu0 %v3075
        %3125 = vmatprep.subr.mxu0 0.0
        %3126 = vmatpush1.msra.mxu0 %v3076
        %3127 = vmatprep.subr.mxu0 0.0
        %3128 = vmatpush1.msra.mxu0 %v3077
        %3129 = vmatprep.subr.mxu0 0.0
        %3130 = vmatpush1.msra.mxu0 %v3078
        %3131 = vmatprep.subr.mxu0 0.0
        %3132 = vmatpush1.msra.mxu0 %v3079
        %3133 = vmatprep.subr.mxu0 0.0
        %3134 = vmatpush1.msra.mxu0 %v3080
        %3135 = vmatprep.subr.mxu0 0.0
        %3136 = vmatpush1.msra.mxu0 %v3081
        %3137 = vmatprep.subr.mxu0 0.0
        %3138 = vmatpush1.msra.mxu0 %v3082
        %3139 = vmatprep.subr.mxu0 0.0
        %3140 = vmatpush1.msra.mxu0 %v3083
        %3141 = vmatprep.subr.mxu0 0.0
        %3142 = vmatpush1.msra.mxu0 %v3084
        %3143 = vmatprep.subr.mxu0 0.0
        %3144 = vmatpush1.msra.mxu0 %v3085
        %3145 = vmatprep.subr.mxu0 0.0
        %3146 = vmatpush1.msra.mxu0 %v3086
        %3147 = vmatprep.subr.mxu0 0.0
        %3148 = vmatpush1.msra.mxu0 %v3087
        %3149 = vmatprep.subr.mxu0 0.0
        %3150 = vmatpush1.msra.mxu0 %v3088
        %3151 = vmatprep.subr.mxu0 0.0
        %3152 = vmatpush1.msra.mxu0 %v3089
        %3153 = vmatprep.subr.mxu0 0.0
        %3154 = vmatpush1.msra.mxu0 %v3090
        %3155 = vmatprep.mubr.f32.mxu0 %v313
        %3156 = vmatmul.mubr.f32.gmra.mrb[0].mxu0 %v312
        %v3157 = vpop.f32.mrb[0].mxu0
        %v3158 = vadd.f32 0.0, %v3157
        %v3159 = vpop.f32.mrb[0].mxu0
        %3160 = vmatprep.mubr.f32.mxu0 %v315
        %3161 = vmatmul.mubr.f32.gmra.mrb[0].mxu0 %v314
        %v3162 = vpop.f32.mrb[0].mxu0
        %v3163 = vadd.f32 0.0, %v3162
        %v3164 = vpop.f32.mrb[0].mxu0
        %3165 = vmatprep.mubr.f32.mxu0 %v317
        %3166 = vmatmul.mubr.f32.gmra.mrb[0].mxu0 %v316
        %v3167 = vpop.f32.mrb[0].mxu0
        %v3168 = vadd.f32 0.0, %v3167
        %v3169 = vpop.f32.mrb[0].mxu0
        %3170 = vdwg.mxu0
        %v3171 = vsub.f32 %v3158, %v318
        %v3172 = vsub.f32 %v3163, %v319
        %v3173 = vsub.f32 %v3168, %v320
        %v3174 = vmul.f32 %v3173, %v3173
        %v3176 = vrot.slane %v3174, 1
        %v3178 = vadd.f32 %v3174, %v3176
        %v3179 = vrot.slane %v3174, 2
        %v3181 = vadd.f32 %v3178, %v3179
        %v3182 = vmax.f32 %v3181, 1e-24
        %v3183 = vrsqrt.pop %v3182
        %v3184 = vmax.f32 %v3171, 0.0
        %v3185 = vmax.f32 %v3172, 0.0
        %v3186 = vlaneseq
        %v3187 = vshrl.u32 %v3186, 7
        %v3188 = vsub.s32 0, %v3187
        %v3189 = vrot.slane %v3183, %v3188
        %v3190 = vmul.f32 %v3184, %v3189
        %v3191 = vmul.f32 %v3185, %v3189
        %v3192 = vmax.f32 %v2989, %v3190
        %v3193 = vmax.f32 %v2990, %v3191
        %v3194 = vlaneseq
        %v3195 = vshrl.u32 %v3194, 7
        %v3196 = vsub.s32 6, %v3195
        %v3197 = vrot.slane %v311, %v3196
        %vm3198 = vcmp.eq.s32.totalorder %v322, %v3197
        %vm3199 = vcmp.eq.s32.totalorder %v323, %v3197
        %vm3200 = vcmp.eq.s32.totalorder %v324, %v3197
        %vm3201 = vcmp.eq.s32.totalorder %v325, %v3197
        %vm3202 = vcmp.eq.s32.totalorder %v326, %v3197
        %vm3203 = vcmp.eq.s32.totalorder %v327, %v3197
        %vm3204 = vcmp.eq.s32.totalorder %v328, %v3197
        %vm3205 = vcmp.eq.s32.totalorder %v329, %v3197
        %vm3206 = vcmp.eq.s32.totalorder %v330, %v3197
        %vm3207 = vcmp.eq.s32.totalorder %v331, %v3197
        %vm3208 = vcmp.eq.s32.totalorder %v332, %v3197
        %vm3209 = vcmp.eq.s32.totalorder %v333, %v3197
        %vm3210 = vcmp.eq.s32.totalorder %v334, %v3197
        %vm3211 = vcmp.eq.s32.totalorder %v335, %v3197
        %vm3212 = vcmp.eq.s32.totalorder %v336, %v3197
        %vm3213 = vcmp.eq.s32.totalorder %v337, %v3197
        %vm3214 = vcmp.eq.s32.totalorder %v338, %v3197
        %vm3215 = vcmp.eq.s32.totalorder %v339, %v3197
        %vm3216 = vcmp.eq.s32.totalorder %v340, %v3197
        %vm3217 = vcmp.eq.s32.totalorder %v341, %v3197
        %vm3218 = vcmp.eq.s32.totalorder %v342, %v3197
        %vm3219 = vcmp.eq.s32.totalorder %v343, %v3197
        %vm3220 = vcmp.eq.s32.totalorder %v344, %v3197
        %vm3221 = vcmp.eq.s32.totalorder %v345, %v3197
        %vm3222 = vcmp.eq.s32.totalorder %v346, %v3197
        %vm3223 = vcmp.eq.s32.totalorder %v347, %v3197
        %vm3224 = vcmp.eq.s32.totalorder %v348, %v3197
        %vm3225 = vcmp.eq.s32.totalorder %v349, %v3197
        %vm3226 = vcmp.eq.s32.totalorder %v350, %v3197
        %vm3227 = vcmp.eq.s32.totalorder %v351, %v3197
        %vm3228 = vcmp.eq.s32.totalorder %v352, %v3197
        %vm3229 = vcmp.eq.s32.totalorder %v353, %v3197
        %v3230 = vsel %vm3198, 1, 0
        %v3231 = vsel %vm3199, 1, 0
        %v3232 = vsel %vm3200, 1, 0
        %v3233 = vsel %vm3201, 1, 0
        %v3234 = vsel %vm3202, 1, 0
        %v3235 = vsel %vm3203, 1, 0
        %v3236 = vsel %vm3204, 1, 0
        %v3237 = vsel %vm3205, 1, 0
        %v3238 = vsel %vm3206, 1, 0
        %v3239 = vsel %vm3207, 1, 0
        %v3240 = vsel %vm3208, 1, 0
        %v3241 = vsel %vm3209, 1, 0
        %v3242 = vsel %vm3210, 1, 0
        %v3243 = vsel %vm3211, 1, 0
        %v3244 = vsel %vm3212, 1, 0
        %v3245 = vsel %vm3213, 1, 0
        %v3246 = vsel %vm3214, 1, 0
        %v3247 = vsel %vm3215, 1, 0
        %v3248 = vsel %vm3216, 1, 0
        %v3249 = vsel %vm3217, 1, 0
        %v3250 = vsel %vm3218, 1, 0
        %v3251 = vsel %vm3219, 1, 0
        %v3252 = vsel %vm3220, 1, 0
        %v3253 = vsel %vm3221, 1, 0
        %v3254 = vsel %vm3222, 1, 0
        %v3255 = vsel %vm3223, 1, 0
        %v3256 = vsel %vm3224, 1, 0
        %v3257 = vsel %vm3225, 1, 0
        %v3258 = vsel %vm3226, 1, 0
        %v3259 = vsel %vm3227, 1, 0
        %v3260 = vsel %vm3228, 1, 0
        %v3261 = vsel %vm3229, 1, 0
        %v3262 = vcvt.s32.f32 %v3230
        %v3263 = vcvt.s32.f32 %v3231
        %v3264 = vcvt.s32.f32 %v3232
        %v3265 = vcvt.s32.f32 %v3233
        %v3266 = vcvt.s32.f32 %v3234
        %v3267 = vcvt.s32.f32 %v3235
        %v3268 = vcvt.s32.f32 %v3236
        %v3269 = vcvt.s32.f32 %v3237
        %v3270 = vcvt.s32.f32 %v3238
        %v3271 = vcvt.s32.f32 %v3239
        %v3272 = vcvt.s32.f32 %v3240
        %v3273 = vcvt.s32.f32 %v3241
        %v3274 = vcvt.s32.f32 %v3242
        %v3275 = vcvt.s32.f32 %v3243
        %v3276 = vcvt.s32.f32 %v3244
        %v3277 = vcvt.s32.f32 %v3245
        %v3278 = vcvt.s32.f32 %v3246
        %v3279 = vcvt.s32.f32 %v3247
        %v3280 = vcvt.s32.f32 %v3248
        %v3281 = vcvt.s32.f32 %v3249
        %v3282 = vcvt.s32.f32 %v3250
        %v3283 = vcvt.s32.f32 %v3251
        %v3284 = vcvt.s32.f32 %v3252
        %v3285 = vcvt.s32.f32 %v3253
        %v3286 = vcvt.s32.f32 %v3254
        %v3287 = vcvt.s32.f32 %v3255
        %v3288 = vcvt.s32.f32 %v3256
        %v3289 = vcvt.s32.f32 %v3257
        %v3290 = vcvt.s32.f32 %v3258
        %v3291 = vcvt.s32.f32 %v3259
        %v3292 = vcvt.s32.f32 %v3260
        %v3293 = vcvt.s32.f32 %v3261
        %3294 = vmatprep.subr.mxu0 0.0
        %3295 = vmatpush1.msra.mxu0 %v3262
        %3296 = vmatprep.subr.mxu0 0.0
        %3297 = vmatpush1.msra.mxu0 %v3263
        %3298 = vmatprep.subr.mxu0 0.0
        %3299 = vmatpush1.msra.mxu0 %v3264
        %3300 = vmatprep.subr.mxu0 0.0
        %3301 = vmatpush1.msra.mxu0 %v3265
        %3302 = vmatprep.subr.mxu0 0.0
        %3303 = vmatpush1.msra.mxu0 %v3266
        %3304 = vmatprep.subr.mxu0 0.0
        %3305 = vmatpush1.msra.mxu0 %v3267
        %3306 = vmatprep.subr.mxu0 0.0
        %3307 = vmatpush1.msra.mxu0 %v3268
        %3308 = vmatprep.subr.mxu0 0.0
        %3309 = vmatpush1.msra.mxu0 %v3269
        %3310 = vmatprep.subr.mxu0 0.0
        %3311 = vmatpush1.msra.mxu0 %v3270
        %3312 = vmatprep.subr.mxu0 0.0
        %3313 = vmatpush1.msra.mxu0 %v3271
        %3314 = vmatprep.subr.mxu0 0.0
        %3315 = vmatpush1.msra.mxu0 %v3272
        %3316 = vmatprep.subr.mxu0 0.0
        %3317 = vmatpush1.msra.mxu0 %v3273
        %3318 = vmatprep.subr.mxu0 0.0
        %3319 = vmatpush1.msra.mxu0 %v3274
        %3320 = vmatprep.subr.mxu0 0.0
        %3321 = vmatpush1.msra.mxu0 %v3275
        %3322 = vmatprep.subr.mxu0 0.0
        %3323 = vmatpush1.msra.mxu0 %v3276
        %3324 = vmatprep.subr.mxu0 0.0
        %3325 = vmatpush1.msra.mxu0 %v3277
        %3326 = vmatprep.subr.mxu0 0.0
        %3327 = vmatpush1.msra.mxu0 %v3278
        %3328 = vmatprep.subr.mxu0 0.0
        %3329 = vmatpush1.msra.mxu0 %v3279
        %3330 = vmatprep.subr.mxu0 0.0
        %3331 = vmatpush1.msra.mxu0 %v3280
        %3332 = vmatprep.subr.mxu0 0.0
        %3333 = vmatpush1.msra.mxu0 %v3281
        %3334 = vmatprep.subr.mxu0 0.0
        %3335 = vmatpush1.msra.mxu0 %v3282
        %3336 = vmatprep.subr.mxu0 0.0
        %3337 = vmatpush1.msra.mxu0 %v3283
        %3338 = vmatprep.subr.mxu0 0.0
        %3339 = vmatpush1.msra.mxu0 %v3284
        %3340 = vmatprep.subr.mxu0 0.0
        %3341 = vmatpush1.msra.mxu0 %v3285
        %3342 = vmatprep.subr.mxu0 0.0
        %3343 = vmatpush1.msra.mxu0 %v3286
        %3344 = vmatprep.subr.mxu0 0.0
        %3345 = vmatpush1.msra.mxu0 %v3287
        %3346 = vmatprep.subr.mxu0 0.0
        %3347 = vmatpush1.msra.mxu0 %v3288
        %3348 = vmatprep.subr.mxu0 0.0
        %3349 = vmatpush1.msra.mxu0 %v3289
        %3350 = vmatprep.subr.mxu0 0.0
        %3351 = vmatpush1.msra.mxu0 %v3290
        %3352 = vmatprep.subr.mxu0 0.0
        %3353 = vmatpush1.msra.mxu0 %v3291
        %3354 = vmatprep.subr.mxu0 0.0
        %3355 = vmatpush1.msra.mxu0 %v3292
        %3356 = vmatprep.subr.mxu0 0.0
        %3357 = vmatpush1.msra.mxu0 %v3293
        %3358 = vmatprep.mubr.f32.mxu0 %v313
        %3359 = vmatmul.mubr.f32.gmra.mrb[0].mxu0 %v312
        %v3360 = vpop.f32.mrb[0].mxu0
        %v3361 = vadd.f32 0.0, %v3360
        %v3362 = vpop.f32.mrb[0].mxu0
        %3363 = vmatprep.mubr.f32.mxu0 %v315
        %3364 = vmatmul.mubr.f32.gmra.mrb[0].mxu0 %v314
        %v3365 = vpop.f32.mrb[0].mxu0
        %v3366 = vadd.f32 0.0, %v3365
        %v3367 = vpop.f32.mrb[0].mxu0
        %3368 = vmatprep.mubr.f32.mxu0 %v317
        %3369 = vmatmul.mubr.f32.gmra.mrb[0].mxu0 %v316
        %v3370 = vpop.f32.mrb[0].mxu0
        %v3371 = vadd.f32 0.0, %v3370
        %v3372 = vpop.f32.mrb[0].mxu0
        %3373 = vdwg.mxu0
        %v3374 = vsub.f32 %v3361, %v318
        %v3375 = vsub.f32 %v3366, %v319
        %v3376 = vsub.f32 %v3371, %v320
        %v3377 = vmul.f32 %v3376, %v3376
        %v3379 = vrot.slane %v3377, 1
        %v3381 = vadd.f32 %v3377, %v3379
        %v3382 = vrot.slane %v3377, 2
        %v3384 = vadd.f32 %v3381, %v3382
        %v3385 = vmax.f32 %v3384, 1e-24
        %v3386 = vrsqrt.pop %v3385
        %v3387 = vmax.f32 %v3374, 0.0
        %v3388 = vmax.f32 %v3375, 0.0
        %v3389 = vlaneseq
        %v3390 = vshrl.u32 %v3389, 7
        %v3391 = vsub.s32 0, %v3390
        %v3392 = vrot.slane %v3386, %v3391
        %v3393 = vmul.f32 %v3387, %v3392
        %v3394 = vmul.f32 %v3388, %v3392
        %v3395 = vmax.f32 %v3192, %v3393
        %v3396 = vmax.f32 %v3193, %v3394
        %v3397 = vlaneseq
        %v3398 = vshrl.u32 %v3397, 7
        %v3399 = vsub.s32 7, %v3398
        %v3400 = vrot.slane %v311, %v3399
        %vm3401 = vcmp.eq.s32.totalorder %v322, %v3400
        %vm3402 = vcmp.eq.s32.totalorder %v323, %v3400
        %vm3403 = vcmp.eq.s32.totalorder %v324, %v3400
        %vm3404 = vcmp.eq.s32.totalorder %v325, %v3400
        %vm3405 = vcmp.eq.s32.totalorder %v326, %v3400
        %vm3406 = vcmp.eq.s32.totalorder %v327, %v3400
        %vm3407 = vcmp.eq.s32.totalorder %v328, %v3400
        %vm3408 = vcmp.eq.s32.totalorder %v329, %v3400
        %vm3409 = vcmp.eq.s32.totalorder %v330, %v3400
        %vm3410 = vcmp.eq.s32.totalorder %v331, %v3400
        %vm3411 = vcmp.eq.s32.totalorder %v332, %v3400
        %vm3412 = vcmp.eq.s32.totalorder %v333, %v3400
        %vm3413 = vcmp.eq.s32.totalorder %v334, %v3400
        %vm3414 = vcmp.eq.s32.totalorder %v335, %v3400
        %vm3415 = vcmp.eq.s32.totalorder %v336, %v3400
        %vm3416 = vcmp.eq.s32.totalorder %v337, %v3400
        %vm3417 = vcmp.eq.s32.totalorder %v338, %v3400
        %vm3418 = vcmp.eq.s32.totalorder %v339, %v3400
        %vm3419 = vcmp.eq.s32.totalorder %v340, %v3400
        %vm3420 = vcmp.eq.s32.totalorder %v341, %v3400
        %vm3421 = vcmp.eq.s32.totalorder %v342, %v3400
        %vm3422 = vcmp.eq.s32.totalorder %v343, %v3400
        %vm3423 = vcmp.eq.s32.totalorder %v344, %v3400
        %vm3424 = vcmp.eq.s32.totalorder %v345, %v3400
        %vm3425 = vcmp.eq.s32.totalorder %v346, %v3400
        %vm3426 = vcmp.eq.s32.totalorder %v347, %v3400
        %vm3427 = vcmp.eq.s32.totalorder %v348, %v3400
        %vm3428 = vcmp.eq.s32.totalorder %v349, %v3400
        %vm3429 = vcmp.eq.s32.totalorder %v350, %v3400
        %vm3430 = vcmp.eq.s32.totalorder %v351, %v3400
        %vm3431 = vcmp.eq.s32.totalorder %v352, %v3400
        %vm3432 = vcmp.eq.s32.totalorder %v353, %v3400
        %v3433 = vsel %vm3401, 1, 0
        %v3434 = vsel %vm3402, 1, 0
        %v3435 = vsel %vm3403, 1, 0
        %v3436 = vsel %vm3404, 1, 0
        %v3437 = vsel %vm3405, 1, 0
        %v3438 = vsel %vm3406, 1, 0
        %v3439 = vsel %vm3407, 1, 0
        %v3440 = vsel %vm3408, 1, 0
        %v3441 = vsel %vm3409, 1, 0
        %v3442 = vsel %vm3410, 1, 0
        %v3443 = vsel %vm3411, 1, 0
        %v3444 = vsel %vm3412, 1, 0
        %v3445 = vsel %vm3413, 1, 0
        %v3446 = vsel %vm3414, 1, 0
        %v3447 = vsel %vm3415, 1, 0
        %v3448 = vsel %vm3416, 1, 0
        %v3449 = vsel %vm3417, 1, 0
        %v3450 = vsel %vm3418, 1, 0
        %v3451 = vsel %vm3419, 1, 0
        %v3452 = vsel %vm3420, 1, 0
        %v3453 = vsel %vm3421, 1, 0
        %v3454 = vsel %vm3422, 1, 0
        %v3455 = vsel %vm3423, 1, 0
        %v3456 = vsel %vm3424, 1, 0
        %v3457 = vsel %vm3425, 1, 0
        %v3458 = vsel %vm3426, 1, 0
        %v3459 = vsel %vm3427, 1, 0
        %v3460 = vsel %vm3428, 1, 0
        %v3461 = vsel %vm3429, 1, 0
        %v3462 = vsel %vm3430, 1, 0
        %v3463 = vsel %vm3431, 1, 0
        %v3464 = vsel %vm3432, 1, 0
        %v3465 = vcvt.s32.f32 %v3433
        %v3466 = vcvt.s32.f32 %v3434
        %v3467 = vcvt.s32.f32 %v3435
        %v3468 = vcvt.s32.f32 %v3436
        %v3469 = vcvt.s32.f32 %v3437
        %v3470 = vcvt.s32.f32 %v3438
        %v3471 = vcvt.s32.f32 %v3439
        %v3472 = vcvt.s32.f32 %v3440
        %v3473 = vcvt.s32.f32 %v3441
        %v3474 = vcvt.s32.f32 %v3442
        %v3475 = vcvt.s32.f32 %v3443
        %v3476 = vcvt.s32.f32 %v3444
        %v3477 = vcvt.s32.f32 %v3445
        %v3478 = vcvt.s32.f32 %v3446
        %v3479 = vcvt.s32.f32 %v3447
        %v3480 = vcvt.s32.f32 %v3448
        %v3481 = vcvt.s32.f32 %v3449
        %v3482 = vcvt.s32.f32 %v3450
        %v3483 = vcvt.s32.f32 %v3451
        %v3484 = vcvt.s32.f32 %v3452
        %v3485 = vcvt.s32.f32 %v3453
        %v3486 = vcvt.s32.f32 %v3454
        %v3487 = vcvt.s32.f32 %v3455
        %v3488 = vcvt.s32.f32 %v3456
        %v3489 = vcvt.s32.f32 %v3457
        %v3490 = vcvt.s32.f32 %v3458
        %v3491 = vcvt.s32.f32 %v3459
        %v3492 = vcvt.s32.f32 %v3460
        %v3493 = vcvt.s32.f32 %v3461
        %v3494 = vcvt.s32.f32 %v3462
        %v3495 = vcvt.s32.f32 %v3463
        %v3496 = vcvt.s32.f32 %v3464
        %3497 = vmatprep.subr.mxu0 0.0
        %3498 = vmatpush1.msra.mxu0 %v3465
        %3499 = vmatprep.subr.mxu0 0.0
        %3500 = vmatpush1.msra.mxu0 %v3466
        %3501 = vmatprep.subr.mxu0 0.0
        %3502 = vmatpush1.msra.mxu0 %v3467
        %3503 = vmatprep.subr.mxu0 0.0
        %3504 = vmatpush1.msra.mxu0 %v3468
        %3505 = vmatprep.subr.mxu0 0.0
        %3506 = vmatpush1.msra.mxu0 %v3469
        %3507 = vmatprep.subr.mxu0 0.0
        %3508 = vmatpush1.msra.mxu0 %v3470
        %3509 = vmatprep.subr.mxu0 0.0
        %3510 = vmatpush1.msra.mxu0 %v3471
        %3511 = vmatprep.subr.mxu0 0.0
        %3512 = vmatpush1.msra.mxu0 %v3472
        %3513 = vmatprep.subr.mxu0 0.0
        %3514 = vmatpush1.msra.mxu0 %v3473
        %3515 = vmatprep.subr.mxu0 0.0
        %3516 = vmatpush1.msra.mxu0 %v3474
        %3517 = vmatprep.subr.mxu0 0.0
        %3518 = vmatpush1.msra.mxu0 %v3475
        %3519 = vmatprep.subr.mxu0 0.0
        %3520 = vmatpush1.msra.mxu0 %v3476
        %3521 = vmatprep.subr.mxu0 0.0
        %3522 = vmatpush1.msra.mxu0 %v3477
        %3523 = vmatprep.subr.mxu0 0.0
        %3524 = vmatpush1.msra.mxu0 %v3478
        %3525 = vmatprep.subr.mxu0 0.0
        %3526 = vmatpush1.msra.mxu0 %v3479
        %3527 = vmatprep.subr.mxu0 0.0
        %3528 = vmatpush1.msra.mxu0 %v3480
        %3529 = vmatprep.subr.mxu0 0.0
        %3530 = vmatpush1.msra.mxu0 %v3481
        %3531 = vmatprep.subr.mxu0 0.0
        %3532 = vmatpush1.msra.mxu0 %v3482
        %3533 = vmatprep.subr.mxu0 0.0
        %3534 = vmatpush1.msra.mxu0 %v3483
        %3535 = vmatprep.subr.mxu0 0.0
        %3536 = vmatpush1.msra.mxu0 %v3484
        %3537 = vmatprep.subr.mxu0 0.0
        %3538 = vmatpush1.msra.mxu0 %v3485
        %3539 = vmatprep.subr.mxu0 0.0
        %3540 = vmatpush1.msra.mxu0 %v3486
        %3541 = vmatprep.subr.mxu0 0.0
        %3542 = vmatpush1.msra.mxu0 %v3487
        %3543 = vmatprep.subr.mxu0 0.0
        %3544 = vmatpush1.msra.mxu0 %v3488
        %3545 = vmatprep.subr.mxu0 0.0
        %3546 = vmatpush1.msra.mxu0 %v3489
        %3547 = vmatprep.subr.mxu0 0.0
        %3548 = vmatpush1.msra.mxu0 %v3490
        %3549 = vmatprep.subr.mxu0 0.0
        %3550 = vmatpush1.msra.mxu0 %v3491
        %3551 = vmatprep.subr.mxu0 0.0
        %3552 = vmatpush1.msra.mxu0 %v3492
        %3553 = vmatprep.subr.mxu0 0.0
        %3554 = vmatpush1.msra.mxu0 %v3493
        %3555 = vmatprep.subr.mxu0 0.0
        %3556 = vmatpush1.msra.mxu0 %v3494
        %3557 = vmatprep.subr.mxu0 0.0
        %3558 = vmatpush1.msra.mxu0 %v3495
        %3559 = vmatprep.subr.mxu0 0.0
        %3560 = vmatpush1.msra.mxu0 %v3496
        %3561 = vmatprep.mubr.f32.mxu0 %v313
        %3562 = vmatmul.mubr.f32.gmra.mrb[0].mxu0 %v312
        %v3563 = vpop.f32.mrb[0].mxu0
        %v3564 = vadd.f32 0.0, %v3563
        %v3565 = vpop.f32.mrb[0].mxu0
        %3566 = vmatprep.mubr.f32.mxu0 %v315
        %3567 = vmatmul.mubr.f32.gmra.mrb[0].mxu0 %v314
        %v3568 = vpop.f32.mrb[0].mxu0
        %v3569 = vadd.f32 0.0, %v3568
        %v3570 = vpop.f32.mrb[0].mxu0
        %3571 = vmatprep.mubr.f32.mxu0 %v317
        %3572 = vmatmul.mubr.f32.gmra.mrb[0].mxu0 %v316
        %v3573 = vpop.f32.mrb[0].mxu0
        %v3574 = vadd.f32 0.0, %v3573
        %v3575 = vpop.f32.mrb[0].mxu0
        %3576 = vdwg.mxu0
        %v3577 = vsub.f32 %v3564, %v318
        %v3578 = vsub.f32 %v3569, %v319
        %v3579 = vsub.f32 %v3574, %v320
        %v3580 = vmul.f32 %v3579, %v3579
        %v3582 = vrot.slane %v3580, 1
        %v3584 = vadd.f32 %v3580, %v3582
        %v3585 = vrot.slane %v3580, 2
        %v3587 = vadd.f32 %v3584, %v3585
        %v3588 = vmax.f32 %v3587, 1e-24
        %v3589 = vrsqrt.pop %v3588
        %v3590 = vmax.f32 %v3577, 0.0
        %v3591 = vmax.f32 %v3578, 0.0
        %v3592 = vlaneseq
        %v3593 = vshrl.u32 %v3592, 7
        %v3594 = vsub.s32 0, %v3593
        %v3595 = vrot.slane %v3589, %v3594
        %v3596 = vmul.f32 %v3590, %v3595
        %v3597 = vmul.f32 %v3591, %v3595
        %v3598 = vmax.f32 %v3395, %v3596
        %v3599 = vmax.f32 %v3396, %v3597
        %v3600 = vadd.f32 %v3598, %v3599
        %v3601 = vrot.slane %v3600, 4
        %v3602 = vadd.f32 %v3600, %v3601
        %v3603 = vrot.slane %v3602, 2
        %v3604 = vadd.f32 %v3602, %v3603
        %v3605 = vrot.slane %v3604, 1
        %v3606 = vadd.f32 %v3604, %v3605
        %3607 = vst [vmem:[%s304] sm:$0x1] %v3606
        %s3608 = sand.u32 %s121, 1
        %s3609 = scalar_lea.sflag [#allocation5], %s3608
        %s3610 = sand.u32 %s121, 1
        %s3611 = scalar_lea.vmem [#allocation4], %s3610
        // Predicated region
        $region109: #{tpu_custom_call.1} parent=99 // pred_check
          %p3612 = pneg %p131
        $region110: #{tpu_custom_call.1} parent=99 // pred_check_branch
          %3614 = sbr.rel (%p3612) target = $region112
        $region111: #{tpu_custom_call.1} parent=99 // pred_region
          %s3616 = ssub.s32 16, 16
          %3617 = vsyncadd %s3609, %s3616
          %s3618 = smul.addr %s21, 2
          %s3619 = sadd.s32 %s22, %s3618
          %s3620 = smul.addr %s3619, 16
          %s3621 = scalar_lea.hbm %s3, %s3620
          %s3623 = sshll.u32 %s3611, 4
          %s3624 = int_to_ptr.vmem [resolvable:$true] %s3623
          %3626 = dma.vmem_to_hbm [thread:$0]  %s3624, 16, %s3621, %s3609
        $region112: #{tpu_custom_call.1} parent=99 // pred_fallthru
          _
      $region100: #{tpu_custom_call.1} parent=5 // pred_fallthru
        _
      %p3627 = scmp.le.s32.totalorder 2, %s12
      // Predicated region
      $region113: #{tpu_custom_call.1} parent=5 // pred_check
        %p3628 = pneg %p3627
      $region114: #{tpu_custom_call.1} parent=5 // pred_check_branch
        %3630 = sbr.rel (%p3628) target = $region116
      $region115: #{tpu_custom_call.1} parent=5 // pred_region
        %s3631 = ssub.s32 %s12, 2
        // Predicated region
        $region117: #{tpu_custom_call.1} parent=115 // pred_check
          %p3632 = pneg %p137
        $region118: #{tpu_custom_call.1} parent=115 // pred_check_branch
          %3634 = sbr.rel (%p3632) target = $region120
        $region119: #{tpu_custom_call.1} parent=115 // pred_region
          %s3635 = sand.u32 %s122, 1
          %s3636 = scalar_lea.sflag [#allocation5], %s3635
          %s3637 = sand.u32 %s122, 1
          %s3638 = scalar_lea.vmem [#allocation4], %s3637
          %3639 = dma.done %s3636, 16
        $region120: #{tpu_custom_call.1} parent=115 // pred_fallthru
          _
      $region116: #{tpu_custom_call.1} parent=5 // pred_fallthru
        _
    $region6: #{tpu_custom_call.1} parent=1 // loop_footer
      %s16 = sadd.s32 1, %s12
    $region7: #{tpu_custom_call.1} parent=1 // loop_footer_branch
      %11 = sbr.rel target = $region3
    $region8: #{tpu_custom_call.1} parent=1 // loop_exit
      _
    %3640 = vsyncpa [#allocation5], 1
    %s3641 = scalar_lea.sflag [#allocation5], 1
    %3642 = vsyncpa %s3641, 1

</llo_original>
